<compile_context>
chip_gen: v7x
topology: tpu7x:2x2x1
jax: 0.10.0
libtpu: 0.0.40
codegen_flags: <defaults>
</compile_context>

<pallas_src>
import functools

import jax
import jax.numpy as jnp
from jax import lax
from jax.experimental import pallas as pl
from jax.experimental.pallas import tpu as pltpu

EPS = 1e-5            # nn.InstanceNorm2d default eps
LEAKY_SLOPE = 0.2     # F.leaky_relu(x, 0.2)
NHIDDEN = 128         # SPADE hidden width


# ----------------------------------------------------------------------------
# In-kernel helpers
# ----------------------------------------------------------------------------
def _leaky_relu(v):
    return jnp.maximum(v, LEAKY_SLOPE * v)


def _instance_norm(v, inv_n):
    # v: (C, HW).  Two-pass (mean-subtracted) stats, lane-axis reductions.
    mean = jnp.sum(v, axis=1, keepdims=True) * inv_n
    cen = v - mean
    var = jnp.sum(cen * cen, axis=1, keepdims=True) * inv_n
    return cen * lax.rsqrt(var + EPS)


# ----------------------------------------------------------------------------
# Fused SPADEResnetBlock kernel (one batch element per grid step)
# ----------------------------------------------------------------------------
def _spade_resblock_kernel(seg_ref, x_ref, mask_ref, wsh_ref, wgb_ref, bgb_ref,
                           w0_ref, b0_ref, w1_ref, b1_ref, *rest,
                           H, W, fin, fmid, fout, learned):
    if learned:
        ws_ref, o_ref = rest
    else:
        (o_ref,) = rest
    hw = H * W
    inv_n = 1.0 / hw

    # Border masks for the 9 conv taps (precomputed on host, (1, HW) each).
    masks = [mask_ref[t] for t in range(9)]

    def conv3x3(x_chw, w_taps_ref, bias_ref):
        # "same" 3x3 conv in (Cin, HW) layout: matmul per tap on the UNshifted
        # input, then roll the small (Cout, HW) result along lanes and mask the
        # border positions.  No padded scratch, no materialized input copies.
        acc = None
        t = 0
        for dy in (-1, 0, 1):
            for dx in (-1, 0, 1):
                y = jnp.dot(w_taps_ref[t], x_chw,
                            preferred_element_type=jnp.float32)   # (Cout, HW)
                s = dy * W + dx
                if s != 0:
                    # out[:, p] += mask[p] * y[:, p + s]   (np.roll semantics)
                    y = pltpu.roll(y, (-s) % hw, axis=1) * masks[t]
                acc = y if acc is None else acc + y
                t += 1
        return acc + bias_ref[...]

    # --- Phase A: all SPADE conditionings from the segmentation map ---------
    # mlp_shared for norm_0 / norm_1 / norm_s fused: one (nb*128, 28) x (28, HW)
    # matmul (bias folded in via the slab's ones row), lane-dense output.
    actv = jnp.maximum(
        jnp.dot(wsh_ref[...], seg_ref[0], preferred_element_type=jnp.float32),
        0.0)                                                     # (nb*128, HW)

    # gamma/beta for every SPADE in one fused 3x3 conv (block weight, K=384/tap).
    gb = conv3x3(actv, wgb_ref, bgb_ref)                         # (gb_rows, HW)

    c = 0
    g0 = gb[c:c + fin]
    be0 = gb[c + fin:c + 2 * fin]
    c += 2 * fin
    g1 = gb[c:c + fmid]
    be1 = gb[c + fmid:c + 2 * fmid]
    c += 2 * fmid

    # --- Phase B: main residual path -----------------------------------------
    x = x_ref[0].astype(jnp.float32)                             # (fin, HW)
    xn = _instance_norm(x, inv_n)    # shared by norm_0 / norm_s (param-free IN)

    if learned:
        gs = gb[c:c + fin]
        bes = gb[c + fin:c + 2 * fin]
        # shortcut: SPADE (no activation) -> 1x1 conv (no bias)
        xs = jnp.dot(ws_ref[...], xn * (1.0 + gs) + bes,
                     preferred_element_type=jnp.float32)         # (fout, HW)
    else:
        xs = x

    # dx = conv_0(lrelu(norm_0(x)))
    a0 = _leaky_relu(xn * (1.0 + g0) + be0)
    h0 = conv3x3(a0, w0_ref, b0_ref)                             # (fmid, HW)

    # dy = conv_1(lrelu(norm_1(dx)))
    a1 = _leaky_relu(_instance_norm(h0, inv_n) * (1.0 + g1) + be1)
    h1 = conv3x3(a1, w1_ref, b1_ref)                             # (fout, HW)

    o_ref[0] = (xs + h1).astype(o_ref.dtype)                     # fused residual add


# ----------------------------------------------------------------------------
# Host-side packing (lane-dense weights, tap-major ordering)
# ----------------------------------------------------------------------------
def _pack_params(params, fin, fmid, fout, learned):
    branches = [("norm_0", fin), ("norm_1", fmid)]
    if learned:
        branches.append(("norm_s", fin))
    nb = len(branches)

    # mlp_shared: concat along Cout -> (3,3,snc,nb*128); rows tap-major; bias as
    # an extra column (pairs with the seg slab's ones row).
    wsh = jnp.concatenate([params[n]["shared"][0] for n, _ in branches], axis=-1)
    bsh = jnp.concatenate([params[n]["shared"][1] for n, _ in branches], axis=0)
    snc = wsh.shape[2]
    wsh = wsh.reshape(9 * snc, nb * NHIDDEN).T                   # (nb*128, 9*snc)
    wsh = jnp.concatenate([wsh, bsh[:, None]], axis=1)           # (nb*128, 9*snc+1)

    # gamma/beta block weight, lane-dense: (9 taps, gb_rows, nb*128 hidden).
    # Row layout: [g0 | b0 | g1 | b1 | (gs | bs)].
    gb_rows = sum(2 * w for _, w in branches)
    wgb = jnp.zeros((9, gb_rows, nb * NHIDDEN), jnp.float32)
    bgb = jnp.zeros((gb_rows,), jnp.float32)
    row = 0
    for bi, (name, width) in enumerate(branches):
        wg, bg = params[name]["gamma"]
        wb, bb = params[name]["beta"]
        h0 = bi * NHIDDEN
        wg = jnp.transpose(wg.reshape(9, NHIDDEN, width), (0, 2, 1))
        wb = jnp.transpose(wb.reshape(9, NHIDDEN, width), (0, 2, 1))
        wgb = wgb.at[:, row:row + width, h0:h0 + NHIDDEN].set(wg)
        bgb = bgb.at[row:row + width].set(bg)
        wgb = wgb.at[:, row + width:row + 2 * width, h0:h0 + NHIDDEN].set(wb)
        bgb = bgb.at[row + width:row + 2 * width].set(bb)
        row += 2 * width

    def pack_conv(w, b):
        # (3,3,cin,cout) HWIO -> (9, cout, cin) tap-major;  bias -> (cout, 1)
        wt = jnp.transpose(w.reshape(9, w.shape[2], w.shape[3]), (0, 2, 1))
        return wt, b.reshape(-1, 1)

    w0, b0 = pack_conv(*params["conv_0"])
    w1, b1 = pack_conv(*params["conv_1"])
    pk = dict(wsh=wsh, wgb=wgb, bgb=bgb.reshape(-1, 1),
              w0=w0, b0=b0, w1=w1, b1=b1)
    if learned:
        pk["ws"] = params["conv_s"].T                            # (fout, fin)
    return pk


def _border_masks(H, W):
    # masks[t, 0, p] = 1 iff the tap-t source pixel of output position p is
    # inside the image (t ordered dy-major, dx-minor, dy,dx in {-1,0,1}).
    y = jnp.arange(H).reshape(H, 1)
    x = jnp.arange(W).reshape(1, W)
    ms = []
    for dy in (-1, 0, 1):
        for dx in (-1, 0, 1):
            ok = (y + dy >= 0) & (y + dy < H) & (x + dx >= 0) & (x + dx < W)
            ms.append(jnp.broadcast_to(ok, (H, W)).reshape(1, H * W))
    return jnp.stack(ms, axis=0).astype(jnp.float32)             # (9, 1, H*W)


# ----------------------------------------------------------------------------
# Public forward (NCHW in / NCHW out, like the PyTorch module)
# ----------------------------------------------------------------------------
def spade_resblock_forward(params, x_nchw, seg_nchw):
    N, fin, H, W = x_nchw.shape
    hw = H * W
    fmid = params["conv_0"][0].shape[-1]
    fout = params["conv_1"][0].shape[-1]
    learned = "conv_s" in params
    snc = seg_nchw.shape[1]

    # F.interpolate(seg, size=(H, W), mode='nearest')  (host glue, tiny)
    Hs, Ws = seg_nchw.shape[2], seg_nchw.shape[3]
    row_idx = (jnp.arange(H) * Hs) // H
    col_idx = (jnp.arange(W) * Ws) // W
    seg_r = seg_nchw[:, :, row_idx][:, :, :, col_idx]            # (N,snc,H,W)

    # Host-side im2col of the (tiny) seg map, channel-first and lane-dense:
    # (N, 9*snc + 1, HW); the last row is ones so the shared-MLP bias folds
    # into the matmul.
    segp = jnp.pad(seg_r, ((0, 0), (0, 0), (1, 1), (1, 1)))
    taps = [segp[:, :, ky:ky + H, kx:kx + W].reshape(N, snc, hw)
            for ky in range(3) for kx in range(3)]
    ones = jnp.ones((N, 1, hw), jnp.float32)
    seg_slab = jnp.concatenate(taps + [ones], axis=1)            # (N, 9*snc+1, HW)
    ksh = 9 * snc + 1

    x_flat = x_nchw.reshape(N, fin, hw)                          # free NCHW reshape
    masks = _border_masks(H, W)
    pk = _pack_params(params, fin, fmid, fout, learned)

    kernel = functools.partial(_spade_resblock_kernel, H=H, W=W,
                               fin=fin, fmid=fmid, fout=fout, learned=learned)

    in_arrays = [seg_slab, x_flat, masks, pk["wsh"], pk["wgb"], pk["bgb"],
                 pk["w0"], pk["b0"], pk["w1"], pk["b1"]]
    in_specs = [
        pl.BlockSpec((1, ksh, hw), lambda n: (n, 0, 0)),
        pl.BlockSpec((1, fin, hw), lambda n: (n, 0, 0)),
        pl.BlockSpec(masks.shape, lambda n: (0, 0, 0)),
        pl.BlockSpec(pk["wsh"].shape, lambda n: (0, 0)),
        pl.BlockSpec(pk["wgb"].shape, lambda n: (0, 0, 0)),
        pl.BlockSpec(pk["bgb"].shape, lambda n: (0, 0)),
        pl.BlockSpec(pk["w0"].shape, lambda n: (0, 0, 0)),
        pl.BlockSpec(pk["b0"].shape, lambda n: (0, 0)),
        pl.BlockSpec(pk["w1"].shape, lambda n: (0, 0, 0)),
        pl.BlockSpec(pk["b1"].shape, lambda n: (0, 0)),
    ]
    if learned:
        in_arrays.append(pk["ws"])
        in_specs.append(pl.BlockSpec(pk["ws"].shape, lambda n: (0, 0)))

    out = pl.pallas_call(
        kernel,
        out_shape=jax.ShapeDtypeStruct((N, fout, hw), jnp.float32),  # lane-dense
        grid=(N,),
        in_specs=in_specs,
        out_specs=pl.BlockSpec((1, fout, hw), lambda n: (n, 0, 0)),
        compiler_params=pltpu.CompilerParams(
            dimension_semantics=("parallel",)),
    )(*in_arrays)
    return out.reshape(N, fout, H, W)                            # free reshape = NCHW


# ----------------------------------------------------------------------------
# Parameter construction (deterministic, synthetic)
# ----------------------------------------------------------------------------
def init_conv_params(key, cin, cout, k, bias=True):
    kw, kb = jax.random.split(key)
    scale = 1.0 / jnp.sqrt(jnp.asarray(cin * k * k, jnp.float32))
    w = jax.random.normal(kw, (k, k, cin, cout), jnp.float32) * scale
    b = (jax.random.normal(kb, (cout,), jnp.float32) * 0.01) if bias else None
    return w, b


def init_spade(key, norm_nc, semantic_nc, nhidden=NHIDDEN):
    k1, k2, k3 = jax.random.split(key, 3)
    return dict(
        shared=init_conv_params(k1, semantic_nc, nhidden, 3),
        gamma=init_conv_params(k2, nhidden, norm_nc, 3),
        beta=init_conv_params(k3, nhidden, norm_nc, 3),
    )


def init_block(key, fin, fout, semantic_nc):
    fmiddle = min(fin, fout)
    keys = jax.random.split(key, 6)
    params = dict(
        conv_0=init_conv_params(keys[0], fin, fmiddle, 3),
        conv_1=init_conv_params(keys[1], fmiddle, fout, 3),
        norm_0=init_spade(keys[2], fin, semantic_nc),
        norm_1=init_spade(keys[3], fmiddle, semantic_nc),
    )
    if fin != fout:
        w_s, _ = init_conv_params(keys[4], fin, fout, 1, bias=False)
        params["conv_s"] = w_s.reshape(fin, fout)          # 1x1 kernel -> matrix
        params["norm_s"] = init_spade(keys[5], fin, semantic_nc)
    return params


# ----------------------------------------------------------------------------
# Pure-JAX reference (sanity check)
# ----------------------------------------------------------------------------
def _ref_conv(x, w, b, k):     # x NCHW, w (k,k,cin,cout)
    w_oihw = jnp.transpose(w, (3, 2, 0, 1))
    out = lax.conv_general_dilated(
        x, w_oihw, (1, 1), [(k // 2, k // 2)] * 2,
        dimension_numbers=("NCHW", "OIHW", "NCHW"),
        precision=lax.Precision.HIGHEST)
    if b is not None:
        out = out + b.reshape(1, -1, 1, 1)
    return out


def _ref_instance_norm(x):
    mean = x.mean(axis=(2, 3), keepdims=True)
    var = ((x - mean) ** 2).mean(axis=(2, 3), keepdims=True)
    return (x - mean) * lax.rsqrt(var + EPS)


def _ref_spade(p, x, seg_r):
    normalized = _ref_instance_norm(x)
    actv = jnp.maximum(_ref_conv(seg_r, *p["shared"], 3), 0.0)
    gamma = _ref_conv(actv, *p["gamma"], 3)
    beta = _ref_conv(actv, *p["beta"], 3)
    return normalized * (1.0 + gamma) + beta


def _ref_block(params, x, seg):
    N, C, H, W = x.shape
    Hs, Ws = seg.shape[2], seg.shape[3]
    row_idx = (jnp.arange(H) * Hs) // H
    col_idx = (jnp.arange(W) * Ws) // W
    seg_r = seg[:, :, row_idx][:, :, :, col_idx]
    lrelu = lambda t: jnp.where(t >= 0, t, LEAKY_SLOPE * t)
    if "conv_s" in params:
        x_s = jnp.einsum("nchw,cd->ndhw",
                         _ref_spade(params["norm_s"], x, seg_r), params["conv_s"],
                         precision=lax.Precision.HIGHEST)
    else:
        x_s = x
    dx = _ref_conv(lrelu(_ref_spade(params["norm_0"], x, seg_r)), *params["conv_0"], 3)
    dx = _ref_conv(lrelu(_ref_spade(params["norm_1"], dx, seg_r)), *params["conv_1"], 3)
    return x_s + dx


# ----------------------------------------------------------------------------
if __name__ == "__main__":
    key = jax.random.PRNGKey(0)
    k_params, k_x, k_seg = jax.random.split(key, 3)

    N, fin, fout, semantic_nc, H, W = 2, 4, 8, 3, 16, 16
    params = init_block(k_params, fin, fout, semantic_nc)

    x = jax.random.normal(k_x, (N, fin, H, W), jnp.float32)
    seg = jax.random.normal(k_seg, (N, semantic_nc, H // 2, W // 2), jnp.float32)

    fwd = jax.jit(spade_resblock_forward)
    out = jax.block_until_ready(fwd(params, x, seg))

    assert out.shape == (N, fout, H, W), out.shape

    ref = _ref_block(params, x, seg)
    err = float(jnp.max(jnp.abs(out - ref)))
    assert jnp.allclose(out, ref, atol=1e-2, rtol=1e-2), err

    print("KERNEL_OK")
</pallas_src>

<mosaic_0001>
module attributes {stable_mosaic.version = 11 : i64} {
  func.func @_spade_resblock_kernel(%arg0: i32, %arg1: memref<1x28x256xf32, #tpu.memory_space<vmem>>, %arg2: memref<1x4x256xf32, #tpu.memory_space<vmem>>, %arg3: memref<9x1x256xf32, #tpu.memory_space<vmem>>, %arg4: memref<384x28xf32, #tpu.memory_space<vmem>>, %arg5: memref<9x24x384xf32, #tpu.memory_space<vmem>>, %arg6: memref<24x1xf32, #tpu.memory_space<vmem>>, %arg7: memref<9x4x4xf32, #tpu.memory_space<vmem>>, %arg8: memref<4x1xf32, #tpu.memory_space<vmem>>, %arg9: memref<9x8x4xf32, #tpu.memory_space<vmem>>, %arg10: memref<8x1xf32, #tpu.memory_space<vmem>>, %arg11: memref<8x4xf32, #tpu.memory_space<vmem>>, %arg12: memref<1x8x256xf32, #tpu.memory_space<vmem>>) attributes {dimension_semantics = [#tpu.dimension_semantics<parallel>], iteration_bounds = array<i64: 2>, scalar_prefetch = 0 : i64, scratch_operands = 0 : i64, tpu.core_type = #tpu.core_type<tc>, window_params = [{transform_indices = @transform_0, window_bounds = array<i64: 1, 28, 256>}, {transform_indices = @transform_1, window_bounds = array<i64: 1, 4, 256>}, {pipeline_mode = #tpu.pipeline_mode<synchronous>, transform_indices = @transform_2, window_bounds = array<i64: 9, 1, 256>}, {pipeline_mode = #tpu.pipeline_mode<synchronous>, transform_indices = @transform_3, window_bounds = array<i64: 384, 28>}, {pipeline_mode = #tpu.pipeline_mode<synchronous>, transform_indices = @transform_4, window_bounds = array<i64: 9, 24, 384>}, {pipeline_mode = #tpu.pipeline_mode<synchronous>, transform_indices = @transform_5, window_bounds = array<i64: 24, 1>}, {pipeline_mode = #tpu.pipeline_mode<synchronous>, transform_indices = @transform_6, window_bounds = array<i64: 9, 4, 4>}, {pipeline_mode = #tpu.pipeline_mode<synchronous>, transform_indices = @transform_7, window_bounds = array<i64: 4, 1>}, {pipeline_mode = #tpu.pipeline_mode<synchronous>, transform_indices = @transform_8, window_bounds = array<i64: 9, 8, 4>}, {pipeline_mode = #tpu.pipeline_mode<synchronous>, transform_indices = @transform_9, window_bounds = array<i64: 8, 1>}, {pipeline_mode = #tpu.pipeline_mode<synchronous>, transform_indices = @transform_10, window_bounds = array<i64: 8, 4>}, {transform_indices = @transform_11, window_bounds = array<i64: 1, 8, 256>}]} {
    %c0 = arith.constant 0 : index
    %c0_0 = arith.constant 0 : index
    %c0_1 = arith.constant 0 : index
    %0 = vector.load %arg3[%c0, %c0_0, %c0_1] : memref<9x1x256xf32, #tpu.memory_space<vmem>>, vector<1x1x256xf32>
    %1 = vector.shape_cast %0 : vector<1x1x256xf32> to vector<1x256xf32>
    %c1 = arith.constant 1 : index
    %c0_2 = arith.constant 0 : index
    %c0_3 = arith.constant 0 : index
    %2 = vector.load %arg3[%c1, %c0_2, %c0_3] : memref<9x1x256xf32, #tpu.memory_space<vmem>>, vector<1x1x256xf32>
    %3 = vector.shape_cast %2 : vector<1x1x256xf32> to vector<1x256xf32>
    %c2 = arith.constant 2 : index
    %c0_4 = arith.constant 0 : index
    %c0_5 = arith.constant 0 : index
    %4 = vector.load %arg3[%c2, %c0_4, %c0_5] : memref<9x1x256xf32, #tpu.memory_space<vmem>>, vector<1x1x256xf32>
    %5 = vector.shape_cast %4 : vector<1x1x256xf32> to vector<1x256xf32>
    %c3 = arith.constant 3 : index
    %c0_6 = arith.constant 0 : index
    %c0_7 = arith.constant 0 : index
    %6 = vector.load %arg3[%c3, %c0_6, %c0_7] : memref<9x1x256xf32, #tpu.memory_space<vmem>>, vector<1x1x256xf32>
    %7 = vector.shape_cast %6 : vector<1x1x256xf32> to vector<1x256xf32>
    %c5 = arith.constant 5 : index
    %c0_8 = arith.constant 0 : index
    %c0_9 = arith.constant 0 : index
    %8 = vector.load %arg3[%c5, %c0_8, %c0_9] : memref<9x1x256xf32, #tpu.memory_space<vmem>>, vector<1x1x256xf32>
    %9 = vector.shape_cast %8 : vector<1x1x256xf32> to vector<1x256xf32>
    %c6 = arith.constant 6 : index
    %c0_10 = arith.constant 0 : index
    %c0_11 = arith.constant 0 : index
    %10 = vector.load %arg3[%c6, %c0_10, %c0_11] : memref<9x1x256xf32, #tpu.memory_space<vmem>>, vector<1x1x256xf32>
    %11 = vector.shape_cast %10 : vector<1x1x256xf32> to vector<1x256xf32>
    %c7 = arith.constant 7 : index
    %c0_12 = arith.constant 0 : index
    %c0_13 = arith.constant 0 : index
    %12 = vector.load %arg3[%c7, %c0_12, %c0_13] : memref<9x1x256xf32, #tpu.memory_space<vmem>>, vector<1x1x256xf32>
    %13 = vector.shape_cast %12 : vector<1x1x256xf32> to vector<1x256xf32>
    %c8 = arith.constant 8 : index
    %c0_14 = arith.constant 0 : index
    %c0_15 = arith.constant 0 : index
    %14 = vector.load %arg3[%c8, %c0_14, %c0_15] : memref<9x1x256xf32, #tpu.memory_space<vmem>>, vector<1x1x256xf32>
    %15 = vector.shape_cast %14 : vector<1x1x256xf32> to vector<1x256xf32>
    %c0_16 = arith.constant 0 : index
    %c0_17 = arith.constant 0 : index
    %16 = vector.load %arg4[%c0_16, %c0_17] : memref<384x28xf32, #tpu.memory_space<vmem>>, vector<384x28xf32>
    %c0_18 = arith.constant 0 : index
    %c0_19 = arith.constant 0 : index
    %c0_20 = arith.constant 0 : index
    %17 = vector.load %arg1[%c0_18, %c0_19, %c0_20] : memref<1x28x256xf32, #tpu.memory_space<vmem>>, vector<1x28x256xf32>
    %18 = vector.shape_cast %17 : vector<1x28x256xf32> to vector<28x256xf32>
    %cst = arith.constant dense<0.000000e+00> : vector<384x256xf32>
    %19 = tpu.matmul %16, %18, %cst {dimension_numbers = #tpu.dot_dimension_numbers<[1], [0], [0], [1], [0, 0, 1, 1], [], []>} : vector<384x28xf32>, vector<28x256xf32>, vector<384x256xf32> -> vector<384x256xf32>
    %cst_21 = arith.constant 0.000000e+00 : f32
    %20 = vector.broadcast %cst_21 : f32 to vector<384x256xf32>
    %21 = arith.maximumf %19, %20 : vector<384x256xf32>
    %c0_22 = arith.constant 0 : index
    %c0_23 = arith.constant 0 : index
    %c0_24 = arith.constant 0 : index
    %22 = vector.load %arg5[%c0_22, %c0_23, %c0_24] : memref<9x24x384xf32, #tpu.memory_space<vmem>>, vector<1x24x384xf32>
    %23 = vector.shape_cast %22 : vector<1x24x384xf32> to vector<24x384xf32>
    %cst_25 = arith.constant dense<0.000000e+00> : vector<24x256xf32>
    %24 = tpu.matmul %23, %21, %cst_25 {dimension_numbers = #tpu.dot_dimension_numbers<[1], [0], [0], [1], [0, 0, 1, 1], [], []>} : vector<24x384xf32>, vector<384x256xf32>, vector<24x256xf32> -> vector<24x256xf32>
    %c17_i32 = arith.constant 17 : i32
    %25 = tpu.dynamic_rotate %24 by %c17_i32 dim 1 : vector<24x256xf32>, i32 -> vector<24x256xf32>
    %26 = vector.broadcast %1 : vector<1x256xf32> to vector<24x256xf32>
    %27 = arith.mulf %25, %26 : vector<24x256xf32>
    %c1_26 = arith.constant 1 : index
    %c0_27 = arith.constant 0 : index
    %c0_28 = arith.constant 0 : index
    %28 = vector.load %arg5[%c1_26, %c0_27, %c0_28] : memref<9x24x384xf32, #tpu.memory_space<vmem>>, vector<1x24x384xf32>
    %29 = vector.shape_cast %28 : vector<1x24x384xf32> to vector<24x384xf32>
    %cst_29 = arith.constant dense<0.000000e+00> : vector<24x256xf32>
    %30 = tpu.matmul %29, %21, %cst_29 {dimension_numbers = #tpu.dot_dimension_numbers<[1], [0], [0], [1], [0, 0, 1, 1], [], []>} : vector<24x384xf32>, vector<384x256xf32>, vector<24x256xf32> -> vector<24x256xf32>
    %c16_i32 = arith.constant 16 : i32
    %31 = tpu.dynamic_rotate %30 by %c16_i32 dim 1 : vector<24x256xf32>, i32 -> vector<24x256xf32>
    %32 = vector.broadcast %3 : vector<1x256xf32> to vector<24x256xf32>
    %33 = arith.mulf %31, %32 : vector<24x256xf32>
    %34 = arith.addf %27, %33 : vector<24x256xf32>
    %c2_30 = arith.constant 2 : index
    %c0_31 = arith.constant 0 : index
    %c0_32 = arith.constant 0 : index
    %35 = vector.load %arg5[%c2_30, %c0_31, %c0_32] : memref<9x24x384xf32, #tpu.memory_space<vmem>>, vector<1x24x384xf32>
    %36 = vector.shape_cast %35 : vector<1x24x384xf32> to vector<24x384xf32>
    %cst_33 = arith.constant dense<0.000000e+00> : vector<24x256xf32>
    %37 = tpu.matmul %36, %21, %cst_33 {dimension_numbers = #tpu.dot_dimension_numbers<[1], [0], [0], [1], [0, 0, 1, 1], [], []>} : vector<24x384xf32>, vector<384x256xf32>, vector<24x256xf32> -> vector<24x256xf32>
    %c15_i32 = arith.constant 15 : i32
    %38 = tpu.dynamic_rotate %37 by %c15_i32 dim 1 : vector<24x256xf32>, i32 -> vector<24x256xf32>
    %39 = vector.broadcast %5 : vector<1x256xf32> to vector<24x256xf32>
    %40 = arith.mulf %38, %39 : vector<24x256xf32>
    %41 = arith.addf %34, %40 : vector<24x256xf32>
    %c3_34 = arith.constant 3 : index
    %c0_35 = arith.constant 0 : index
    %c0_36 = arith.constant 0 : index
    %42 = vector.load %arg5[%c3_34, %c0_35, %c0_36] : memref<9x24x384xf32, #tpu.memory_space<vmem>>, vector<1x24x384xf32>
    %43 = vector.shape_cast %42 : vector<1x24x384xf32> to vector<24x384xf32>
    %cst_37 = arith.constant dense<0.000000e+00> : vector<24x256xf32>
    %44 = tpu.matmul %43, %21, %cst_37 {dimension_numbers = #tpu.dot_dimension_numbers<[1], [0], [0], [1], [0, 0, 1, 1], [], []>} : vector<24x384xf32>, vector<384x256xf32>, vector<24x256xf32> -> vector<24x256xf32>
    %c1_i32 = arith.constant 1 : i32
    %45 = tpu.dynamic_rotate %44 by %c1_i32 dim 1 : vector<24x256xf32>, i32 -> vector<24x256xf32>
    %46 = vector.broadcast %7 : vector<1x256xf32> to vector<24x256xf32>
    %47 = arith.mulf %45, %46 : vector<24x256xf32>
    %48 = arith.addf %41, %47 : vector<24x256xf32>
    %c4 = arith.constant 4 : index
    %c0_38 = arith.constant 0 : index
    %c0_39 = arith.constant 0 : index
    %49 = vector.load %arg5[%c4, %c0_38, %c0_39] : memref<9x24x384xf32, #tpu.memory_space<vmem>>, vector<1x24x384xf32>
    %50 = vector.shape_cast %49 : vector<1x24x384xf32> to vector<24x384xf32>
    %cst_40 = arith.constant dense<0.000000e+00> : vector<24x256xf32>
    %51 = tpu.matmul %50, %21, %cst_40 {dimension_numbers = #tpu.dot_dimension_numbers<[1], [0], [0], [1], [0, 0, 1, 1], [], []>} : vector<24x384xf32>, vector<384x256xf32>, vector<24x256xf32> -> vector<24x256xf32>
    %52 = arith.addf %48, %51 : vector<24x256xf32>
    %c5_41 = arith.constant 5 : index
    %c0_42 = arith.constant 0 : index
    %c0_43 = arith.constant 0 : index
    %53 = vector.load %arg5[%c5_41, %c0_42, %c0_43] : memref<9x24x384xf32, #tpu.memory_space<vmem>>, vector<1x24x384xf32>
    %54 = vector.shape_cast %53 : vector<1x24x384xf32> to vector<24x384xf32>
    %cst_44 = arith.constant dense<0.000000e+00> : vector<24x256xf32>
    %55 = tpu.matmul %54, %21, %cst_44 {dimension_numbers = #tpu.dot_dimension_numbers<[1], [0], [0], [1], [0, 0, 1, 1], [], []>} : vector<24x384xf32>, vector<384x256xf32>, vector<24x256xf32> -> vector<24x256xf32>
    %c255_i32 = arith.constant 255 : i32
    %56 = tpu.dynamic_rotate %55 by %c255_i32 dim 1 : vector<24x256xf32>, i32 -> vector<24x256xf32>
    %57 = vector.broadcast %9 : vector<1x256xf32> to vector<24x256xf32>
    %58 = arith.mulf %56, %57 : vector<24x256xf32>
    %59 = arith.addf %52, %58 : vector<24x256xf32>
    %c6_45 = arith.constant 6 : index
    %c0_46 = arith.constant 0 : index
    %c0_47 = arith.constant 0 : index
    %60 = vector.load %arg5[%c6_45, %c0_46, %c0_47] : memref<9x24x384xf32, #tpu.memory_space<vmem>>, vector<1x24x384xf32>
    %61 = vector.shape_cast %60 : vector<1x24x384xf32> to vector<24x384xf32>
    %cst_48 = arith.constant dense<0.000000e+00> : vector<24x256xf32>
    %62 = tpu.matmul %61, %21, %cst_48 {dimension_numbers = #tpu.dot_dimension_numbers<[1], [0], [0], [1], [0, 0, 1, 1], [], []>} : vector<24x384xf32>, vector<384x256xf32>, vector<24x256xf32> -> vector<24x256xf32>
    %c241_i32 = arith.constant 241 : i32
    %63 = tpu.dynamic_rotate %62 by %c241_i32 dim 1 : vector<24x256xf32>, i32 -> vector<24x256xf32>
    %64 = vector.broadcast %11 : vector<1x256xf32> to vector<24x256xf32>
    %65 = arith.mulf %63, %64 : vector<24x256xf32>
    %66 = arith.addf %59, %65 : vector<24x256xf32>
    %c7_49 = arith.constant 7 : index
    %c0_50 = arith.constant 0 : index
    %c0_51 = arith.constant 0 : index
    %67 = vector.load %arg5[%c7_49, %c0_50, %c0_51] : memref<9x24x384xf32, #tpu.memory_space<vmem>>, vector<1x24x384xf32>
    %68 = vector.shape_cast %67 : vector<1x24x384xf32> to vector<24x384xf32>
    %cst_52 = arith.constant dense<0.000000e+00> : vector<24x256xf32>
    %69 = tpu.matmul %68, %21, %cst_52 {dimension_numbers = #tpu.dot_dimension_numbers<[1], [0], [0], [1], [0, 0, 1, 1], [], []>} : vector<24x384xf32>, vector<384x256xf32>, vector<24x256xf32> -> vector<24x256xf32>
    %c240_i32 = arith.constant 240 : i32
    %70 = tpu.dynamic_rotate %69 by %c240_i32 dim 1 : vector<24x256xf32>, i32 -> vector<24x256xf32>
    %71 = vector.broadcast %13 : vector<1x256xf32> to vector<24x256xf32>
    %72 = arith.mulf %70, %71 : vector<24x256xf32>
    %73 = arith.addf %66, %72 : vector<24x256xf32>
    %c8_53 = arith.constant 8 : index
    %c0_54 = arith.constant 0 : index
    %c0_55 = arith.constant 0 : index
    %74 = vector.load %arg5[%c8_53, %c0_54, %c0_55] : memref<9x24x384xf32, #tpu.memory_space<vmem>>, vector<1x24x384xf32>
    %75 = vector.shape_cast %74 : vector<1x24x384xf32> to vector<24x384xf32>
    %cst_56 = arith.constant dense<0.000000e+00> : vector<24x256xf32>
    %76 = tpu.matmul %75, %21, %cst_56 {dimension_numbers = #tpu.dot_dimension_numbers<[1], [0], [0], [1], [0, 0, 1, 1], [], []>} : vector<24x384xf32>, vector<384x256xf32>, vector<24x256xf32> -> vector<24x256xf32>
    %c239_i32 = arith.constant 239 : i32
    %77 = tpu.dynamic_rotate %76 by %c239_i32 dim 1 : vector<24x256xf32>, i32 -> vector<24x256xf32>
    %78 = vector.broadcast %15 : vector<1x256xf32> to vector<24x256xf32>
    %79 = arith.mulf %77, %78 : vector<24x256xf32>
    %80 = arith.addf %73, %79 : vector<24x256xf32>
    %c0_57 = arith.constant 0 : index
    %c0_58 = arith.constant 0 : index
    %81 = vector.load %arg6[%c0_57, %c0_58] : memref<24x1xf32, #tpu.memory_space<vmem>>, vector<24x1xf32>
    %82 = vector.broadcast %81 : vector<24x1xf32> to vector<24x256xf32>
    %83 = arith.addf %80, %82 : vector<24x256xf32>
    %84 = vector.extract_strided_slice %83 {offsets = [0, 0], sizes = [4, 256], strides = [1, 1]} : vector<24x256xf32> to vector<4x256xf32>
    %85 = vector.extract_strided_slice %83 {offsets = [4, 0], sizes = [4, 256], strides = [1, 1]} : vector<24x256xf32> to vector<4x256xf32>
    %86 = vector.extract_strided_slice %83 {offsets = [8, 0], sizes = [4, 256], strides = [1, 1]} : vector<24x256xf32> to vector<4x256xf32>
    %87 = vector.extract_strided_slice %83 {offsets = [12, 0], sizes = [4, 256], strides = [1, 1]} : vector<24x256xf32> to vector<4x256xf32>
    %c0_59 = arith.constant 0 : index
    %c0_60 = arith.constant 0 : index
    %c0_61 = arith.constant 0 : index
    %88 = vector.load %arg2[%c0_59, %c0_60, %c0_61] : memref<1x4x256xf32, #tpu.memory_space<vmem>>, vector<1x4x256xf32>
    %89 = vector.shape_cast %88 : vector<1x4x256xf32> to vector<4x256xf32>
    %cst_62 = arith.constant dense<0.000000e+00> : vector<4xf32>
    %90 = vector.multi_reduction <add>, %89, %cst_62 [1] : vector<4x256xf32> to vector<4xf32>
    %91 = vector.shape_cast %90 : vector<4xf32> to vector<4x1xf32>
    %cst_63 = arith.constant 3.906250e-03 : f32
    %92 = vector.broadcast %cst_63 : f32 to vector<4x1xf32>
    %93 = arith.mulf %91, %92 : vector<4x1xf32>
    %94 = vector.broadcast %93 : vector<4x1xf32> to vector<4x256xf32>
    %95 = arith.subf %89, %94 : vector<4x256xf32>
    %96 = arith.mulf %95, %95 : vector<4x256xf32>
    %cst_64 = arith.constant dense<0.000000e+00> : vector<4xf32>
    %97 = vector.multi_reduction <add>, %96, %cst_64 [1] : vector<4x256xf32> to vector<4xf32>
    %98 = vector.shape_cast %97 : vector<4xf32> to vector<4x1xf32>
    %cst_65 = arith.constant 3.906250e-03 : f32
    %99 = vector.broadcast %cst_65 : f32 to vector<4x1xf32>
    %100 = arith.mulf %98, %99 : vector<4x1xf32>
    %cst_66 = arith.constant 9.99999974E-6 : f32
    %101 = vector.broadcast %cst_66 : f32 to vector<4x1xf32>
    %102 = arith.addf %100, %101 : vector<4x1xf32>
    %103 = math.rsqrt %102 : vector<4x1xf32>
    %104 = vector.broadcast %103 : vector<4x1xf32> to vector<4x256xf32>
    %105 = arith.mulf %95, %104 : vector<4x256xf32>
    %106 = vector.extract_strided_slice %83 {offsets = [16, 0], sizes = [4, 256], strides = [1, 1]} : vector<24x256xf32> to vector<4x256xf32>
    %107 = vector.extract_strided_slice %83 {offsets = [20, 0], sizes = [4, 256], strides = [1, 1]} : vector<24x256xf32> to vector<4x256xf32>
    %c0_67 = arith.constant 0 : index
    %c0_68 = arith.constant 0 : index
    %108 = vector.load %arg11[%c0_67, %c0_68] : memref<8x4xf32, #tpu.memory_space<vmem>>, vector<8x4xf32>
    %cst_69 = arith.constant 1.000000e+00 : f32
    %109 = vector.broadcast %cst_69 : f32 to vector<4x256xf32>
    %110 = arith.addf %109, %106 : vector<4x256xf32>
    %111 = arith.mulf %105, %110 : vector<4x256xf32>
    %112 = arith.addf %111, %107 : vector<4x256xf32>
    %cst_70 = arith.constant dense<0.000000e+00> : vector<8x256xf32>
    %113 = tpu.matmul %108, %112, %cst_70 {dimension_numbers = #tpu.dot_dimension_numbers<[1], [0], [0], [1], [0, 0, 1, 1], [], []>} : vector<8x4xf32>, vector<4x256xf32>, vector<8x256xf32> -> vector<8x256xf32>
    %cst_71 = arith.constant 1.000000e+00 : f32
    %114 = vector.broadcast %cst_71 : f32 to vector<4x256xf32>
    %115 = arith.addf %114, %84 : vector<4x256xf32>
    %116 = arith.mulf %105, %115 : vector<4x256xf32>
    %117 = arith.addf %116, %85 : vector<4x256xf32>
    %cst_72 = arith.constant 2.000000e-01 : f32
    %118 = vector.broadcast %cst_72 : f32 to vector<4x256xf32>
    %119 = arith.mulf %118, %117 : vector<4x256xf32>
    %120 = arith.maximumf %117, %119 : vector<4x256xf32>
    %c0_73 = arith.constant 0 : index
    %c0_74 = arith.constant 0 : index
    %c0_75 = arith.constant 0 : index
    %121 = vector.load %arg7[%c0_73, %c0_74, %c0_75] : memref<9x4x4xf32, #tpu.memory_space<vmem>>, vector<1x4x4xf32>
    %122 = vector.shape_cast %121 : vector<1x4x4xf32> to vector<4x4xf32>
    %cst_76 = arith.constant dense<0.000000e+00> : vector<4x256xf32>
    %123 = tpu.matmul %122, %120, %cst_76 {dimension_numbers = #tpu.dot_dimension_numbers<[1], [0], [0], [1], [0, 0, 1, 1], [], []>} : vector<4x4xf32>, vector<4x256xf32>, vector<4x256xf32> -> vector<4x256xf32>
    %c17_i32_77 = arith.constant 17 : i32
    %124 = tpu.dynamic_rotate %123 by %c17_i32_77 dim 1 : vector<4x256xf32>, i32 -> vector<4x256xf32>
    %125 = vector.broadcast %1 : vector<1x256xf32> to vector<4x256xf32>
    %126 = arith.mulf %124, %125 : vector<4x256xf32>
    %c1_78 = arith.constant 1 : index
    %c0_79 = arith.constant 0 : index
    %c0_80 = arith.constant 0 : index
    %127 = vector.load %arg7[%c1_78, %c0_79, %c0_80] : memref<9x4x4xf32, #tpu.memory_space<vmem>>, vector<1x4x4xf32>
    %128 = vector.shape_cast %127 : vector<1x4x4xf32> to vector<4x4xf32>
    %cst_81 = arith.constant dense<0.000000e+00> : vector<4x256xf32>
    %129 = tpu.matmul %128, %120, %cst_81 {dimension_numbers = #tpu.dot_dimension_numbers<[1], [0], [0], [1], [0, 0, 1, 1], [], []>} : vector<4x4xf32>, vector<4x256xf32>, vector<4x256xf32> -> vector<4x256xf32>
    %c16_i32_82 = arith.constant 16 : i32
    %130 = tpu.dynamic_rotate %129 by %c16_i32_82 dim 1 : vector<4x256xf32>, i32 -> vector<4x256xf32>
    %131 = vector.broadcast %3 : vector<1x256xf32> to vector<4x256xf32>
    %132 = arith.mulf %130, %131 : vector<4x256xf32>
    %133 = arith.addf %126, %132 : vector<4x256xf32>
    %c2_83 = arith.constant 2 : index
    %c0_84 = arith.constant 0 : index
    %c0_85 = arith.constant 0 : index
    %134 = vector.load %arg7[%c2_83, %c0_84, %c0_85] : memref<9x4x4xf32, #tpu.memory_space<vmem>>, vector<1x4x4xf32>
    %135 = vector.shape_cast %134 : vector<1x4x4xf32> to vector<4x4xf32>
    %cst_86 = arith.constant dense<0.000000e+00> : vector<4x256xf32>
    %136 = tpu.matmul %135, %120, %cst_86 {dimension_numbers = #tpu.dot_dimension_numbers<[1], [0], [0], [1], [0, 0, 1, 1], [], []>} : vector<4x4xf32>, vector<4x256xf32>, vector<4x256xf32> -> vector<4x256xf32>
    %c15_i32_87 = arith.constant 15 : i32
    %137 = tpu.dynamic_rotate %136 by %c15_i32_87 dim 1 : vector<4x256xf32>, i32 -> vector<4x256xf32>
    %138 = vector.broadcast %5 : vector<1x256xf32> to vector<4x256xf32>
    %139 = arith.mulf %137, %138 : vector<4x256xf32>
    %140 = arith.addf %133, %139 : vector<4x256xf32>
    %c3_88 = arith.constant 3 : index
    %c0_89 = arith.constant 0 : index
    %c0_90 = arith.constant 0 : index
    %141 = vector.load %arg7[%c3_88, %c0_89, %c0_90] : memref<9x4x4xf32, #tpu.memory_space<vmem>>, vector<1x4x4xf32>
    %142 = vector.shape_cast %141 : vector<1x4x4xf32> to vector<4x4xf32>
    %cst_91 = arith.constant dense<0.000000e+00> : vector<4x256xf32>
    %143 = tpu.matmul %142, %120, %cst_91 {dimension_numbers = #tpu.dot_dimension_numbers<[1], [0], [0], [1], [0, 0, 1, 1], [], []>} : vector<4x4xf32>, vector<4x256xf32>, vector<4x256xf32> -> vector<4x256xf32>
    %c1_i32_92 = arith.constant 1 : i32
    %144 = tpu.dynamic_rotate %143 by %c1_i32_92 dim 1 : vector<4x256xf32>, i32 -> vector<4x256xf32>
    %145 = vector.broadcast %7 : vector<1x256xf32> to vector<4x256xf32>
    %146 = arith.mulf %144, %145 : vector<4x256xf32>
    %147 = arith.addf %140, %146 : vector<4x256xf32>
    %c4_93 = arith.constant 4 : index
    %c0_94 = arith.constant 0 : index
    %c0_95 = arith.constant 0 : index
    %148 = vector.load %arg7[%c4_93, %c0_94, %c0_95] : memref<9x4x4xf32, #tpu.memory_space<vmem>>, vector<1x4x4xf32>
    %149 = vector.shape_cast %148 : vector<1x4x4xf32> to vector<4x4xf32>
    %cst_96 = arith.constant dense<0.000000e+00> : vector<4x256xf32>
    %150 = tpu.matmul %149, %120, %cst_96 {dimension_numbers = #tpu.dot_dimension_numbers<[1], [0], [0], [1], [0, 0, 1, 1], [], []>} : vector<4x4xf32>, vector<4x256xf32>, vector<4x256xf32> -> vector<4x256xf32>
    %151 = arith.addf %147, %150 : vector<4x256xf32>
    %c5_97 = arith.constant 5 : index
    %c0_98 = arith.constant 0 : index
    %c0_99 = arith.constant 0 : index
    %152 = vector.load %arg7[%c5_97, %c0_98, %c0_99] : memref<9x4x4xf32, #tpu.memory_space<vmem>>, vector<1x4x4xf32>
    %153 = vector.shape_cast %152 : vector<1x4x4xf32> to vector<4x4xf32>
    %cst_100 = arith.constant dense<0.000000e+00> : vector<4x256xf32>
    %154 = tpu.matmul %153, %120, %cst_100 {dimension_numbers = #tpu.dot_dimension_numbers<[1], [0], [0], [1], [0, 0, 1, 1], [], []>} : vector<4x4xf32>, vector<4x256xf32>, vector<4x256xf32> -> vector<4x256xf32>
    %c255_i32_101 = arith.constant 255 : i32
    %155 = tpu.dynamic_rotate %154 by %c255_i32_101 dim 1 : vector<4x256xf32>, i32 -> vector<4x256xf32>
    %156 = vector.broadcast %9 : vector<1x256xf32> to vector<4x256xf32>
    %157 = arith.mulf %155, %156 : vector<4x256xf32>
    %158 = arith.addf %151, %157 : vector<4x256xf32>
    %c6_102 = arith.constant 6 : index
    %c0_103 = arith.constant 0 : index
    %c0_104 = arith.constant 0 : index
    %159 = vector.load %arg7[%c6_102, %c0_103, %c0_104] : memref<9x4x4xf32, #tpu.memory_space<vmem>>, vector<1x4x4xf32>
    %160 = vector.shape_cast %159 : vector<1x4x4xf32> to vector<4x4xf32>
    %cst_105 = arith.constant dense<0.000000e+00> : vector<4x256xf32>
    %161 = tpu.matmul %160, %120, %cst_105 {dimension_numbers = #tpu.dot_dimension_numbers<[1], [0], [0], [1], [0, 0, 1, 1], [], []>} : vector<4x4xf32>, vector<4x256xf32>, vector<4x256xf32> -> vector<4x256xf32>
    %c241_i32_106 = arith.constant 241 : i32
    %162 = tpu.dynamic_rotate %161 by %c241_i32_106 dim 1 : vector<4x256xf32>, i32 -> vector<4x256xf32>
    %163 = vector.broadcast %11 : vector<1x256xf32> to vector<4x256xf32>
    %164 = arith.mulf %162, %163 : vector<4x256xf32>
    %165 = arith.addf %158, %164 : vector<4x256xf32>
    %c7_107 = arith.constant 7 : index
    %c0_108 = arith.constant 0 : index
    %c0_109 = arith.constant 0 : index
    %166 = vector.load %arg7[%c7_107, %c0_108, %c0_109] : memref<9x4x4xf32, #tpu.memory_space<vmem>>, vector<1x4x4xf32>
    %167 = vector.shape_cast %166 : vector<1x4x4xf32> to vector<4x4xf32>
    %cst_110 = arith.constant dense<0.000000e+00> : vector<4x256xf32>
    %168 = tpu.matmul %167, %120, %cst_110 {dimension_numbers = #tpu.dot_dimension_numbers<[1], [0], [0], [1], [0, 0, 1, 1], [], []>} : vector<4x4xf32>, vector<4x256xf32>, vector<4x256xf32> -> vector<4x256xf32>
    %c240_i32_111 = arith.constant 240 : i32
    %169 = tpu.dynamic_rotate %168 by %c240_i32_111 dim 1 : vector<4x256xf32>, i32 -> vector<4x256xf32>
    %170 = vector.broadcast %13 : vector<1x256xf32> to vector<4x256xf32>
    %171 = arith.mulf %169, %170 : vector<4x256xf32>
    %172 = arith.addf %165, %171 : vector<4x256xf32>
    %c8_112 = arith.constant 8 : index
    %c0_113 = arith.constant 0 : index
    %c0_114 = arith.constant 0 : index
    %173 = vector.load %arg7[%c8_112, %c0_113, %c0_114] : memref<9x4x4xf32, #tpu.memory_space<vmem>>, vector<1x4x4xf32>
    %174 = vector.shape_cast %173 : vector<1x4x4xf32> to vector<4x4xf32>
    %cst_115 = arith.constant dense<0.000000e+00> : vector<4x256xf32>
    %175 = tpu.matmul %174, %120, %cst_115 {dimension_numbers = #tpu.dot_dimension_numbers<[1], [0], [0], [1], [0, 0, 1, 1], [], []>} : vector<4x4xf32>, vector<4x256xf32>, vector<4x256xf32> -> vector<4x256xf32>
    %c239_i32_116 = arith.constant 239 : i32
    %176 = tpu.dynamic_rotate %175 by %c239_i32_116 dim 1 : vector<4x256xf32>, i32 -> vector<4x256xf32>
    %177 = vector.broadcast %15 : vector<1x256xf32> to vector<4x256xf32>
    %178 = arith.mulf %176, %177 : vector<4x256xf32>
    %179 = arith.addf %172, %178 : vector<4x256xf32>
    %c0_117 = arith.constant 0 : index
    %c0_118 = arith.constant 0 : index
    %180 = vector.load %arg8[%c0_117, %c0_118] : memref<4x1xf32, #tpu.memory_space<vmem>>, vector<4x1xf32>
    %181 = vector.broadcast %180 : vector<4x1xf32> to vector<4x256xf32>
    %182 = arith.addf %179, %181 : vector<4x256xf32>
    %cst_119 = arith.constant dense<0.000000e+00> : vector<4xf32>
    %183 = vector.multi_reduction <add>, %182, %cst_119 [1] : vector<4x256xf32> to vector<4xf32>
    %184 = vector.shape_cast %183 : vector<4xf32> to vector<4x1xf32>
    %cst_120 = arith.constant 3.906250e-03 : f32
    %185 = vector.broadcast %cst_120 : f32 to vector<4x1xf32>
    %186 = arith.mulf %184, %185 : vector<4x1xf32>
    %187 = vector.broadcast %186 : vector<4x1xf32> to vector<4x256xf32>
    %188 = arith.subf %182, %187 : vector<4x256xf32>
    %189 = arith.mulf %188, %188 : vector<4x256xf32>
    %cst_121 = arith.constant dense<0.000000e+00> : vector<4xf32>
    %190 = vector.multi_reduction <add>, %189, %cst_121 [1] : vector<4x256xf32> to vector<4xf32>
    %191 = vector.shape_cast %190 : vector<4xf32> to vector<4x1xf32>
    %cst_122 = arith.constant 3.906250e-03 : f32
    %192 = vector.broadcast %cst_122 : f32 to vector<4x1xf32>
    %193 = arith.mulf %191, %192 : vector<4x1xf32>
    %cst_123 = arith.constant 9.99999974E-6 : f32
    %194 = vector.broadcast %cst_123 : f32 to vector<4x1xf32>
    %195 = arith.addf %193, %194 : vector<4x1xf32>
    %196 = math.rsqrt %195 : vector<4x1xf32>
    %197 = vector.broadcast %196 : vector<4x1xf32> to vector<4x256xf32>
    %198 = arith.mulf %188, %197 : vector<4x256xf32>
    %cst_124 = arith.constant 1.000000e+00 : f32
    %199 = vector.broadcast %cst_124 : f32 to vector<4x256xf32>
    %200 = arith.addf %199, %86 : vector<4x256xf32>
    %201 = arith.mulf %198, %200 : vector<4x256xf32>
    %202 = arith.addf %201, %87 : vector<4x256xf32>
    %cst_125 = arith.constant 2.000000e-01 : f32
    %203 = vector.broadcast %cst_125 : f32 to vector<4x256xf32>
    %204 = arith.mulf %203, %202 : vector<4x256xf32>
    %205 = arith.maximumf %202, %204 : vector<4x256xf32>
    %c0_126 = arith.constant 0 : index
    %c0_127 = arith.constant 0 : index
    %c0_128 = arith.constant 0 : index
    %206 = vector.load %arg9[%c0_126, %c0_127, %c0_128] : memref<9x8x4xf32, #tpu.memory_space<vmem>>, vector<1x8x4xf32>
    %207 = vector.shape_cast %206 : vector<1x8x4xf32> to vector<8x4xf32>
    %cst_129 = arith.constant dense<0.000000e+00> : vector<8x256xf32>
    %208 = tpu.matmul %207, %205, %cst_129 {dimension_numbers = #tpu.dot_dimension_numbers<[1], [0], [0], [1], [0, 0, 1, 1], [], []>} : vector<8x4xf32>, vector<4x256xf32>, vector<8x256xf32> -> vector<8x256xf32>
    %c17_i32_130 = arith.constant 17 : i32
    %209 = tpu.dynamic_rotate %208 by %c17_i32_130 dim 1 : vector<8x256xf32>, i32 -> vector<8x256xf32>
    %210 = vector.broadcast %1 : vector<1x256xf32> to vector<8x256xf32>
    %211 = arith.mulf %209, %210 : vector<8x256xf32>
    %c1_131 = arith.constant 1 : index
    %c0_132 = arith.constant 0 : index
    %c0_133 = arith.constant 0 : index
    %212 = vector.load %arg9[%c1_131, %c0_132, %c0_133] : memref<9x8x4xf32, #tpu.memory_space<vmem>>, vector<1x8x4xf32>
    %213 = vector.shape_cast %212 : vector<1x8x4xf32> to vector<8x4xf32>
    %cst_134 = arith.constant dense<0.000000e+00> : vector<8x256xf32>
    %214 = tpu.matmul %213, %205, %cst_134 {dimension_numbers = #tpu.dot_dimension_numbers<[1], [0], [0], [1], [0, 0, 1, 1], [], []>} : vector<8x4xf32>, vector<4x256xf32>, vector<8x256xf32> -> vector<8x256xf32>
    %c16_i32_135 = arith.constant 16 : i32
    %215 = tpu.dynamic_rotate %214 by %c16_i32_135 dim 1 : vector<8x256xf32>, i32 -> vector<8x256xf32>
    %216 = vector.broadcast %3 : vector<1x256xf32> to vector<8x256xf32>
    %217 = arith.mulf %215, %216 : vector<8x256xf32>
    %218 = arith.addf %211, %217 : vector<8x256xf32>
    %c2_136 = arith.constant 2 : index
    %c0_137 = arith.constant 0 : index
    %c0_138 = arith.constant 0 : index
    %219 = vector.load %arg9[%c2_136, %c0_137, %c0_138] : memref<9x8x4xf32, #tpu.memory_space<vmem>>, vector<1x8x4xf32>
    %220 = vector.shape_cast %219 : vector<1x8x4xf32> to vector<8x4xf32>
    %cst_139 = arith.constant dense<0.000000e+00> : vector<8x256xf32>
    %221 = tpu.matmul %220, %205, %cst_139 {dimension_numbers = #tpu.dot_dimension_numbers<[1], [0], [0], [1], [0, 0, 1, 1], [], []>} : vector<8x4xf32>, vector<4x256xf32>, vector<8x256xf32> -> vector<8x256xf32>
    %c15_i32_140 = arith.constant 15 : i32
    %222 = tpu.dynamic_rotate %221 by %c15_i32_140 dim 1 : vector<8x256xf32>, i32 -> vector<8x256xf32>
    %223 = vector.broadcast %5 : vector<1x256xf32> to vector<8x256xf32>
    %224 = arith.mulf %222, %223 : vector<8x256xf32>
    %225 = arith.addf %218, %224 : vector<8x256xf32>
    %c3_141 = arith.constant 3 : index
    %c0_142 = arith.constant 0 : index
    %c0_143 = arith.constant 0 : index
    %226 = vector.load %arg9[%c3_141, %c0_142, %c0_143] : memref<9x8x4xf32, #tpu.memory_space<vmem>>, vector<1x8x4xf32>
    %227 = vector.shape_cast %226 : vector<1x8x4xf32> to vector<8x4xf32>
    %cst_144 = arith.constant dense<0.000000e+00> : vector<8x256xf32>
    %228 = tpu.matmul %227, %205, %cst_144 {dimension_numbers = #tpu.dot_dimension_numbers<[1], [0], [0], [1], [0, 0, 1, 1], [], []>} : vector<8x4xf32>, vector<4x256xf32>, vector<8x256xf32> -> vector<8x256xf32>
    %c1_i32_145 = arith.constant 1 : i32
    %229 = tpu.dynamic_rotate %228 by %c1_i32_145 dim 1 : vector<8x256xf32>, i32 -> vector<8x256xf32>
    %230 = vector.broadcast %7 : vector<1x256xf32> to vector<8x256xf32>
    %231 = arith.mulf %229, %230 : vector<8x256xf32>
    %232 = arith.addf %225, %231 : vector<8x256xf32>
    %c4_146 = arith.constant 4 : index
    %c0_147 = arith.constant 0 : index
    %c0_148 = arith.constant 0 : index
    %233 = vector.load %arg9[%c4_146, %c0_147, %c0_148] : memref<9x8x4xf32, #tpu.memory_space<vmem>>, vector<1x8x4xf32>
    %234 = vector.shape_cast %233 : vector<1x8x4xf32> to vector<8x4xf32>
    %cst_149 = arith.constant dense<0.000000e+00> : vector<8x256xf32>
    %235 = tpu.matmul %234, %205, %cst_149 {dimension_numbers = #tpu.dot_dimension_numbers<[1], [0], [0], [1], [0, 0, 1, 1], [], []>} : vector<8x4xf32>, vector<4x256xf32>, vector<8x256xf32> -> vector<8x256xf32>
    %236 = arith.addf %232, %235 : vector<8x256xf32>
    %c5_150 = arith.constant 5 : index
    %c0_151 = arith.constant 0 : index
    %c0_152 = arith.constant 0 : index
    %237 = vector.load %arg9[%c5_150, %c0_151, %c0_152] : memref<9x8x4xf32, #tpu.memory_space<vmem>>, vector<1x8x4xf32>
    %238 = vector.shape_cast %237 : vector<1x8x4xf32> to vector<8x4xf32>
    %cst_153 = arith.constant dense<0.000000e+00> : vector<8x256xf32>
    %239 = tpu.matmul %238, %205, %cst_153 {dimension_numbers = #tpu.dot_dimension_numbers<[1], [0], [0], [1], [0, 0, 1, 1], [], []>} : vector<8x4xf32>, vector<4x256xf32>, vector<8x256xf32> -> vector<8x256xf32>
    %c255_i32_154 = arith.constant 255 : i32
    %240 = tpu.dynamic_rotate %239 by %c255_i32_154 dim 1 : vector<8x256xf32>, i32 -> vector<8x256xf32>
    %241 = vector.broadcast %9 : vector<1x256xf32> to vector<8x256xf32>
    %242 = arith.mulf %240, %241 : vector<8x256xf32>
    %243 = arith.addf %236, %242 : vector<8x256xf32>
    %c6_155 = arith.constant 6 : index
    %c0_156 = arith.constant 0 : index
    %c0_157 = arith.constant 0 : index
    %244 = vector.load %arg9[%c6_155, %c0_156, %c0_157] : memref<9x8x4xf32, #tpu.memory_space<vmem>>, vector<1x8x4xf32>
    %245 = vector.shape_cast %244 : vector<1x8x4xf32> to vector<8x4xf32>
    %cst_158 = arith.constant dense<0.000000e+00> : vector<8x256xf32>
    %246 = tpu.matmul %245, %205, %cst_158 {dimension_numbers = #tpu.dot_dimension_numbers<[1], [0], [0], [1], [0, 0, 1, 1], [], []>} : vector<8x4xf32>, vector<4x256xf32>, vector<8x256xf32> -> vector<8x256xf32>
    %c241_i32_159 = arith.constant 241 : i32
    %247 = tpu.dynamic_rotate %246 by %c241_i32_159 dim 1 : vector<8x256xf32>, i32 -> vector<8x256xf32>
    %248 = vector.broadcast %11 : vector<1x256xf32> to vector<8x256xf32>
    %249 = arith.mulf %247, %248 : vector<8x256xf32>
    %250 = arith.addf %243, %249 : vector<8x256xf32>
    %c7_160 = arith.constant 7 : index
    %c0_161 = arith.constant 0 : index
    %c0_162 = arith.constant 0 : index
    %251 = vector.load %arg9[%c7_160, %c0_161, %c0_162] : memref<9x8x4xf32, #tpu.memory_space<vmem>>, vector<1x8x4xf32>
    %252 = vector.shape_cast %251 : vector<1x8x4xf32> to vector<8x4xf32>
    %cst_163 = arith.constant dense<0.000000e+00> : vector<8x256xf32>
    %253 = tpu.matmul %252, %205, %cst_163 {dimension_numbers = #tpu.dot_dimension_numbers<[1], [0], [0], [1], [0, 0, 1, 1], [], []>} : vector<8x4xf32>, vector<4x256xf32>, vector<8x256xf32> -> vector<8x256xf32>
    %c240_i32_164 = arith.constant 240 : i32
    %254 = tpu.dynamic_rotate %253 by %c240_i32_164 dim 1 : vector<8x256xf32>, i32 -> vector<8x256xf32>
    %255 = vector.broadcast %13 : vector<1x256xf32> to vector<8x256xf32>
    %256 = arith.mulf %254, %255 : vector<8x256xf32>
    %257 = arith.addf %250, %256 : vector<8x256xf32>
    %c8_165 = arith.constant 8 : index
    %c0_166 = arith.constant 0 : index
    %c0_167 = arith.constant 0 : index
    %258 = vector.load %arg9[%c8_165, %c0_166, %c0_167] : memref<9x8x4xf32, #tpu.memory_space<vmem>>, vector<1x8x4xf32>
    %259 = vector.shape_cast %258 : vector<1x8x4xf32> to vector<8x4xf32>
    %cst_168 = arith.constant dense<0.000000e+00> : vector<8x256xf32>
    %260 = tpu.matmul %259, %205, %cst_168 {dimension_numbers = #tpu.dot_dimension_numbers<[1], [0], [0], [1], [0, 0, 1, 1], [], []>} : vector<8x4xf32>, vector<4x256xf32>, vector<8x256xf32> -> vector<8x256xf32>
    %c239_i32_169 = arith.constant 239 : i32
    %261 = tpu.dynamic_rotate %260 by %c239_i32_169 dim 1 : vector<8x256xf32>, i32 -> vector<8x256xf32>
    %262 = vector.broadcast %15 : vector<1x256xf32> to vector<8x256xf32>
    %263 = arith.mulf %261, %262 : vector<8x256xf32>
    %264 = arith.addf %257, %263 : vector<8x256xf32>
    %c0_170 = arith.constant 0 : index
    %c0_171 = arith.constant 0 : index
    %265 = vector.load %arg10[%c0_170, %c0_171] : memref<8x1xf32, #tpu.memory_space<vmem>>, vector<8x1xf32>
    %266 = vector.broadcast %265 : vector<8x1xf32> to vector<8x256xf32>
    %267 = arith.addf %264, %266 : vector<8x256xf32>
    %268 = arith.addf %113, %267 : vector<8x256xf32>
    %c0_172 = arith.constant 0 : index
    %c0_173 = arith.constant 0 : index
    %c0_174 = arith.constant 0 : index
    %269 = vector.load %arg12[%c0_172, %c0_173, %c0_174] : memref<1x8x256xf32, #tpu.memory_space<vmem>>, vector<1x8x256xf32>
    %270 = vector.shape_cast %269 : vector<1x8x256xf32> to vector<8x256xf32>
    %271 = vector.shape_cast %268 : vector<8x256xf32> to vector<1x8x256xf32>
    tpu.vector_store %arg12[%c0_172, %c0_173, %c0_174], %271 {strides = array<i32>} : memref<1x8x256xf32, #tpu.memory_space<vmem>>, vector<1x8x256xf32>,
    return
  }
  func.func @transform_0(%arg0: i32) -> (i32, i32, i32) {
    %c0_i32 = arith.constant 0 : i32
    %c0_i32_0 = arith.constant 0 : i32
    %c0_i32_1 = arith.constant 0 : i32
    return %arg0, %c0_i32, %c0_i32_0 : i32, i32, i32
  }
  func.func @transform_1(%arg0: i32) -> (i32, i32, i32) {
    %c0_i32 = arith.constant 0 : i32
    %c0_i32_0 = arith.constant 0 : i32
    %c0_i32_1 = arith.constant 0 : i32
    return %arg0, %c0_i32, %c0_i32_0 : i32, i32, i32
  }
  func.func @transform_2(%arg0: i32) -> (i32, i32, i32) {
    %c0_i32 = arith.constant 0 : i32
    %c0_i32_0 = arith.constant 0 : i32
    %c0_i32_1 = arith.constant 0 : i32
    %c0_i32_2 = arith.constant 0 : i32
    return %c0_i32, %c0_i32_0, %c0_i32_1 : i32, i32, i32
  }
  func.func @transform_3(%arg0: i32) -> (i32, i32) {
    %c0_i32 = arith.constant 0 : i32
    %c0_i32_0 = arith.constant 0 : i32
    %c0_i32_1 = arith.constant 0 : i32
    return %c0_i32, %c0_i32_0 : i32, i32
  }
  func.func @transform_4(%arg0: i32) -> (i32, i32, i32) {
    %c0_i32 = arith.constant 0 : i32
    %c0_i32_0 = arith.constant 0 : i32
    %c0_i32_1 = arith.constant 0 : i32
    %c0_i32_2 = arith.constant 0 : i32
    return %c0_i32, %c0_i32_0, %c0_i32_1 : i32, i32, i32
  }
  func.func @transform_5(%arg0: i32) -> (i32, i32) {
    %c0_i32 = arith.constant 0 : i32
    %c0_i32_0 = arith.constant 0 : i32
    %c0_i32_1 = arith.constant 0 : i32
    return %c0_i32, %c0_i32_0 : i32, i32
  }
  func.func @transform_6(%arg0: i32) -> (i32, i32, i32) {
    %c0_i32 = arith.constant 0 : i32
    %c0_i32_0 = arith.constant 0 : i32
    %c0_i32_1 = arith.constant 0 : i32
    %c0_i32_2 = arith.constant 0 : i32
    return %c0_i32, %c0_i32_0, %c0_i32_1 : i32, i32, i32
  }
  func.func @transform_7(%arg0: i32) -> (i32, i32) {
    %c0_i32 = arith.constant 0 : i32
    %c0_i32_0 = arith.constant 0 : i32
    %c0_i32_1 = arith.constant 0 : i32
    return %c0_i32, %c0_i32_0 : i32, i32
  }
  func.func @transform_8(%arg0: i32) -> (i32, i32, i32) {
    %c0_i32 = arith.constant 0 : i32
    %c0_i32_0 = arith.constant 0 : i32
    %c0_i32_1 = arith.constant 0 : i32
    %c0_i32_2 = arith.constant 0 : i32
    return %c0_i32, %c0_i32_0, %c0_i32_1 : i32, i32, i32
  }
  func.func @transform_9(%arg0: i32) -> (i32, i32) {
    %c0_i32 = arith.constant 0 : i32
    %c0_i32_0 = arith.constant 0 : i32
    %c0_i32_1 = arith.constant 0 : i32
    return %c0_i32, %c0_i32_0 : i32, i32
  }
  func.func @transform_10(%arg0: i32) -> (i32, i32) {
    %c0_i32 = arith.constant 0 : i32
    %c0_i32_0 = arith.constant 0 : i32
    %c0_i32_1 = arith.constant 0 : i32
    return %c0_i32, %c0_i32_0 : i32, i32
  }
  func.func @transform_11(%arg0: i32) -> (i32, i32, i32) {
    %c0_i32 = arith.constant 0 : i32
    %c0_i32_0 = arith.constant 0 : i32
    %c0_i32_1 = arith.constant 0 : i32
    return %arg0, %c0_i32, %c0_i32_0 : i32, i32, i32
  }
}

</mosaic_0001>

<llo_original>
// kernel: spade_resblock_forward.1
$region0: #{spade_resblock_forward.1}
  #allocation0 [shape = 'u32[]', space=smem, size = 0x4, offset = 0x4, fixed_abs, tag = 'smem constant byte address 0x4 - core index']
  #allocation1 [shape = 'u32[144,128]{1,0:T(1,128)}', space=vmem, size = 0x12000, scoped, tag = 'internal scratch']
  %s0 = inlined_call_operand.vmem [shape: f32[2,28,256], index: 0, kind: input, shape index: {}]
  %s1 = inlined_call_operand.vmem [shape: f32[2,4,256], index: 1, kind: input, shape index: {}]
  %s2 = inlined_call_operand.vmem [shape: f32[9,1,256], index: 2, kind: input, shape index: {}]
  %s3 = inlined_call_operand.vmem [shape: f32[384,28], index: 3, kind: input, shape index: {}]
  %s4 = inlined_call_operand.vmem [shape: f32[9,24,384], index: 4, kind: input, shape index: {}]
  %s5 = inlined_call_operand.vmem [shape: f32[24,1], index: 5, kind: input, shape index: {}]
  %s6 = inlined_call_operand.vmem [shape: f32[9,4,4], index: 6, kind: input, shape index: {}]
  %s7 = inlined_call_operand.vmem [shape: f32[4,1], index: 7, kind: input, shape index: {}]
  %s8 = inlined_call_operand.vmem [shape: f32[9,8,4], index: 8, kind: input, shape index: {}]
  %s9 = inlined_call_operand.vmem [shape: f32[8,1], index: 9, kind: input, shape index: {}]
  %s10 = inlined_call_operand.vmem [shape: f32[8,4], index: 10, kind: input, shape index: {}]
  %s11 = inlined_call_operand.vmem [shape: f32[2,8,256], index: 11, kind: output, shape index: {}]
  %s12 = sld [smem:[#allocation0]]
  $region77: #{spade_resblock_forward.1} parent=0
    _
  %s14 = ssub.s32 1, %s12
  %s15 = scalar_select 0, %s14, %s12
  loop: start=0, step=1, limit=4
  $region2: #{spade_resblock_forward.1} parent=0 // loop_pre_header
    _
  $region3: #{spade_resblock_forward.1} parent=0 // loop_header
    %s17 = sphi 0, %s21
    %p18 = scmp.ge.s32.totalorder %s17, 4
    %s27 = sphi 0, %s29
    %s30 = sphi 0, %s27
    %s31 = sphi 0, %s30
    %s47 = sphi 0, %s31
    %s53 = sphi 0, %s55
    %s56 = sphi 0, %s53
    %s57 = sphi 0, %s56
    %s73 = sphi 0, %s57
    %s77 = sphi 0, %s77
    %s79 = sphi 0, %s77
    %s80 = sphi 0, %s79
    %s94 = sphi 0, %s80
    %s98 = sphi 0, %s98
    %s100 = sphi 0, %s98
    %s101 = sphi 0, %s100
    %s115 = sphi 0, %s101
    %s119 = sphi 0, %s119
    %s121 = sphi 0, %s119
    %s122 = sphi 0, %s121
    %s136 = sphi 0, %s122
    %s140 = sphi 0, %s140
    %s142 = sphi 0, %s140
    %s143 = sphi 0, %s142
    %s157 = sphi 0, %s143
    %s161 = sphi 0, %s161
    %s163 = sphi 0, %s161
    %s164 = sphi 0, %s163
    %s178 = sphi 0, %s164
    %s182 = sphi 0, %s182
    %s184 = sphi 0, %s182
    %s185 = sphi 0, %s184
    %s199 = sphi 0, %s185
    %s203 = sphi 0, %s203
    %s205 = sphi 0, %s203
    %s206 = sphi 0, %s205
    %s220 = sphi 0, %s206
    %s224 = sphi 0, %s224
    %s226 = sphi 0, %s224
    %s227 = sphi 0, %s226
    %s241 = sphi 0, %s227
    %s245 = sphi 0, %s245
    %s247 = sphi 0, %s245
    %s248 = sphi 0, %s247
    %s262 = sphi 0, %s248
    %s268 = sphi 0, %s270
    %s271 = sphi 0, %s268
    %s272 = sphi 0, %s271
    %s288 = sphi 0, %s272
  $region4: #{spade_resblock_forward.1} parent=0 // loop_header_branch
    %20 = sbr.rel (%p18) target = $region8
  $region5: #{spade_resblock_forward.1} parent=0 // loop_body
    %s22 = ssub.s32 %s17, 1
    %s23 = ssub.s32 %s17, 2
    %s24 = sadd.s32 %s17, 1
    %s25 = ssub.s32 %s17, %s24
    %p26 = scmp.eq.s32.totalorder %s25, 0
    %s28 = sadd.s32 %s27, 1
    %s29 = scalar_select %p26, %s27, %s28
    %p32 = pneg %p26
    %p33 = scmp.eq.s32.totalorder %s17, 1
    %p34 = por %p32, %p33
    %p35 = scmp.ne.s32.totalorder %s27, %s30
    %p36 = scmp.eq.s32.totalorder %s17, 0
    %p37 = por %p35, %p36
    %p38 = scmp.ne.s32.totalorder %s27, %s30
    %p39 = scmp.eq.s32.totalorder %s22, 1
    %p40 = por %p38, %p39
    %p41 = scmp.ne.s32.totalorder %s30, %s31
    %p42 = scmp.eq.s32.totalorder %s22, 0
    %p43 = por %p41, %p42
    %p44 = scmp.ne.s32.totalorder %s30, %s31
    %p45 = scmp.eq.s32.totalorder %s23, 1
    %p46 = por %p44, %p45
    %p48 = scmp.ne.s32.totalorder %s31, %s47
    %p49 = scmp.eq.s32.totalorder %s23, 0
    %p50 = por %p48, %p49
    %s51 = ssub.s32 %s17, %s24
    %p52 = scmp.eq.s32.totalorder %s51, 0
    %s54 = sadd.s32 %s53, 1
    %s55 = scalar_select %p52, %s53, %s54
    %p58 = pneg %p52
    %p59 = scmp.eq.s32.totalorder %s17, 1
    %p60 = por %p58, %p59
    %p61 = scmp.ne.s32.totalorder %s53, %s56
    %p62 = scmp.eq.s32.totalorder %s17, 0
    %p63 = por %p61, %p62
    %p64 = scmp.ne.s32.totalorder %s53, %s56
    %p65 = scmp.eq.s32.totalorder %s22, 1
    %p66 = por %p64, %p65
    %p67 = scmp.ne.s32.totalorder %s56, %s57
    %p68 = scmp.eq.s32.totalorder %s22, 0
    %p69 = por %p67, %p68
    %p70 = scmp.ne.s32.totalorder %s56, %s57
    %p71 = scmp.eq.s32.totalorder %s23, 1
    %p72 = por %p70, %p71
    %p74 = scmp.ne.s32.totalorder %s57, %s73
    %p75 = scmp.eq.s32.totalorder %s23, 0
    %p76 = por %p74, %p75
    %s78 = sadd.s32 %s77, 1
    %p81 = scmp.eq.s32.totalorder %s17, 1
    %p82 = scmp.ne.s32.totalorder %s77, %s79
    %p83 = scmp.eq.s32.totalorder %s17, 0
    %p84 = por %p82, %p83
    %p85 = scmp.ne.s32.totalorder %s77, %s79
    %p86 = scmp.eq.s32.totalorder %s22, 1
    %p87 = por %p85, %p86
    %p88 = scmp.ne.s32.totalorder %s79, %s80
    %p89 = scmp.eq.s32.totalorder %s22, 0
    %p90 = por %p88, %p89
    %p91 = scmp.ne.s32.totalorder %s79, %s80
    %p92 = scmp.eq.s32.totalorder %s23, 1
    %p93 = por %p91, %p92
    %p95 = scmp.ne.s32.totalorder %s80, %s94
    %p96 = scmp.eq.s32.totalorder %s23, 0
    %p97 = por %p95, %p96
    %s99 = sadd.s32 %s98, 1
    %p102 = scmp.eq.s32.totalorder %s17, 1
    %p103 = scmp.ne.s32.totalorder %s98, %s100
    %p104 = scmp.eq.s32.totalorder %s17, 0
    %p105 = por %p103, %p104
    %p106 = scmp.ne.s32.totalorder %s98, %s100
    %p107 = scmp.eq.s32.totalorder %s22, 1
    %p108 = por %p106, %p107
    %p109 = scmp.ne.s32.totalorder %s100, %s101
    %p110 = scmp.eq.s32.totalorder %s22, 0
    %p111 = por %p109, %p110
    %p112 = scmp.ne.s32.totalorder %s100, %s101
    %p113 = scmp.eq.s32.totalorder %s23, 1
    %p114 = por %p112, %p113
    %p116 = scmp.ne.s32.totalorder %s101, %s115
    %p117 = scmp.eq.s32.totalorder %s23, 0
    %p118 = por %p116, %p117
    %s120 = sadd.s32 %s119, 1
    %p123 = scmp.eq.s32.totalorder %s17, 1
    %p124 = scmp.ne.s32.totalorder %s119, %s121
    %p125 = scmp.eq.s32.totalorder %s17, 0
    %p126 = por %p124, %p125
    %p127 = scmp.ne.s32.totalorder %s119, %s121
    %p128 = scmp.eq.s32.totalorder %s22, 1
    %p129 = por %p127, %p128
    %p130 = scmp.ne.s32.totalorder %s121, %s122
    %p131 = scmp.eq.s32.totalorder %s22, 0
    %p132 = por %p130, %p131
    %p133 = scmp.ne.s32.totalorder %s121, %s122
    %p134 = scmp.eq.s32.totalorder %s23, 1
    %p135 = por %p133, %p134
    %p137 = scmp.ne.s32.totalorder %s122, %s136
    %p138 = scmp.eq.s32.totalorder %s23, 0
    %p139 = por %p137, %p138
    %s141 = sadd.s32 %s140, 1
    %p144 = scmp.eq.s32.totalorder %s17, 1
    %p145 = scmp.ne.s32.totalorder %s140, %s142
    %p146 = scmp.eq.s32.totalorder %s17, 0
    %p147 = por %p145, %p146
    %p148 = scmp.ne.s32.totalorder %s140, %s142
    %p149 = scmp.eq.s32.totalorder %s22, 1
    %p150 = por %p148, %p149
    %p151 = scmp.ne.s32.totalorder %s142, %s143
    %p152 = scmp.eq.s32.totalorder %s22, 0
    %p153 = por %p151, %p152
    %p154 = scmp.ne.s32.totalorder %s142, %s143
    %p155 = scmp.eq.s32.totalorder %s23, 1
    %p156 = por %p154, %p155
    %p158 = scmp.ne.s32.totalorder %s143, %s157
    %p159 = scmp.eq.s32.totalorder %s23, 0
    %p160 = por %p158, %p159
    %s162 = sadd.s32 %s161, 1
    %p165 = scmp.eq.s32.totalorder %s17, 1
    %p166 = scmp.ne.s32.totalorder %s161, %s163
    %p167 = scmp.eq.s32.totalorder %s17, 0
    %p168 = por %p166, %p167
    %p169 = scmp.ne.s32.totalorder %s161, %s163
    %p170 = scmp.eq.s32.totalorder %s22, 1
    %p171 = por %p169, %p170
    %p172 = scmp.ne.s32.totalorder %s163, %s164
    %p173 = scmp.eq.s32.totalorder %s22, 0
    %p174 = por %p172, %p173
    %p175 = scmp.ne.s32.totalorder %s163, %s164
    %p176 = scmp.eq.s32.totalorder %s23, 1
    %p177 = por %p175, %p176
    %p179 = scmp.ne.s32.totalorder %s164, %s178
    %p180 = scmp.eq.s32.totalorder %s23, 0
    %p181 = por %p179, %p180
    %s183 = sadd.s32 %s182, 1
    %p186 = scmp.eq.s32.totalorder %s17, 1
    %p187 = scmp.ne.s32.totalorder %s182, %s184
    %p188 = scmp.eq.s32.totalorder %s17, 0
    %p189 = por %p187, %p188
    %p190 = scmp.ne.s32.totalorder %s182, %s184
    %p191 = scmp.eq.s32.totalorder %s22, 1
    %p192 = por %p190, %p191
    %p193 = scmp.ne.s32.totalorder %s184, %s185
    %p194 = scmp.eq.s32.totalorder %s22, 0
    %p195 = por %p193, %p194
    %p196 = scmp.ne.s32.totalorder %s184, %s185
    %p197 = scmp.eq.s32.totalorder %s23, 1
    %p198 = por %p196, %p197
    %p200 = scmp.ne.s32.totalorder %s185, %s199
    %p201 = scmp.eq.s32.totalorder %s23, 0
    %p202 = por %p200, %p201
    %s204 = sadd.s32 %s203, 1
    %p207 = scmp.eq.s32.totalorder %s17, 1
    %p208 = scmp.ne.s32.totalorder %s203, %s205
    %p209 = scmp.eq.s32.totalorder %s17, 0
    %p210 = por %p208, %p209
    %p211 = scmp.ne.s32.totalorder %s203, %s205
    %p212 = scmp.eq.s32.totalorder %s22, 1
    %p213 = por %p211, %p212
    %p214 = scmp.ne.s32.totalorder %s205, %s206
    %p215 = scmp.eq.s32.totalorder %s22, 0
    %p216 = por %p214, %p215
    %p217 = scmp.ne.s32.totalorder %s205, %s206
    %p218 = scmp.eq.s32.totalorder %s23, 1
    %p219 = por %p217, %p218
    %p221 = scmp.ne.s32.totalorder %s206, %s220
    %p222 = scmp.eq.s32.totalorder %s23, 0
    %p223 = por %p221, %p222
    %s225 = sadd.s32 %s224, 1
    %p228 = scmp.eq.s32.totalorder %s17, 1
    %p229 = scmp.ne.s32.totalorder %s224, %s226
    %p230 = scmp.eq.s32.totalorder %s17, 0
    %p231 = por %p229, %p230
    %p232 = scmp.ne.s32.totalorder %s224, %s226
    %p233 = scmp.eq.s32.totalorder %s22, 1
    %p234 = por %p232, %p233
    %p235 = scmp.ne.s32.totalorder %s226, %s227
    %p236 = scmp.eq.s32.totalorder %s22, 0
    %p237 = por %p235, %p236
    %p238 = scmp.ne.s32.totalorder %s226, %s227
    %p239 = scmp.eq.s32.totalorder %s23, 1
    %p240 = por %p238, %p239
    %p242 = scmp.ne.s32.totalorder %s227, %s241
    %p243 = scmp.eq.s32.totalorder %s23, 0
    %p244 = por %p242, %p243
    %s246 = sadd.s32 %s245, 1
    %p249 = scmp.eq.s32.totalorder %s17, 1
    %p250 = scmp.ne.s32.totalorder %s245, %s247
    %p251 = scmp.eq.s32.totalorder %s17, 0
    %p252 = por %p250, %p251
    %p253 = scmp.ne.s32.totalorder %s245, %s247
    %p254 = scmp.eq.s32.totalorder %s22, 1
    %p255 = por %p253, %p254
    %p256 = scmp.ne.s32.totalorder %s247, %s248
    %p257 = scmp.eq.s32.totalorder %s22, 0
    %p258 = por %p256, %p257
    %p259 = scmp.ne.s32.totalorder %s247, %s248
    %p260 = scmp.eq.s32.totalorder %s23, 1
    %p261 = por %p259, %p260
    %p263 = scmp.ne.s32.totalorder %s248, %s262
    %p264 = scmp.eq.s32.totalorder %s23, 0
    %p265 = por %p263, %p264
    %s266 = ssub.s32 %s17, %s24
    %p267 = scmp.eq.s32.totalorder %s266, 0
    %s269 = sadd.s32 %s268, 1
    %s270 = scalar_select %p267, %s268, %s269
    %p273 = pneg %p267
    %p274 = scmp.eq.s32.totalorder %s17, 1
    %p275 = por %p273, %p274
    %p276 = scmp.ne.s32.totalorder %s268, %s271
    %p277 = scmp.eq.s32.totalorder %s17, 0
    %p278 = por %p276, %p277
    %p279 = scmp.ne.s32.totalorder %s268, %s271
    %p280 = scmp.eq.s32.totalorder %s22, 1
    %p281 = por %p279, %p280
    %p282 = scmp.ne.s32.totalorder %s271, %s272
    %p283 = scmp.eq.s32.totalorder %s22, 0
    %p284 = por %p282, %p283
    %p285 = scmp.ne.s32.totalorder %s271, %s272
    %p286 = scmp.eq.s32.totalorder %s23, 1
    %p287 = por %p285, %p286
    %p289 = scmp.ne.s32.totalorder %s272, %s288
    %p290 = scmp.eq.s32.totalorder %s23, 0
    %p291 = por %p289, %p290
    %p292 = scmp.le.s32.totalorder 1, %s17
    %p293 = scmp.lt.s32.totalorder %s17, 3
    %p294 = pnand %p292, %p293
    %p295 = pneg %p294
    // Predicated region
    $region9: #{spade_resblock_forward.1} parent=5 // pred_check
      _
    $region10: #{spade_resblock_forward.1} parent=5 // pred_check_branch
      %297 = sbr.rel (%p294) target = $region12
    $region11: #{spade_resblock_forward.1} parent=5 // pred_region
      %s298 = ssub.s32 %s17, 1
      // Predicated region
      $region13: #{spade_resblock_forward.1} parent=11 // pred_check
        %p299 = pneg %p90
      $region14: #{spade_resblock_forward.1} parent=11 // pred_check_branch
        %301 = sbr.rel (%p299) target = $region16
      $region15: #{spade_resblock_forward.1} parent=11 // pred_region
        _
      $region16: #{spade_resblock_forward.1} parent=11 // pred_fallthru
        _
      // Predicated region
      $region17: #{spade_resblock_forward.1} parent=11 // pred_check
        %p302 = pneg %p111
      $region18: #{spade_resblock_forward.1} parent=11 // pred_check_branch
        %304 = sbr.rel (%p302) target = $region20
      $region19: #{spade_resblock_forward.1} parent=11 // pred_region
        _
      $region20: #{spade_resblock_forward.1} parent=11 // pred_fallthru
        _
      // Predicated region
      $region21: #{spade_resblock_forward.1} parent=11 // pred_check
        %p305 = pneg %p132
      $region22: #{spade_resblock_forward.1} parent=11 // pred_check_branch
        %307 = sbr.rel (%p305) target = $region24
      $region23: #{spade_resblock_forward.1} parent=11 // pred_region
        _
      $region24: #{spade_resblock_forward.1} parent=11 // pred_fallthru
        _
      // Predicated region
      $region25: #{spade_resblock_forward.1} parent=11 // pred_check
        %p308 = pneg %p153
      $region26: #{spade_resblock_forward.1} parent=11 // pred_check_branch
        %310 = sbr.rel (%p308) target = $region28
      $region27: #{spade_resblock_forward.1} parent=11 // pred_region
        _
      $region28: #{spade_resblock_forward.1} parent=11 // pred_fallthru
        _
      // Predicated region
      $region29: #{spade_resblock_forward.1} parent=11 // pred_check
        %p311 = pneg %p174
      $region30: #{spade_resblock_forward.1} parent=11 // pred_check_branch
        %313 = sbr.rel (%p311) target = $region32
      $region31: #{spade_resblock_forward.1} parent=11 // pred_region
        _
      $region32: #{spade_resblock_forward.1} parent=11 // pred_fallthru
        _
      // Predicated region
      $region33: #{spade_resblock_forward.1} parent=11 // pred_check
        %p314 = pneg %p195
      $region34: #{spade_resblock_forward.1} parent=11 // pred_check_branch
        %316 = sbr.rel (%p314) target = $region36
      $region35: #{spade_resblock_forward.1} parent=11 // pred_region
        _
      $region36: #{spade_resblock_forward.1} parent=11 // pred_fallthru
        _
      // Predicated region
      $region37: #{spade_resblock_forward.1} parent=11 // pred_check
        %p317 = pneg %p216
      $region38: #{spade_resblock_forward.1} parent=11 // pred_check_branch
        %319 = sbr.rel (%p317) target = $region40
      $region39: #{spade_resblock_forward.1} parent=11 // pred_region
        _
      $region40: #{spade_resblock_forward.1} parent=11 // pred_fallthru
        _
      // Predicated region
      $region41: #{spade_resblock_forward.1} parent=11 // pred_check
        %p320 = pneg %p237
      $region42: #{spade_resblock_forward.1} parent=11 // pred_check_branch
        %322 = sbr.rel (%p320) target = $region44
      $region43: #{spade_resblock_forward.1} parent=11 // pred_region
        _
      $region44: #{spade_resblock_forward.1} parent=11 // pred_fallthru
        _
      // Predicated region
      $region45: #{spade_resblock_forward.1} parent=11 // pred_check
        %p323 = pneg %p258
      $region46: #{spade_resblock_forward.1} parent=11 // pred_check_branch
        %325 = sbr.rel (%p323) target = $region48
      $region47: #{spade_resblock_forward.1} parent=11 // pred_region
        _
      $region48: #{spade_resblock_forward.1} parent=11 // pred_fallthru
        _
    $region12: #{spade_resblock_forward.1} parent=5 // pred_fallthru
      _
    %p326 = scmp.lt.s32.totalorder %s17, 2
    // Predicated region
    $region49: #{spade_resblock_forward.1} parent=5 // pred_check
      %p327 = pneg %p326
    $region50: #{spade_resblock_forward.1} parent=5 // pred_check_branch
      %329 = sbr.rel (%p327) target = $region52
    $region51: #{spade_resblock_forward.1} parent=5 // pred_region
      // Predicated region
      $region53: #{spade_resblock_forward.1} parent=51 // pred_check
        %p330 = pneg %p37
      $region54: #{spade_resblock_forward.1} parent=51 // pred_check_branch
        %332 = sbr.rel (%p330) target = $region56
      $region55: #{spade_resblock_forward.1} parent=51 // pred_region
        %p333 = scmp.lt.s32.totalorder %s17, 1
        %s334 = scalar_select %p333, %s17, 1
        %s335 = smul.addr %s334, 8
        %s336 = smul.addr %s335, 8
        %s337 = scalar_lea.vmem %s0, %s336
      $region56: #{spade_resblock_forward.1} parent=51 // pred_fallthru
        _
      // Predicated region
      $region57: #{spade_resblock_forward.1} parent=51 // pred_check
        %p338 = pneg %p63
      $region58: #{spade_resblock_forward.1} parent=51 // pred_check_branch
        %340 = sbr.rel (%p338) target = $region60
      $region59: #{spade_resblock_forward.1} parent=51 // pred_region
        %p341 = scmp.lt.s32.totalorder %s17, 1
        %s342 = scalar_select %p341, %s17, 1
        %s343 = smul.addr %s342, 2
        %s344 = smul.addr %s343, 4
        %s345 = scalar_lea.vmem %s1, %s344
      $region60: #{spade_resblock_forward.1} parent=51 // pred_fallthru
        _
    $region52: #{spade_resblock_forward.1} parent=5 // pred_fallthru
      _
    %p346 = scmp.le.s32.totalorder 1, %s17
    %p347 = scmp.lt.s32.totalorder %s17, 3
    %p348 = pnand %p346, %p347
    %p349 = pneg %p348
    // Predicated region
    $region61: #{spade_resblock_forward.1} parent=5 // pred_check
      _
    $region62: #{spade_resblock_forward.1} parent=5 // pred_check_branch
      %351 = sbr.rel (%p348) target = $region64
    $region63: #{spade_resblock_forward.1} parent=5 // pred_region
      %s352 = ssub.s32 %s17, 1
      %p353 = scmp.lt.s32.totalorder %s22, 1
      %s354 = scalar_select %p353, %s22, 1
      %s355 = smul.addr %s354, 8
      %s356 = smul.addr %s355, 8
      %s357 = scalar_lea.vmem %s0, %s356
      %p358 = pneg %p43
      %p359 = pneg %p40
      %p360 = scmp.lt.s32.totalorder %s22, 1
      %s361 = scalar_select %p360, %s22, 1
      %s362 = smul.addr %s361, 2
      %s363 = smul.addr %s362, 4
      %s364 = scalar_lea.vmem %s1, %s363
      %p365 = pneg %p69
      %p366 = pneg %p66
      %p367 = pneg %p90
      %p368 = pneg %p87
      %p369 = pneg %p111
      %p370 = pneg %p108
      %p371 = pneg %p132
      %p372 = pneg %p129
      %p373 = pneg %p153
      %p374 = pneg %p150
      %p375 = pneg %p174
      %p376 = pneg %p171
      %p377 = pneg %p195
      %p378 = pneg %p192
      %p379 = pneg %p216
      %p380 = pneg %p213
      %p381 = pneg %p237
      %p382 = pneg %p234
      %p383 = pneg %p258
      %p384 = pneg %p255
      %p385 = pneg %p284
      %p386 = pneg %p281
      %p387 = scmp.lt.s32.totalorder %s22, 1
      %s388 = scalar_select %p387, %s22, 1
      %s389 = smul.addr %s388, 2
      %s390 = smul.addr %s389, 8
      %s391 = scalar_lea.vmem %s11, %s390
      %p392 = scmp.lt.s32.totalorder %s22, 1
      %s393 = scalar_select %p392, %s22, 1
      %s394 = smul.addr %s393, 8
      %s395 = smul.addr %s394, 8
      %s396 = scalar_lea.vmem %s0, %s395
      %p397 = scmp.lt.s32.totalorder %s22, 1
      %s398 = scalar_select %p397, %s22, 1
      %s399 = smul.addr %s398, 2
      %s400 = smul.addr %s399, 4
      %s401 = scalar_lea.vmem %s1, %s400
      %p402 = scmp.lt.s32.totalorder %s22, 1
      %s403 = scalar_select %p402, %s22, 1
      %s404 = smul.addr %s403, 2
      %s405 = smul.addr %s404, 8
      %s406 = scalar_lea.vmem %s11, %s405
      %v407 = vld [vmem:[%s2] sm:$0x3]
      %s408 = scalar_lea.vmem %s2, 2
      %v409 = vld [vmem:[%s408] sm:$0x3]
      %s410 = scalar_lea.vmem %s2, 4
      %v411 = vld [vmem:[%s410] sm:$0x3]
      %s412 = scalar_lea.vmem %s2, 6
      %v413 = vld [vmem:[%s412] sm:$0x3]
      %s414 = scalar_lea.vmem %s2, 10
      %v415 = vld [vmem:[%s414] sm:$0x3]
      %s416 = scalar_lea.vmem %s2, 12
      %v417 = vld [vmem:[%s416] sm:$0x3]
      %s418 = scalar_lea.vmem %s2, 14
      %v419 = vld [vmem:[%s418] sm:$0x3]
      %s420 = scalar_lea.vmem %s2, 16
      %v421 = vld [vmem:[%s420] sm:$0x3]
      %v422 = vld [vmem:[%s3] sm:$0xff]
      %v423 = vld [vmem:[%s3 + $0x8] sm:$0xff]
      %v424 = vld [vmem:[%s3 + $0x10] sm:$0xff]
      %v425 = vld [vmem:[%s3 + $0x18] sm:$0xff]
      %v426 = vld [vmem:[%s3 + $0x20] sm:$0xff]
      %v427 = vld [vmem:[%s3 + $0x28] sm:$0xff]
      %v428 = vld [vmem:[%s3 + $0x30] sm:$0xff]
      %v429 = vld [vmem:[%s3 + $0x38] sm:$0xff]
      %v430 = vld [vmem:[%s3 + $0x40] sm:$0xff]
      %v431 = vld [vmem:[%s3 + $0x48] sm:$0xff]
      %v432 = vld [vmem:[%s3 + $0x50] sm:$0xff]
      %v433 = vld [vmem:[%s3 + $0x58] sm:$0xff]
      %v434 = vld [vmem:[%s3 + $0x60] sm:$0xff]
      %v435 = vld [vmem:[%s3 + $0x68] sm:$0xff]
      %v436 = vld [vmem:[%s3 + $0x70] sm:$0xff]
      %v437 = vld [vmem:[%s3 + $0x78] sm:$0xff]
      %v438 = vld [vmem:[%s3 + $0x80] sm:$0xff]
      %v439 = vld [vmem:[%s3 + $0x88] sm:$0xff]
      %v440 = vld [vmem:[%s3 + $0x90] sm:$0xff]
      %v441 = vld [vmem:[%s3 + $0x98] sm:$0xff]
      %v442 = vld [vmem:[%s3 + $0xa0] sm:$0xff]
      %v443 = vld [vmem:[%s3 + $0xa8] sm:$0xff]
      %v444 = vld [vmem:[%s3 + $0xb0] sm:$0xff]
      %v445 = vld [vmem:[%s3 + $0xb8] sm:$0xff]
      %v446 = vld [vmem:[%s3 + $0xc0] sm:$0xff]
      %v447 = vld [vmem:[%s3 + $0xc8] sm:$0xff]
      %v448 = vld [vmem:[%s3 + $0xd0] sm:$0xff]
      %v449 = vld [vmem:[%s3 + $0xd8] sm:$0xff]
      %v450 = vld [vmem:[%s3 + $0xe0] sm:$0xff]
      %v451 = vld [vmem:[%s3 + $0xe8] sm:$0xff]
      %v452 = vld [vmem:[%s3 + $0xf0] sm:$0xff]
      %v453 = vld [vmem:[%s3 + $0xf8] sm:$0xff]
      %v454 = vld [vmem:[%s3 + $0x100] sm:$0xff]
      %v455 = vld [vmem:[%s3 + $0x108] sm:$0xff]
      %v456 = vld [vmem:[%s3 + $0x110] sm:$0xff]
      %v457 = vld [vmem:[%s3 + $0x118] sm:$0xff]
      %v458 = vld [vmem:[%s3 + $0x120] sm:$0xff]
      %v459 = vld [vmem:[%s3 + $0x128] sm:$0xff]
      %v460 = vld [vmem:[%s3 + $0x130] sm:$0xff]
      %v461 = vld [vmem:[%s3 + $0x138] sm:$0xff]
      %v462 = vld [vmem:[%s3 + $0x140] sm:$0xff]
      %v463 = vld [vmem:[%s3 + $0x148] sm:$0xff]
      %v464 = vld [vmem:[%s3 + $0x150] sm:$0xff]
      %v465 = vld [vmem:[%s3 + $0x158] sm:$0xff]
      %v466 = vld [vmem:[%s3 + $0x160] sm:$0xff]
      %v467 = vld [vmem:[%s3 + $0x168] sm:$0xff]
      %v468 = vld [vmem:[%s3 + $0x170] sm:$0xff]
      %v469 = vld [vmem:[%s3 + $0x178] sm:$0xff]
      %v470 = vld [vmem:[%s396] sm:$0xff]
      %v471 = vld [vmem:[%s396 + $0x8] sm:$0xff]
      %v472 = vld [vmem:[%s396 + $0x10] sm:$0xff]
      %v473 = vld [vmem:[%s396 + $0x18] sm:$0xff]
      %v474 = vld [vmem:[%s396 + $0x20] sm:$0xff]
      %v475 = vld [vmem:[%s396 + $0x28] sm:$0xff]
      %v476 = vld [vmem:[%s396 + $0x30] sm:$0xf]
      %v477 = vld [vmem:[%s396 + $0x38] sm:$0xf]
      %vm478 = vcmask 228352
      %v480 = vsel %vm478, %v422, 0
      %v483 = vsel %vm478, %v423, 0
      %v486 = vsel %vm478, %v424, 0
      %v489 = vsel %vm478, %v425, 0
      %v492 = vsel %vm478, %v426, 0
      %v495 = vsel %vm478, %v427, 0
      %v498 = vsel %vm478, %v428, 0
      %v501 = vsel %vm478, %v429, 0
      %v504 = vsel %vm478, %v430, 0
      %v507 = vsel %vm478, %v431, 0
      %v510 = vsel %vm478, %v432, 0
      %v513 = vsel %vm478, %v433, 0
      %v516 = vsel %vm478, %v434, 0
      %v519 = vsel %vm478, %v435, 0
      %v522 = vsel %vm478, %v436, 0
      %v525 = vsel %vm478, %v437, 0
      %v528 = vsel %vm478, %v438, 0
      %v531 = vsel %vm478, %v439, 0
      %v534 = vsel %vm478, %v440, 0
      %v537 = vsel %vm478, %v441, 0
      %v540 = vsel %vm478, %v442, 0
      %v543 = vsel %vm478, %v443, 0
      %v546 = vsel %vm478, %v444, 0
      %v549 = vsel %vm478, %v445, 0
      %v552 = vsel %vm478, %v446, 0
      %v555 = vsel %vm478, %v447, 0
      %v558 = vsel %vm478, %v448, 0
      %v561 = vsel %vm478, %v449, 0
      %v564 = vsel %vm478, %v450, 0
      %v567 = vsel %vm478, %v451, 0
      %v570 = vsel %vm478, %v452, 0
      %v573 = vsel %vm478, %v453, 0
      %v576 = vsel %vm478, %v454, 0
      %v579 = vsel %vm478, %v455, 0
      %v582 = vsel %vm478, %v456, 0
      %v585 = vsel %vm478, %v457, 0
      %v588 = vsel %vm478, %v458, 0
      %v591 = vsel %vm478, %v459, 0
      %v594 = vsel %vm478, %v460, 0
      %v597 = vsel %vm478, %v461, 0
      %v600 = vsel %vm478, %v462, 0
      %v603 = vsel %vm478, %v463, 0
      %v606 = vsel %vm478, %v464, 0
      %v609 = vsel %vm478, %v465, 0
      %v612 = vsel %vm478, %v466, 0
      %v615 = vsel %vm478, %v467, 0
      %v618 = vsel %vm478, %v468, 0
      %v621 = vsel %vm478, %v469, 0
      %vm623 = vcmask 1043456
      %v625 = vsel %vm623, %v476, 0
      %v628 = vsel %vm623, %v477, 0
      %630 = vmatprep.subr.mxu0 %v471
      %631 = vmatpush1.msra.mxu0 %v470
      %632 = vmatprep.subr.mxu0 %v473
      %633 = vmatpush1.msra.mxu0 %v472
      %634 = vmatprep.subr.mxu0 %v475
      %635 = vmatpush1.msra.mxu0 %v474
      %636 = vmatprep.subr.mxu0 %v628
      %637 = vmatpush1.msra.mxu0 %v625
      %638 = vmatprep.subr.mxu0 0.0
      %639 = vmatpush1.msra.mxu0 0.0
      %640 = vmatprep.subr.mxu0 0.0
      %641 = vmatpush1.msra.mxu0 0.0
      %642 = vmatprep.subr.mxu0 0.0
      %643 = vmatpush1.msra.mxu0 0.0
      %644 = vmatprep.subr.mxu0 0.0
      %645 = vmatpush1.msra.mxu0 0.0
      %646 = vmatprep.subr.mxu0 0.0
      %647 = vmatpush1.msra.mxu0 0.0
      %648 = vmatprep.subr.mxu0 0.0
      %649 = vmatpush1.msra.mxu0 0.0
      %650 = vmatprep.subr.mxu0 0.0
      %651 = vmatpush1.msra.mxu0 0.0
      %652 = vmatprep.subr.mxu0 0.0
      %653 = vmatpush1.msra.mxu0 0.0
      %654 = vmatprep.subr.mxu0 0.0
      %655 = vmatpush1.msra.mxu0 0.0
      %656 = vmatprep.subr.mxu0 0.0
      %657 = vmatpush1.msra.mxu0 0.0
      %658 = vmatprep.subr.mxu0 0.0
      %659 = vmatpush1.msra.mxu0 0.0
      %660 = vmatprep.subr.mxu0 0.0
      %661 = vmatpush1.msra.mxu0 0.0
      %662 = vmatprep.subr.mxu0 0.0
      %663 = vmatpush1.msra.mxu0 0.0
      %664 = vmatprep.subr.mxu0 0.0
      %665 = vmatpush1.msra.mxu0 0.0
      %666 = vmatprep.subr.mxu0 0.0
      %667 = vmatpush1.msra.mxu0 0.0
      %668 = vmatprep.subr.mxu0 0.0
      %669 = vmatpush1.msra.mxu0 0.0
      %670 = vmatprep.subr.mxu0 0.0
      %671 = vmatpush1.msra.mxu0 0.0
      %672 = vmatprep.subr.mxu0 0.0
      %673 = vmatpush1.msra.mxu0 0.0
      %674 = vmatprep.subr.mxu0 0.0
      %675 = vmatpush1.msra.mxu0 0.0
      %676 = vmatprep.subr.mxu0 0.0
      %677 = vmatpush1.msra.mxu0 0.0
      %678 = vmatprep.subr.mxu0 0.0
      %679 = vmatpush1.msra.mxu0 0.0
      %680 = vmatprep.subr.mxu0 0.0
      %681 = vmatpush1.msra.mxu0 0.0
      %682 = vmatprep.subr.mxu0 0.0
      %683 = vmatpush1.msra.mxu0 0.0
      %684 = vmatprep.subr.mxu0 0.0
      %685 = vmatpush1.msra.mxu0 0.0
      %686 = vmatprep.subr.mxu0 0.0
      %687 = vmatpush1.msra.mxu0 0.0
      %688 = vmatprep.subr.mxu0 0.0
      %689 = vmatpush1.msra.mxu0 0.0
      %690 = vmatprep.subr.mxu0 0.0
      %691 = vmatpush1.msra.mxu0 0.0
      %692 = vmatprep.subr.mxu0 0.0
      %693 = vmatpush1.msra.mxu0 0.0
      %694 = vmatprep.mubr.f32.mxu0 0.0
      %695 = vmatmul.mubr.f32.gmra.mrb[0].mxu0 %v480
      %v696 = vpop.f32.mrb[0].mxu0
      %v697 = vadd.f32 0.0, %v696
      %v698 = vpop.f32.mrb[0].mxu0
      %v699 = vadd.f32 0.0, %v698
      %700 = vmatprep.mubr.f32.mxu0 0.0
      %701 = vmatmul.mubr.f32.gmra.mrb[0].mxu0 %v483
      %v702 = vpop.f32.mrb[0].mxu0
      %v703 = vadd.f32 0.0, %v702
      %v704 = vpop.f32.mrb[0].mxu0
      %v705 = vadd.f32 0.0, %v704
      %706 = vmatprep.mubr.f32.mxu0 0.0
      %707 = vmatmul.mubr.f32.gmra.mrb[0].mxu0 %v486
      %v708 = vpop.f32.mrb[0].mxu0
      %v709 = vadd.f32 0.0, %v708
      %v710 = vpop.f32.mrb[0].mxu0
      %v711 = vadd.f32 0.0, %v710
      %712 = vmatprep.mubr.f32.mxu0 0.0
      %713 = vmatmul.mubr.f32.gmra.mrb[0].mxu0 %v489
      %v714 = vpop.f32.mrb[0].mxu0
      %v715 = vadd.f32 0.0, %v714
      %v716 = vpop.f32.mrb[0].mxu0
      %v717 = vadd.f32 0.0, %v716
      %718 = vmatprep.mubr.f32.mxu0 0.0
      %719 = vmatmul.mubr.f32.gmra.mrb[0].mxu0 %v492
      %v720 = vpop.f32.mrb[0].mxu0
      %v721 = vadd.f32 0.0, %v720
      %v722 = vpop.f32.mrb[0].mxu0
      %v723 = vadd.f32 0.0, %v722
      %724 = vmatprep.mubr.f32.mxu0 0.0
      %725 = vmatmul.mubr.f32.gmra.mrb[0].mxu0 %v495
      %v726 = vpop.f32.mrb[0].mxu0
      %v727 = vadd.f32 0.0, %v726
      %v728 = vpop.f32.mrb[0].mxu0
      %v729 = vadd.f32 0.0, %v728
      %730 = vmatprep.mubr.f32.mxu0 0.0
      %731 = vmatmul.mubr.f32.gmra.mrb[0].mxu0 %v498
      %v732 = vpop.f32.mrb[0].mxu0
      %v733 = vadd.f32 0.0, %v732
      %v734 = vpop.f32.mrb[0].mxu0
      %v735 = vadd.f32 0.0, %v734
      %736 = vmatprep.mubr.f32.mxu0 0.0
      %737 = vmatmul.mubr.f32.gmra.mrb[0].mxu0 %v501
      %v738 = vpop.f32.mrb[0].mxu0
      %v739 = vadd.f32 0.0, %v738
      %v740 = vpop.f32.mrb[0].mxu0
      %v741 = vadd.f32 0.0, %v740
      %742 = vmatprep.mubr.f32.mxu0 0.0
      %743 = vmatmul.mubr.f32.gmra.mrb[0].mxu0 %v504
      %v744 = vpop.f32.mrb[0].mxu0
      %v745 = vadd.f32 0.0, %v744
      %v746 = vpop.f32.mrb[0].mxu0
      %v747 = vadd.f32 0.0, %v746
      %748 = vmatprep.mubr.f32.mxu0 0.0
      %749 = vmatmul.mubr.f32.gmra.mrb[0].mxu0 %v507
      %v750 = vpop.f32.mrb[0].mxu0
      %v751 = vadd.f32 0.0, %v750
      %v752 = vpop.f32.mrb[0].mxu0
      %v753 = vadd.f32 0.0, %v752
      %754 = vmatprep.mubr.f32.mxu0 0.0
      %755 = vmatmul.mubr.f32.gmra.mrb[0].mxu0 %v510
      %v756 = vpop.f32.mrb[0].mxu0
      %v757 = vadd.f32 0.0, %v756
      %v758 = vpop.f32.mrb[0].mxu0
      %v759 = vadd.f32 0.0, %v758
      %760 = vmatprep.mubr.f32.mxu0 0.0
      %761 = vmatmul.mubr.f32.gmra.mrb[0].mxu0 %v513
      %v762 = vpop.f32.mrb[0].mxu0
      %v763 = vadd.f32 0.0, %v762
      %v764 = vpop.f32.mrb[0].mxu0
      %v765 = vadd.f32 0.0, %v764
      %766 = vmatprep.mubr.f32.mxu0 0.0
      %767 = vmatmul.mubr.f32.gmra.mrb[0].mxu0 %v516
      %v768 = vpop.f32.mrb[0].mxu0
      %v769 = vadd.f32 0.0, %v768
      %v770 = vpop.f32.mrb[0].mxu0
      %v771 = vadd.f32 0.0, %v770
      %772 = vmatprep.mubr.f32.mxu0 0.0
      %773 = vmatmul.mubr.f32.gmra.mrb[0].mxu0 %v519
      %v774 = vpop.f32.mrb[0].mxu0
      %v775 = vadd.f32 0.0, %v774
      %v776 = vpop.f32.mrb[0].mxu0
      %v777 = vadd.f32 0.0, %v776
      %778 = vmatprep.mubr.f32.mxu0 0.0
      %779 = vmatmul.mubr.f32.gmra.mrb[0].mxu0 %v522
      %v780 = vpop.f32.mrb[0].mxu0
      %v781 = vadd.f32 0.0, %v780
      %v782 = vpop.f32.mrb[0].mxu0
      %v783 = vadd.f32 0.0, %v782
      %784 = vmatprep.mubr.f32.mxu0 0.0
      %785 = vmatmul.mubr.f32.gmra.mrb[0].mxu0 %v525
      %v786 = vpop.f32.mrb[0].mxu0
      %v787 = vadd.f32 0.0, %v786
      %v788 = vpop.f32.mrb[0].mxu0
      %v789 = vadd.f32 0.0, %v788
      %790 = vmatprep.mubr.f32.mxu0 0.0
      %791 = vmatmul.mubr.f32.gmra.mrb[0].mxu0 %v528
      %v792 = vpop.f32.mrb[0].mxu0
      %v793 = vadd.f32 0.0, %v792
      %v794 = vpop.f32.mrb[0].mxu0
      %v795 = vadd.f32 0.0, %v794
      %796 = vmatprep.mubr.f32.mxu0 0.0
      %797 = vmatmul.mubr.f32.gmra.mrb[0].mxu0 %v531
      %v798 = vpop.f32.mrb[0].mxu0
      %v799 = vadd.f32 0.0, %v798
      %v800 = vpop.f32.mrb[0].mxu0
      %v801 = vadd.f32 0.0, %v800
      %802 = vmatprep.mubr.f32.mxu0 0.0
      %803 = vmatmul.mubr.f32.gmra.mrb[0].mxu0 %v534
      %v804 = vpop.f32.mrb[0].mxu0
      %v805 = vadd.f32 0.0, %v804
      %v806 = vpop.f32.mrb[0].mxu0
      %v807 = vadd.f32 0.0, %v806
      %808 = vmatprep.mubr.f32.mxu0 0.0
      %809 = vmatmul.mubr.f32.gmra.mrb[0].mxu0 %v537
      %v810 = vpop.f32.mrb[0].mxu0
      %v811 = vadd.f32 0.0, %v810
      %v812 = vpop.f32.mrb[0].mxu0
      %v813 = vadd.f32 0.0, %v812
      %814 = vmatprep.mubr.f32.mxu0 0.0
      %815 = vmatmul.mubr.f32.gmra.mrb[0].mxu0 %v540
      %v816 = vpop.f32.mrb[0].mxu0
      %v817 = vadd.f32 0.0, %v816
      %v818 = vpop.f32.mrb[0].mxu0
      %v819 = vadd.f32 0.0, %v818
      %820 = vmatprep.mubr.f32.mxu0 0.0
      %821 = vmatmul.mubr.f32.gmra.mrb[0].mxu0 %v543
      %v822 = vpop.f32.mrb[0].mxu0
      %v823 = vadd.f32 0.0, %v822
      %v824 = vpop.f32.mrb[0].mxu0
      %v825 = vadd.f32 0.0, %v824
      %826 = vmatprep.mubr.f32.mxu0 0.0
      %827 = vmatmul.mubr.f32.gmra.mrb[0].mxu0 %v546
      %v828 = vpop.f32.mrb[0].mxu0
      %v829 = vadd.f32 0.0, %v828
      %v830 = vpop.f32.mrb[0].mxu0
      %v831 = vadd.f32 0.0, %v830
      %832 = vmatprep.mubr.f32.mxu0 0.0
      %833 = vmatmul.mubr.f32.gmra.mrb[0].mxu0 %v549
      %v834 = vpop.f32.mrb[0].mxu0
      %v835 = vadd.f32 0.0, %v834
      %v836 = vpop.f32.mrb[0].mxu0
      %v837 = vadd.f32 0.0, %v836
      %838 = vmatprep.mubr.f32.mxu0 0.0
      %839 = vmatmul.mubr.f32.gmra.mrb[0].mxu0 %v552
      %v840 = vpop.f32.mrb[0].mxu0
      %v841 = vadd.f32 0.0, %v840
      %v842 = vpop.f32.mrb[0].mxu0
      %v843 = vadd.f32 0.0, %v842
      %844 = vmatprep.mubr.f32.mxu0 0.0
      %845 = vmatmul.mubr.f32.gmra.mrb[0].mxu0 %v555
      %v846 = vpop.f32.mrb[0].mxu0
      %v847 = vadd.f32 0.0, %v846
      %v848 = vpop.f32.mrb[0].mxu0
      %v849 = vadd.f32 0.0, %v848
      %850 = vmatprep.mubr.f32.mxu0 0.0
      %851 = vmatmul.mubr.f32.gmra.mrb[0].mxu0 %v558
      %v852 = vpop.f32.mrb[0].mxu0
      %v853 = vadd.f32 0.0, %v852
      %v854 = vpop.f32.mrb[0].mxu0
      %v855 = vadd.f32 0.0, %v854
      %856 = vmatprep.mubr.f32.mxu0 0.0
      %857 = vmatmul.mubr.f32.gmra.mrb[0].mxu0 %v561
      %v858 = vpop.f32.mrb[0].mxu0
      %v859 = vadd.f32 0.0, %v858
      %v860 = vpop.f32.mrb[0].mxu0
      %v861 = vadd.f32 0.0, %v860
      %862 = vmatprep.mubr.f32.mxu0 0.0
      %863 = vmatmul.mubr.f32.gmra.mrb[0].mxu0 %v564
      %v864 = vpop.f32.mrb[0].mxu0
      %v865 = vadd.f32 0.0, %v864
      %v866 = vpop.f32.mrb[0].mxu0
      %v867 = vadd.f32 0.0, %v866
      %868 = vmatprep.mubr.f32.mxu0 0.0
      %869 = vmatmul.mubr.f32.gmra.mrb[0].mxu0 %v567
      %v870 = vpop.f32.mrb[0].mxu0
      %v871 = vadd.f32 0.0, %v870
      %v872 = vpop.f32.mrb[0].mxu0
      %v873 = vadd.f32 0.0, %v872
      %874 = vmatprep.mubr.f32.mxu0 0.0
      %875 = vmatmul.mubr.f32.gmra.mrb[0].mxu0 %v570
      %v876 = vpop.f32.mrb[0].mxu0
      %v877 = vadd.f32 0.0, %v876
      %v878 = vpop.f32.mrb[0].mxu0
      %v879 = vadd.f32 0.0, %v878
      %880 = vmatprep.mubr.f32.mxu0 0.0
      %881 = vmatmul.mubr.f32.gmra.mrb[0].mxu0 %v573
      %v882 = vpop.f32.mrb[0].mxu0
      %v883 = vadd.f32 0.0, %v882
      %v884 = vpop.f32.mrb[0].mxu0
      %v885 = vadd.f32 0.0, %v884
      %886 = vmatprep.mubr.f32.mxu0 0.0
      %887 = vmatmul.mubr.f32.gmra.mrb[0].mxu0 %v576
      %v888 = vpop.f32.mrb[0].mxu0
      %v889 = vadd.f32 0.0, %v888
      %v890 = vpop.f32.mrb[0].mxu0
      %v891 = vadd.f32 0.0, %v890
      %892 = vmatprep.mubr.f32.mxu0 0.0
      %893 = vmatmul.mubr.f32.gmra.mrb[0].mxu0 %v579
      %v894 = vpop.f32.mrb[0].mxu0
      %v895 = vadd.f32 0.0, %v894
      %v896 = vpop.f32.mrb[0].mxu0
      %v897 = vadd.f32 0.0, %v896
      %898 = vmatprep.mubr.f32.mxu0 0.0
      %899 = vmatmul.mubr.f32.gmra.mrb[0].mxu0 %v582
      %v900 = vpop.f32.mrb[0].mxu0
      %v901 = vadd.f32 0.0, %v900
      %v902 = vpop.f32.mrb[0].mxu0
      %v903 = vadd.f32 0.0, %v902
      %904 = vmatprep.mubr.f32.mxu0 0.0
      %905 = vmatmul.mubr.f32.gmra.mrb[0].mxu0 %v585
      %v906 = vpop.f32.mrb[0].mxu0
      %v907 = vadd.f32 0.0, %v906
      %v908 = vpop.f32.mrb[0].mxu0
      %v909 = vadd.f32 0.0, %v908
      %910 = vmatprep.mubr.f32.mxu0 0.0
      %911 = vmatmul.mubr.f32.gmra.mrb[0].mxu0 %v588
      %v912 = vpop.f32.mrb[0].mxu0
      %v913 = vadd.f32 0.0, %v912
      %v914 = vpop.f32.mrb[0].mxu0
      %v915 = vadd.f32 0.0, %v914
      %916 = vmatprep.mubr.f32.mxu0 0.0
      %917 = vmatmul.mubr.f32.gmra.mrb[0].mxu0 %v591
      %v918 = vpop.f32.mrb[0].mxu0
      %v919 = vadd.f32 0.0, %v918
      %v920 = vpop.f32.mrb[0].mxu0
      %v921 = vadd.f32 0.0, %v920
      %922 = vmatprep.mubr.f32.mxu0 0.0
      %923 = vmatmul.mubr.f32.gmra.mrb[0].mxu0 %v594
      %v924 = vpop.f32.mrb[0].mxu0
      %v925 = vadd.f32 0.0, %v924
      %v926 = vpop.f32.mrb[0].mxu0
      %v927 = vadd.f32 0.0, %v926
      %928 = vmatprep.mubr.f32.mxu0 0.0
      %929 = vmatmul.mubr.f32.gmra.mrb[0].mxu0 %v597
      %v930 = vpop.f32.mrb[0].mxu0
      %v931 = vadd.f32 0.0, %v930
      %v932 = vpop.f32.mrb[0].mxu0
      %v933 = vadd.f32 0.0, %v932
      %934 = vmatprep.mubr.f32.mxu0 0.0
      %935 = vmatmul.mubr.f32.gmra.mrb[0].mxu0 %v600
      %v936 = vpop.f32.mrb[0].mxu0
      %v937 = vadd.f32 0.0, %v936
      %v938 = vpop.f32.mrb[0].mxu0
      %v939 = vadd.f32 0.0, %v938
      %940 = vmatprep.mubr.f32.mxu0 0.0
      %941 = vmatmul.mubr.f32.gmra.mrb[0].mxu0 %v603
      %v942 = vpop.f32.mrb[0].mxu0
      %v943 = vadd.f32 0.0, %v942
      %v944 = vpop.f32.mrb[0].mxu0
      %v945 = vadd.f32 0.0, %v944
      %946 = vmatprep.mubr.f32.mxu0 0.0
      %947 = vmatmul.mubr.f32.gmra.mrb[0].mxu0 %v606
      %v948 = vpop.f32.mrb[0].mxu0
      %v949 = vadd.f32 0.0, %v948
      %v950 = vpop.f32.mrb[0].mxu0
      %v951 = vadd.f32 0.0, %v950
      %952 = vmatprep.mubr.f32.mxu0 0.0
      %953 = vmatmul.mubr.f32.gmra.mrb[0].mxu0 %v609
      %v954 = vpop.f32.mrb[0].mxu0
      %v955 = vadd.f32 0.0, %v954
      %v956 = vpop.f32.mrb[0].mxu0
      %v957 = vadd.f32 0.0, %v956
      %958 = vmatprep.mubr.f32.mxu0 0.0
      %959 = vmatmul.mubr.f32.gmra.mrb[0].mxu0 %v612
      %v960 = vpop.f32.mrb[0].mxu0
      %v961 = vadd.f32 0.0, %v960
      %v962 = vpop.f32.mrb[0].mxu0
      %v963 = vadd.f32 0.0, %v962
      %964 = vmatprep.mubr.f32.mxu0 0.0
      %965 = vmatmul.mubr.f32.gmra.mrb[0].mxu0 %v615
      %v966 = vpop.f32.mrb[0].mxu0
      %v967 = vadd.f32 0.0, %v966
      %v968 = vpop.f32.mrb[0].mxu0
      %v969 = vadd.f32 0.0, %v968
      %970 = vmatprep.mubr.f32.mxu0 0.0
      %971 = vmatmul.mubr.f32.gmra.mrb[0].mxu0 %v618
      %v972 = vpop.f32.mrb[0].mxu0
      %v973 = vadd.f32 0.0, %v972
      %v974 = vpop.f32.mrb[0].mxu0
      %v975 = vadd.f32 0.0, %v974
      %976 = vmatprep.mubr.f32.mxu0 0.0
      %977 = vmatmul.mubr.f32.gmra.mrb[0].mxu0 %v621
      %v978 = vpop.f32.mrb[0].mxu0
      %v979 = vadd.f32 0.0, %v978
      %v980 = vpop.f32.mrb[0].mxu0
      %v981 = vadd.f32 0.0, %v980
      %982 = vdwg.mxu0
      %v983 = vmax.f32 %v697, 0.0
      %v984 = vmax.f32 %v699, 0.0
      %v985 = vmax.f32 %v703, 0.0
      %v986 = vmax.f32 %v705, 0.0
      %v987 = vmax.f32 %v709, 0.0
      %v988 = vmax.f32 %v711, 0.0
      %v989 = vmax.f32 %v715, 0.0
      %v990 = vmax.f32 %v717, 0.0
      %v991 = vmax.f32 %v721, 0.0
      %v992 = vmax.f32 %v723, 0.0
      %v993 = vmax.f32 %v727, 0.0
      %v994 = vmax.f32 %v729, 0.0
      %v995 = vmax.f32 %v733, 0.0
      %v996 = vmax.f32 %v735, 0.0
      %v997 = vmax.f32 %v739, 0.0
      %v998 = vmax.f32 %v741, 0.0
      %v999 = vmax.f32 %v745, 0.0
      %v1000 = vmax.f32 %v747, 0.0
      %v1001 = vmax.f32 %v751, 0.0
      %v1002 = vmax.f32 %v753, 0.0
      %v1003 = vmax.f32 %v757, 0.0
      %v1004 = vmax.f32 %v759, 0.0
      %v1005 = vmax.f32 %v763, 0.0
      %v1006 = vmax.f32 %v765, 0.0
      %v1007 = vmax.f32 %v769, 0.0
      %v1008 = vmax.f32 %v771, 0.0
      %v1009 = vmax.f32 %v775, 0.0
      %v1010 = vmax.f32 %v777, 0.0
      %v1011 = vmax.f32 %v781, 0.0
      %v1012 = vmax.f32 %v783, 0.0
      %v1013 = vmax.f32 %v787, 0.0
      %v1014 = vmax.f32 %v789, 0.0
      %v1015 = vmax.f32 %v793, 0.0
      %v1016 = vmax.f32 %v795, 0.0
      %v1017 = vmax.f32 %v799, 0.0
      %v1018 = vmax.f32 %v801, 0.0
      %v1019 = vmax.f32 %v805, 0.0
      %v1020 = vmax.f32 %v807, 0.0
      %v1021 = vmax.f32 %v811, 0.0
      %v1022 = vmax.f32 %v813, 0.0
      %v1023 = vmax.f32 %v817, 0.0
      %v1024 = vmax.f32 %v819, 0.0
      %v1025 = vmax.f32 %v823, 0.0
      %v1026 = vmax.f32 %v825, 0.0
      %v1027 = vmax.f32 %v829, 0.0
      %v1028 = vmax.f32 %v831, 0.0
      %v1029 = vmax.f32 %v835, 0.0
      %v1030 = vmax.f32 %v837, 0.0
      %v1031 = vmax.f32 %v841, 0.0
      %v1032 = vmax.f32 %v843, 0.0
      %v1033 = vmax.f32 %v847, 0.0
      %v1034 = vmax.f32 %v849, 0.0
      %v1035 = vmax.f32 %v853, 0.0
      %v1036 = vmax.f32 %v855, 0.0
      %v1037 = vmax.f32 %v859, 0.0
      %v1038 = vmax.f32 %v861, 0.0
      %v1039 = vmax.f32 %v865, 0.0
      %v1040 = vmax.f32 %v867, 0.0
      %v1041 = vmax.f32 %v871, 0.0
      %v1042 = vmax.f32 %v873, 0.0
      %v1043 = vmax.f32 %v877, 0.0
      %v1044 = vmax.f32 %v879, 0.0
      %v1045 = vmax.f32 %v883, 0.0
      %v1046 = vmax.f32 %v885, 0.0
      %v1047 = vmax.f32 %v889, 0.0
      %v1048 = vmax.f32 %v891, 0.0
      %v1049 = vmax.f32 %v895, 0.0
      %v1050 = vmax.f32 %v897, 0.0
      %v1051 = vmax.f32 %v901, 0.0
      %v1052 = vmax.f32 %v903, 0.0
      %v1053 = vmax.f32 %v907, 0.0
      %v1054 = vmax.f32 %v909, 0.0
      %v1055 = vmax.f32 %v913, 0.0
      %v1056 = vmax.f32 %v915, 0.0
      %v1057 = vmax.f32 %v919, 0.0
      %v1058 = vmax.f32 %v921, 0.0
      %v1059 = vmax.f32 %v925, 0.0
      %v1060 = vmax.f32 %v927, 0.0
      %v1061 = vmax.f32 %v931, 0.0
      %v1062 = vmax.f32 %v933, 0.0
      %v1063 = vmax.f32 %v937, 0.0
      %v1064 = vmax.f32 %v939, 0.0
      %v1065 = vmax.f32 %v943, 0.0
      %v1066 = vmax.f32 %v945, 0.0
      %v1067 = vmax.f32 %v949, 0.0
      %v1068 = vmax.f32 %v951, 0.0
      %v1069 = vmax.f32 %v955, 0.0
      %v1070 = vmax.f32 %v957, 0.0
      %v1071 = vmax.f32 %v961, 0.0
      %v1072 = vmax.f32 %v963, 0.0
      %v1073 = vmax.f32 %v967, 0.0
      %v1074 = vmax.f32 %v969, 0.0
      %v1075 = vmax.f32 %v973, 0.0
      %v1076 = vmax.f32 %v975, 0.0
      %v1077 = vmax.f32 %v979, 0.0
      %v1078 = vmax.f32 %v981, 0.0
      %v1079 = vld [vmem:[%s4] sm:$0xff]
      %v1080 = vld [vmem:[%s4 + $0x8] sm:$0xff]
      %v1081 = vld [vmem:[%s4 + $0x10] sm:$0xff]
      %v1082 = vld [vmem:[%s4 + $0x18] sm:$0xff]
      %v1083 = vld [vmem:[%s4 + $0x20] sm:$0xff]
      %v1084 = vld [vmem:[%s4 + $0x28] sm:$0xff]
      %v1085 = vld [vmem:[%s4 + $0x30] sm:$0xff]
      %v1086 = vld [vmem:[%s4 + $0x38] sm:$0xff]
      %v1087 = vld [vmem:[%s4 + $0x40] sm:$0xff]
      %1088 = vmatprep.subr.mxu0 %v984
      %1089 = vmatpush1.msra.mxu0 %v983
      %1090 = vmatprep.subr.mxu0 %v986
      %1091 = vmatpush1.msra.mxu0 %v985
      %1092 = vmatprep.subr.mxu0 %v988
      %1093 = vmatpush1.msra.mxu0 %v987
      %1094 = vmatprep.subr.mxu0 %v990
      %1095 = vmatpush1.msra.mxu0 %v989
      %1096 = vmatprep.subr.mxu0 %v992
      %1097 = vmatpush1.msra.mxu0 %v991
      %1098 = vmatprep.subr.mxu0 %v994
      %1099 = vmatpush1.msra.mxu0 %v993
      %1100 = vmatprep.subr.mxu0 %v996
      %1101 = vmatpush1.msra.mxu0 %v995
      %1102 = vmatprep.subr.mxu0 %v998
      %1103 = vmatpush1.msra.mxu0 %v997
      %1104 = vmatprep.subr.mxu0 %v1000
      %1105 = vmatpush1.msra.mxu0 %v999
      %1106 = vmatprep.subr.mxu0 %v1002
      %1107 = vmatpush1.msra.mxu0 %v1001
      %1108 = vmatprep.subr.mxu0 %v1004
      %1109 = vmatpush1.msra.mxu0 %v1003
      %1110 = vmatprep.subr.mxu0 %v1006
      %1111 = vmatpush1.msra.mxu0 %v1005
      %1112 = vmatprep.subr.mxu0 %v1008
      %1113 = vmatpush1.msra.mxu0 %v1007
      %1114 = vmatprep.subr.mxu0 %v1010
      %1115 = vmatpush1.msra.mxu0 %v1009
      %1116 = vmatprep.subr.mxu0 %v1012
      %1117 = vmatpush1.msra.mxu0 %v1011
      %1118 = vmatprep.subr.mxu0 %v1014
      %1119 = vmatpush1.msra.mxu0 %v1013
      %1120 = vmatprep.subr.mxu0 %v1016
      %1121 = vmatpush1.msra.mxu0 %v1015
      %1122 = vmatprep.subr.mxu0 %v1018
      %1123 = vmatpush1.msra.mxu0 %v1017
      %1124 = vmatprep.subr.mxu0 %v1020
      %1125 = vmatpush1.msra.mxu0 %v1019
      %1126 = vmatprep.subr.mxu0 %v1022
      %1127 = vmatpush1.msra.mxu0 %v1021
      %1128 = vmatprep.subr.mxu0 %v1024
      %1129 = vmatpush1.msra.mxu0 %v1023
      %1130 = vmatprep.subr.mxu0 %v1026
      %1131 = vmatpush1.msra.mxu0 %v1025
      %1132 = vmatprep.subr.mxu0 %v1028
      %1133 = vmatpush1.msra.mxu0 %v1027
      %1134 = vmatprep.subr.mxu0 %v1030
      %1135 = vmatpush1.msra.mxu0 %v1029
      %1136 = vmatprep.subr.mxu0 %v1032
      %1137 = vmatpush1.msra.mxu0 %v1031
      %1138 = vmatprep.subr.mxu0 %v1034
      %1139 = vmatpush1.msra.mxu0 %v1033
      %1140 = vmatprep.subr.mxu0 %v1036
      %1141 = vmatpush1.msra.mxu0 %v1035
      %1142 = vmatprep.subr.mxu0 %v1038
      %1143 = vmatpush1.msra.mxu0 %v1037
      %1144 = vmatprep.subr.mxu0 %v1040
      %1145 = vmatpush1.msra.mxu0 %v1039
      %1146 = vmatprep.subr.mxu0 %v1042
      %1147 = vmatpush1.msra.mxu0 %v1041
      %1148 = vmatprep.subr.mxu0 %v1044
      %1149 = vmatpush1.msra.mxu0 %v1043
      %1150 = vmatprep.subr.mxu0 %v1046
      %1151 = vmatpush1.msra.mxu0 %v1045
      %1152 = vmatprep.mubr.f32.mxu0 %v1080
      %1153 = vmatmul.mubr.f32.gmra.mrb[0].mxu0 %v1079
      %v1154 = vpop.f32.mrb[0].mxu0
      %v1155 = vadd.f32 0.0, %v1154
      %v1156 = vpop.f32.mrb[0].mxu0
      %v1157 = vadd.f32 0.0, %v1156
      %1158 = vmatprep.mubr.f32.mxu0 %v1083
      %1159 = vmatmul.mubr.f32.gmra.mrb[0].mxu0 %v1082
      %v1160 = vpop.f32.mrb[0].mxu0
      %v1161 = vadd.f32 0.0, %v1160
      %v1162 = vpop.f32.mrb[0].mxu0
      %v1163 = vadd.f32 0.0, %v1162
      %1164 = vmatprep.mubr.f32.mxu0 %v1086
      %1165 = vmatmul.mubr.f32.gmra.mrb[0].mxu0 %v1085
      %v1166 = vpop.f32.mrb[0].mxu0
      %v1167 = vadd.f32 0.0, %v1166
      %v1168 = vpop.f32.mrb[0].mxu0
      %v1169 = vadd.f32 0.0, %v1168
      %1170 = vdwg.mxu0
      %1171 = vmatprep.subr.mxu0 %v1048
      %1172 = vmatpush1.msra.mxu0 %v1047
      %1173 = vmatprep.subr.mxu0 %v1050
      %1174 = vmatpush1.msra.mxu0 %v1049
      %1175 = vmatprep.subr.mxu0 %v1052
      %1176 = vmatpush1.msra.mxu0 %v1051
      %1177 = vmatprep.subr.mxu0 %v1054
      %1178 = vmatpush1.msra.mxu0 %v1053
      %1179 = vmatprep.subr.mxu0 %v1056
      %1180 = vmatpush1.msra.mxu0 %v1055
      %1181 = vmatprep.subr.mxu0 %v1058
      %1182 = vmatpush1.msra.mxu0 %v1057
      %1183 = vmatprep.subr.mxu0 %v1060
      %1184 = vmatpush1.msra.mxu0 %v1059
      %1185 = vmatprep.subr.mxu0 %v1062
      %1186 = vmatpush1.msra.mxu0 %v1061
      %1187 = vmatprep.subr.mxu0 %v1064
      %1188 = vmatpush1.msra.mxu0 %v1063
      %1189 = vmatprep.subr.mxu0 %v1066
      %1190 = vmatpush1.msra.mxu0 %v1065
      %1191 = vmatprep.subr.mxu0 %v1068
      %1192 = vmatpush1.msra.mxu0 %v1067
      %1193 = vmatprep.subr.mxu0 %v1070
      %1194 = vmatpush1.msra.mxu0 %v1069
      %1195 = vmatprep.subr.mxu0 %v1072
      %1196 = vmatpush1.msra.mxu0 %v1071
      %1197 = vmatprep.subr.mxu0 %v1074
      %1198 = vmatpush1.msra.mxu0 %v1073
      %1199 = vmatprep.subr.mxu0 %v1076
      %1200 = vmatpush1.msra.mxu0 %v1075
      %1201 = vmatprep.subr.mxu0 %v1078
      %1202 = vmatpush1.msra.mxu0 %v1077
      %1203 = vmatprep.subr.mxu0 0.0
      %1204 = vmatpush1.msra.mxu0 0.0
      %1205 = vmatprep.subr.mxu0 0.0
      %1206 = vmatpush1.msra.mxu0 0.0
      %1207 = vmatprep.subr.mxu0 0.0
      %1208 = vmatpush1.msra.mxu0 0.0
      %1209 = vmatprep.subr.mxu0 0.0
      %1210 = vmatpush1.msra.mxu0 0.0
      %1211 = vmatprep.subr.mxu0 0.0
      %1212 = vmatpush1.msra.mxu0 0.0
      %1213 = vmatprep.subr.mxu0 0.0
      %1214 = vmatpush1.msra.mxu0 0.0
      %1215 = vmatprep.subr.mxu0 0.0
      %1216 = vmatpush1.msra.mxu0 0.0
      %1217 = vmatprep.subr.mxu0 0.0
      %1218 = vmatpush1.msra.mxu0 0.0
      %1219 = vmatprep.subr.mxu0 0.0
      %1220 = vmatpush1.msra.mxu0 0.0
      %1221 = vmatprep.subr.mxu0 0.0
      %1222 = vmatpush1.msra.mxu0 0.0
      %1223 = vmatprep.subr.mxu0 0.0
      %1224 = vmatpush1.msra.mxu0 0.0
      %1225 = vmatprep.subr.mxu0 0.0
      %1226 = vmatpush1.msra.mxu0 0.0
      %1227 = vmatprep.subr.mxu0 0.0
      %1228 = vmatpush1.msra.mxu0 0.0
      %1229 = vmatprep.subr.mxu0 0.0
      %1230 = vmatpush1.msra.mxu0 0.0
      %1231 = vmatprep.subr.mxu0 0.0
      %1232 = vmatpush1.msra.mxu0 0.0
      %1233 = vmatprep.subr.mxu0 0.0
      %1234 = vmatpush1.msra.mxu0 0.0
      %1235 = vmatprep.mubr.f32.mxu0 0.0
      %1236 = vmatmul.mubr.f32.gmra.mrb[0].mxu0 %v1081
      %v1237 = vpop.f32.mrb[0].mxu0
      %v1238 = vadd.f32 %v1155, %v1237
      %v1239 = vpop.f32.mrb[0].mxu0
      %v1240 = vadd.f32 %v1157, %v1239
      %1241 = vmatprep.mubr.f32.mxu0 0.0
      %1242 = vmatmul.mubr.f32.gmra.mrb[0].mxu0 %v1084
      %v1243 = vpop.f32.mrb[0].mxu0
      %v1244 = vadd.f32 %v1161, %v1243
      %v1245 = vpop.f32.mrb[0].mxu0
      %v1246 = vadd.f32 %v1163, %v1245
      %1247 = vmatprep.mubr.f32.mxu0 0.0
      %1248 = vmatmul.mubr.f32.gmra.mrb[0].mxu0 %v1087
      %v1249 = vpop.f32.mrb[0].mxu0
      %v1250 = vadd.f32 %v1167, %v1249
      %v1251 = vpop.f32.mrb[0].mxu0
      %v1252 = vadd.f32 %v1169, %v1251
      %1253 = vdwg.mxu0
      %1254 = vrot.lane.b32.xlu0 %v1238, 17
      %v1255 = vpop.permute.xlu0 %1254
      %1256 = vrot.lane.b32.xlu0 %v1244, 17
      %v1257 = vpop.permute.xlu0 %1256
      %1258 = vrot.lane.b32.xlu0 %v1250, 17
      %v1259 = vpop.permute.xlu0 %1258
      %1260 = vrot.lane.b32.xlu0 %v1240, 17
      %v1261 = vpop.permute.xlu0 %1260
      %1262 = vrot.lane.b32.xlu0 %v1246, 17
      %v1263 = vpop.permute.xlu0 %1262
      %1264 = vrot.lane.b32.xlu0 %v1252, 17
      %v1265 = vpop.permute.xlu0 %1264
      %v1266 = vlaneseq
      %v1267 = vand.u32 %v1266, 127
      %vm1268 = vcmp.lt.s32.totalorder %v1267, 17
      %v1269 = vsel %vm1268, %v1255, %v1261
      %v1270 = vsel %vm1268, %v1257, %v1263
      %v1271 = vsel %vm1268, %v1259, %v1265
      %v1272 = vsel %vm1268, %v1261, %v1255
      %v1273 = vsel %vm1268, %v1263, %v1257
      %v1274 = vsel %vm1268, %v1265, %v1259
      %v1276 = vlaneseq
      %v1277 = vshrl.u32 %v1276, 7
      %v1278 = vsub.s32 0, %v1277
      %v1279 = vrot.slane %v407, %v1278
      %v1280 = vlaneseq
      %v1281 = vshrl.u32 %v1280, 7
      %v1282 = vsub.s32 1, %v1281
      %v1283 = vrot.slane %v407, %v1282
      %v1286 = vmul.f32 %v1272, %v1279
      %v1287 = vmul.f32 %v1269, %v1283
      %v1288 = vmul.f32 %v1273, %v1279
      %v1289 = vmul.f32 %v1270, %v1283
      %v1290 = vmul.f32 %v1274, %v1279
      %v1291 = vmul.f32 %v1271, %v1283
      %s1292 = scalar_lea.vmem %s4, 72
      %v1293 = vld [vmem:[%s1292] sm:$0xff]
      %v1294 = vld [vmem:[%s1292 + $0x8] sm:$0xff]
      %v1295 = vld [vmem:[%s1292 + $0x10] sm:$0xff]
      %v1296 = vld [vmem:[%s1292 + $0x18] sm:$0xff]
      %v1297 = vld [vmem:[%s1292 + $0x20] sm:$0xff]
      %v1298 = vld [vmem:[%s1292 + $0x28] sm:$0xff]
      %v1299 = vld [vmem:[%s1292 + $0x30] sm:$0xff]
      %v1300 = vld [vmem:[%s1292 + $0x38] sm:$0xff]
      %v1301 = vld [vmem:[%s1292 + $0x40] sm:$0xff]
      %1302 = vmatprep.subr.mxu0 %v984
      %1303 = vmatpush1.msra.mxu0 %v983
      %1304 = vmatprep.subr.mxu0 %v986
      %1305 = vmatpush1.msra.mxu0 %v985
      %1306 = vmatprep.subr.mxu0 %v988
      %1307 = vmatpush1.msra.mxu0 %v987
      %1308 = vmatprep.subr.mxu0 %v990
      %1309 = vmatpush1.msra.mxu0 %v989
      %1310 = vmatprep.subr.mxu0 %v992
      %1311 = vmatpush1.msra.mxu0 %v991
      %1312 = vmatprep.subr.mxu0 %v994
      %1313 = vmatpush1.msra.mxu0 %v993
      %1314 = vmatprep.subr.mxu0 %v996
      %1315 = vmatpush1.msra.mxu0 %v995
      %1316 = vmatprep.subr.mxu0 %v998
      %1317 = vmatpush1.msra.mxu0 %v997
      %1318 = vmatprep.subr.mxu0 %v1000
      %1319 = vmatpush1.msra.mxu0 %v999
      %1320 = vmatprep.subr.mxu0 %v1002
      %1321 = vmatpush1.msra.mxu0 %v1001
      %1322 = vmatprep.subr.mxu0 %v1004
      %1323 = vmatpush1.msra.mxu0 %v1003
      %1324 = vmatprep.subr.mxu0 %v1006
      %1325 = vmatpush1.msra.mxu0 %v1005
      %1326 = vmatprep.subr.mxu0 %v1008
      %1327 = vmatpush1.msra.mxu0 %v1007
      %1328 = vmatprep.subr.mxu0 %v1010
      %1329 = vmatpush1.msra.mxu0 %v1009
      %1330 = vmatprep.subr.mxu0 %v1012
      %1331 = vmatpush1.msra.mxu0 %v1011
      %1332 = vmatprep.subr.mxu0 %v1014
      %1333 = vmatpush1.msra.mxu0 %v1013
      %1334 = vmatprep.subr.mxu0 %v1016
      %1335 = vmatpush1.msra.mxu0 %v1015
      %1336 = vmatprep.subr.mxu0 %v1018
      %1337 = vmatpush1.msra.mxu0 %v1017
      %1338 = vmatprep.subr.mxu0 %v1020
      %1339 = vmatpush1.msra.mxu0 %v1019
      %1340 = vmatprep.subr.mxu0 %v1022
      %1341 = vmatpush1.msra.mxu0 %v1021
      %1342 = vmatprep.subr.mxu0 %v1024
      %1343 = vmatpush1.msra.mxu0 %v1023
      %1344 = vmatprep.subr.mxu0 %v1026
      %1345 = vmatpush1.msra.mxu0 %v1025
      %1346 = vmatprep.subr.mxu0 %v1028
      %1347 = vmatpush1.msra.mxu0 %v1027
      %1348 = vmatprep.subr.mxu0 %v1030
      %1349 = vmatpush1.msra.mxu0 %v1029
      %1350 = vmatprep.subr.mxu0 %v1032
      %1351 = vmatpush1.msra.mxu0 %v1031
      %1352 = vmatprep.subr.mxu0 %v1034
      %1353 = vmatpush1.msra.mxu0 %v1033
      %1354 = vmatprep.subr.mxu0 %v1036
      %1355 = vmatpush1.msra.mxu0 %v1035
      %1356 = vmatprep.subr.mxu0 %v1038
      %1357 = vmatpush1.msra.mxu0 %v1037
      %1358 = vmatprep.subr.mxu0 %v1040
      %1359 = vmatpush1.msra.mxu0 %v1039
      %1360 = vmatprep.subr.mxu0 %v1042
      %1361 = vmatpush1.msra.mxu0 %v1041
      %1362 = vmatprep.subr.mxu0 %v1044
      %1363 = vmatpush1.msra.mxu0 %v1043
      %1364 = vmatprep.subr.mxu0 %v1046
      %1365 = vmatpush1.msra.mxu0 %v1045
      %1366 = vmatprep.mubr.f32.mxu0 %v1294
      %1367 = vmatmul.mubr.f32.gmra.mrb[0].mxu0 %v1293
      %v1368 = vpop.f32.mrb[0].mxu0
      %v1369 = vadd.f32 0.0, %v1368
      %v1370 = vpop.f32.mrb[0].mxu0
      %v1371 = vadd.f32 0.0, %v1370
      %1372 = vmatprep.mubr.f32.mxu0 %v1297
      %1373 = vmatmul.mubr.f32.gmra.mrb[0].mxu0 %v1296
      %v1374 = vpop.f32.mrb[0].mxu0
      %v1375 = vadd.f32 0.0, %v1374
      %v1376 = vpop.f32.mrb[0].mxu0
      %v1377 = vadd.f32 0.0, %v1376
      %1378 = vmatprep.mubr.f32.mxu0 %v1300
      %1379 = vmatmul.mubr.f32.gmra.mrb[0].mxu0 %v1299
      %v1380 = vpop.f32.mrb[0].mxu0
      %v1381 = vadd.f32 0.0, %v1380
      %v1382 = vpop.f32.mrb[0].mxu0
      %v1383 = vadd.f32 0.0, %v1382
      %1384 = vdwg.mxu0
      %1385 = vmatprep.subr.mxu0 %v1048
      %1386 = vmatpush1.msra.mxu0 %v1047
      %1387 = vmatprep.subr.mxu0 %v1050
      %1388 = vmatpush1.msra.mxu0 %v1049
      %1389 = vmatprep.subr.mxu0 %v1052
      %1390 = vmatpush1.msra.mxu0 %v1051
      %1391 = vmatprep.subr.mxu0 %v1054
      %1392 = vmatpush1.msra.mxu0 %v1053
      %1393 = vmatprep.subr.mxu0 %v1056
      %1394 = vmatpush1.msra.mxu0 %v1055
      %1395 = vmatprep.subr.mxu0 %v1058
      %1396 = vmatpush1.msra.mxu0 %v1057
      %1397 = vmatprep.subr.mxu0 %v1060
      %1398 = vmatpush1.msra.mxu0 %v1059
      %1399 = vmatprep.subr.mxu0 %v1062
      %1400 = vmatpush1.msra.mxu0 %v1061
      %1401 = vmatprep.subr.mxu0 %v1064
      %1402 = vmatpush1.msra.mxu0 %v1063
      %1403 = vmatprep.subr.mxu0 %v1066
      %1404 = vmatpush1.msra.mxu0 %v1065
      %1405 = vmatprep.subr.mxu0 %v1068
      %1406 = vmatpush1.msra.mxu0 %v1067
      %1407 = vmatprep.subr.mxu0 %v1070
      %1408 = vmatpush1.msra.mxu0 %v1069
      %1409 = vmatprep.subr.mxu0 %v1072
      %1410 = vmatpush1.msra.mxu0 %v1071
      %1411 = vmatprep.subr.mxu0 %v1074
      %1412 = vmatpush1.msra.mxu0 %v1073
      %1413 = vmatprep.subr.mxu0 %v1076
      %1414 = vmatpush1.msra.mxu0 %v1075
      %1415 = vmatprep.subr.mxu0 %v1078
      %1416 = vmatpush1.msra.mxu0 %v1077
      %1417 = vmatprep.subr.mxu0 0.0
      %1418 = vmatpush1.msra.mxu0 0.0
      %1419 = vmatprep.subr.mxu0 0.0
      %1420 = vmatpush1.msra.mxu0 0.0
      %1421 = vmatprep.subr.mxu0 0.0
      %1422 = vmatpush1.msra.mxu0 0.0
      %1423 = vmatprep.subr.mxu0 0.0
      %1424 = vmatpush1.msra.mxu0 0.0
      %1425 = vmatprep.subr.mxu0 0.0
      %1426 = vmatpush1.msra.mxu0 0.0
      %1427 = vmatprep.subr.mxu0 0.0
      %1428 = vmatpush1.msra.mxu0 0.0
      %1429 = vmatprep.subr.mxu0 0.0
      %1430 = vmatpush1.msra.mxu0 0.0
      %1431 = vmatprep.subr.mxu0 0.0
      %1432 = vmatpush1.msra.mxu0 0.0
      %1433 = vmatprep.subr.mxu0 0.0
      %1434 = vmatpush1.msra.mxu0 0.0
      %1435 = vmatprep.subr.mxu0 0.0
      %1436 = vmatpush1.msra.mxu0 0.0
      %1437 = vmatprep.subr.mxu0 0.0
      %1438 = vmatpush1.msra.mxu0 0.0
      %1439 = vmatprep.subr.mxu0 0.0
      %1440 = vmatpush1.msra.mxu0 0.0
      %1441 = vmatprep.subr.mxu0 0.0
      %1442 = vmatpush1.msra.mxu0 0.0
      %1443 = vmatprep.subr.mxu0 0.0
      %1444 = vmatpush1.msra.mxu0 0.0
      %1445 = vmatprep.subr.mxu0 0.0
      %1446 = vmatpush1.msra.mxu0 0.0
      %1447 = vmatprep.subr.mxu0 0.0
      %1448 = vmatpush1.msra.mxu0 0.0
      %1449 = vmatprep.mubr.f32.mxu0 0.0
      %1450 = vmatmul.mubr.f32.gmra.mrb[0].mxu0 %v1295
      %v1451 = vpop.f32.mrb[0].mxu0
      %v1452 = vadd.f32 %v1369, %v1451
      %v1453 = vpop.f32.mrb[0].mxu0
      %v1454 = vadd.f32 %v1371, %v1453
      %1455 = vmatprep.mubr.f32.mxu0 0.0
      %1456 = vmatmul.mubr.f32.gmra.mrb[0].mxu0 %v1298
      %v1457 = vpop.f32.mrb[0].mxu0
      %v1458 = vadd.f32 %v1375, %v1457
      %v1459 = vpop.f32.mrb[0].mxu0
      %v1460 = vadd.f32 %v1377, %v1459
      %1461 = vmatprep.mubr.f32.mxu0 0.0
      %1462 = vmatmul.mubr.f32.gmra.mrb[0].mxu0 %v1301
      %v1463 = vpop.f32.mrb[0].mxu0
      %v1464 = vadd.f32 %v1381, %v1463
      %v1465 = vpop.f32.mrb[0].mxu0
      %v1466 = vadd.f32 %v1383, %v1465
      %1467 = vdwg.mxu0
      %1468 = vrot.lane.b32.xlu0 %v1452, 16
      %v1469 = vpop.permute.xlu0 %1468
      %1470 = vrot.lane.b32.xlu0 %v1458, 16
      %v1471 = vpop.permute.xlu0 %1470
      %1472 = vrot.lane.b32.xlu0 %v1464, 16
      %v1473 = vpop.permute.xlu0 %1472
      %1474 = vrot.lane.b32.xlu0 %v1454, 16
      %v1475 = vpop.permute.xlu0 %1474
      %1476 = vrot.lane.b32.xlu0 %v1460, 16
      %v1477 = vpop.permute.xlu0 %1476
      %1478 = vrot.lane.b32.xlu0 %v1466, 16
      %v1479 = vpop.permute.xlu0 %1478
      %vm1480 = vcmp.lt.s32.totalorder %v1267, 16
      %v1481 = vsel %vm1480, %v1469, %v1475
      %v1482 = vsel %vm1480, %v1471, %v1477
      %v1483 = vsel %vm1480, %v1473, %v1479
      %v1484 = vsel %vm1480, %v1475, %v1469
      %v1485 = vsel %vm1480, %v1477, %v1471
      %v1486 = vsel %vm1480, %v1479, %v1473
      %v1488 = vlaneseq
      %v1489 = vshrl.u32 %v1488, 7
      %v1490 = vsub.s32 0, %v1489
      %v1491 = vrot.slane %v409, %v1490
      %v1492 = vlaneseq
      %v1493 = vshrl.u32 %v1492, 7
      %v1494 = vsub.s32 1, %v1493
      %v1495 = vrot.slane %v409, %v1494
      %v1498 = vmul.f32 %v1484, %v1491
      %v1499 = vmul.f32 %v1481, %v1495
      %v1500 = vmul.f32 %v1485, %v1491
      %v1501 = vmul.f32 %v1482, %v1495
      %v1502 = vmul.f32 %v1486, %v1491
      %v1503 = vmul.f32 %v1483, %v1495
      %v1504 = vadd.f32 %v1286, %v1498
      %v1505 = vadd.f32 %v1287, %v1499
      %v1506 = vadd.f32 %v1288, %v1500
      %v1507 = vadd.f32 %v1289, %v1501
      %v1508 = vadd.f32 %v1290, %v1502
      %v1509 = vadd.f32 %v1291, %v1503
      %s1510 = scalar_lea.vmem %s4, 144
      %v1511 = vld [vmem:[%s1510] sm:$0xff]
      %v1512 = vld [vmem:[%s1510 + $0x8] sm:$0xff]
      %v1513 = vld [vmem:[%s1510 + $0x10] sm:$0xff]
      %v1514 = vld [vmem:[%s1510 + $0x18] sm:$0xff]
      %v1515 = vld [vmem:[%s1510 + $0x20] sm:$0xff]
      %v1516 = vld [vmem:[%s1510 + $0x28] sm:$0xff]
      %v1517 = vld [vmem:[%s1510 + $0x30] sm:$0xff]
      %v1518 = vld [vmem:[%s1510 + $0x38] sm:$0xff]
      %v1519 = vld [vmem:[%s1510 + $0x40] sm:$0xff]
      %1520 = vmatprep.subr.mxu0 %v984
      %1521 = vmatpush1.msra.mxu0 %v983
      %1522 = vmatprep.subr.mxu0 %v986
      %1523 = vmatpush1.msra.mxu0 %v985
      %1524 = vmatprep.subr.mxu0 %v988
      %1525 = vmatpush1.msra.mxu0 %v987
      %1526 = vmatprep.subr.mxu0 %v990
      %1527 = vmatpush1.msra.mxu0 %v989
      %1528 = vmatprep.subr.mxu0 %v992
      %1529 = vmatpush1.msra.mxu0 %v991
      %1530 = vmatprep.subr.mxu0 %v994
      %1531 = vmatpush1.msra.mxu0 %v993
      %1532 = vmatprep.subr.mxu0 %v996
      %1533 = vmatpush1.msra.mxu0 %v995
      %1534 = vmatprep.subr.mxu0 %v998
      %1535 = vmatpush1.msra.mxu0 %v997
      %1536 = vmatprep.subr.mxu0 %v1000
      %1537 = vmatpush1.msra.mxu0 %v999
      %1538 = vmatprep.subr.mxu0 %v1002
      %1539 = vmatpush1.msra.mxu0 %v1001
      %1540 = vmatprep.subr.mxu0 %v1004
      %1541 = vmatpush1.msra.mxu0 %v1003
      %1542 = vmatprep.subr.mxu0 %v1006
      %1543 = vmatpush1.msra.mxu0 %v1005
      %1544 = vmatprep.subr.mxu0 %v1008
      %1545 = vmatpush1.msra.mxu0 %v1007
      %1546 = vmatprep.subr.mxu0 %v1010
      %1547 = vmatpush1.msra.mxu0 %v1009
      %1548 = vmatprep.subr.mxu0 %v1012
      %1549 = vmatpush1.msra.mxu0 %v1011
      %1550 = vmatprep.subr.mxu0 %v1014
      %1551 = vmatpush1.msra.mxu0 %v1013
      %1552 = vmatprep.subr.mxu0 %v1016
      %1553 = vmatpush1.msra.mxu0 %v1015
      %1554 = vmatprep.subr.mxu0 %v1018
      %1555 = vmatpush1.msra.mxu0 %v1017
      %1556 = vmatprep.subr.mxu0 %v1020
      %1557 = vmatpush1.msra.mxu0 %v1019
      %1558 = vmatprep.subr.mxu0 %v1022
      %1559 = vmatpush1.msra.mxu0 %v1021
      %1560 = vmatprep.subr.mxu0 %v1024
      %1561 = vmatpush1.msra.mxu0 %v1023
      %1562 = vmatprep.subr.mxu0 %v1026
      %1563 = vmatpush1.msra.mxu0 %v1025
      %1564 = vmatprep.subr.mxu0 %v1028
      %1565 = vmatpush1.msra.mxu0 %v1027
      %1566 = vmatprep.subr.mxu0 %v1030
      %1567 = vmatpush1.msra.mxu0 %v1029
      %1568 = vmatprep.subr.mxu0 %v1032
      %1569 = vmatpush1.msra.mxu0 %v1031
      %1570 = vmatprep.subr.mxu0 %v1034
      %1571 = vmatpush1.msra.mxu0 %v1033
      %1572 = vmatprep.subr.mxu0 %v1036
      %1573 = vmatpush1.msra.mxu0 %v1035
      %1574 = vmatprep.subr.mxu0 %v1038
      %1575 = vmatpush1.msra.mxu0 %v1037
      %1576 = vmatprep.subr.mxu0 %v1040
      %1577 = vmatpush1.msra.mxu0 %v1039
      %1578 = vmatprep.subr.mxu0 %v1042
      %1579 = vmatpush1.msra.mxu0 %v1041
      %1580 = vmatprep.subr.mxu0 %v1044
      %1581 = vmatpush1.msra.mxu0 %v1043
      %1582 = vmatprep.subr.mxu0 %v1046
      %1583 = vmatpush1.msra.mxu0 %v1045
      %1584 = vmatprep.mubr.f32.mxu0 %v1512
      %1585 = vmatmul.mubr.f32.gmra.mrb[0].mxu0 %v1511
      %v1586 = vpop.f32.mrb[0].mxu0
      %v1587 = vadd.f32 0.0, %v1586
      %v1588 = vpop.f32.mrb[0].mxu0
      %v1589 = vadd.f32 0.0, %v1588
      %1590 = vmatprep.mubr.f32.mxu0 %v1515
      %1591 = vmatmul.mubr.f32.gmra.mrb[0].mxu0 %v1514
      %v1592 = vpop.f32.mrb[0].mxu0
      %v1593 = vadd.f32 0.0, %v1592
      %v1594 = vpop.f32.mrb[0].mxu0
      %v1595 = vadd.f32 0.0, %v1594
      %1596 = vmatprep.mubr.f32.mxu0 %v1518
      %1597 = vmatmul.mubr.f32.gmra.mrb[0].mxu0 %v1517
      %v1598 = vpop.f32.mrb[0].mxu0
      %v1599 = vadd.f32 0.0, %v1598
      %v1600 = vpop.f32.mrb[0].mxu0
      %v1601 = vadd.f32 0.0, %v1600
      %1602 = vdwg.mxu0
      %1603 = vmatprep.subr.mxu0 %v1048
      %1604 = vmatpush1.msra.mxu0 %v1047
      %1605 = vmatprep.subr.mxu0 %v1050
      %1606 = vmatpush1.msra.mxu0 %v1049
      %1607 = vmatprep.subr.mxu0 %v1052
      %1608 = vmatpush1.msra.mxu0 %v1051
      %1609 = vmatprep.subr.mxu0 %v1054
      %1610 = vmatpush1.msra.mxu0 %v1053
      %1611 = vmatprep.subr.mxu0 %v1056
      %1612 = vmatpush1.msra.mxu0 %v1055
      %1613 = vmatprep.subr.mxu0 %v1058
      %1614 = vmatpush1.msra.mxu0 %v1057
      %1615 = vmatprep.subr.mxu0 %v1060
      %1616 = vmatpush1.msra.mxu0 %v1059
      %1617 = vmatprep.subr.mxu0 %v1062
      %1618 = vmatpush1.msra.mxu0 %v1061
      %1619 = vmatprep.subr.mxu0 %v1064
      %1620 = vmatpush1.msra.mxu0 %v1063
      %1621 = vmatprep.subr.mxu0 %v1066
      %1622 = vmatpush1.msra.mxu0 %v1065
      %1623 = vmatprep.subr.mxu0 %v1068
      %1624 = vmatpush1.msra.mxu0 %v1067
      %1625 = vmatprep.subr.mxu0 %v1070
      %1626 = vmatpush1.msra.mxu0 %v1069
      %1627 = vmatprep.subr.mxu0 %v1072
      %1628 = vmatpush1.msra.mxu0 %v1071
      %1629 = vmatprep.subr.mxu0 %v1074
      %1630 = vmatpush1.msra.mxu0 %v1073
      %1631 = vmatprep.subr.mxu0 %v1076
      %1632 = vmatpush1.msra.mxu0 %v1075
      %1633 = vmatprep.subr.mxu0 %v1078
      %1634 = vmatpush1.msra.mxu0 %v1077
      %1635 = vmatprep.subr.mxu0 0.0
      %1636 = vmatpush1.msra.mxu0 0.0
      %1637 = vmatprep.subr.mxu0 0.0
      %1638 = vmatpush1.msra.mxu0 0.0
      %1639 = vmatprep.subr.mxu0 0.0
      %1640 = vmatpush1.msra.mxu0 0.0
      %1641 = vmatprep.subr.mxu0 0.0
      %1642 = vmatpush1.msra.mxu0 0.0
      %1643 = vmatprep.subr.mxu0 0.0
      %1644 = vmatpush1.msra.mxu0 0.0
      %1645 = vmatprep.subr.mxu0 0.0
      %1646 = vmatpush1.msra.mxu0 0.0
      %1647 = vmatprep.subr.mxu0 0.0
      %1648 = vmatpush1.msra.mxu0 0.0
      %1649 = vmatprep.subr.mxu0 0.0
      %1650 = vmatpush1.msra.mxu0 0.0
      %1651 = vmatprep.subr.mxu0 0.0
      %1652 = vmatpush1.msra.mxu0 0.0
      %1653 = vmatprep.subr.mxu0 0.0
      %1654 = vmatpush1.msra.mxu0 0.0
      %1655 = vmatprep.subr.mxu0 0.0
      %1656 = vmatpush1.msra.mxu0 0.0
      %1657 = vmatprep.subr.mxu0 0.0
      %1658 = vmatpush1.msra.mxu0 0.0
      %1659 = vmatprep.subr.mxu0 0.0
      %1660 = vmatpush1.msra.mxu0 0.0
      %1661 = vmatprep.subr.mxu0 0.0
      %1662 = vmatpush1.msra.mxu0 0.0
      %1663 = vmatprep.subr.mxu0 0.0
      %1664 = vmatpush1.msra.mxu0 0.0
      %1665 = vmatprep.subr.mxu0 0.0
      %1666 = vmatpush1.msra.mxu0 0.0
      %1667 = vmatprep.mubr.f32.mxu0 0.0
      %1668 = vmatmul.mubr.f32.gmra.mrb[0].mxu0 %v1513
      %v1669 = vpop.f32.mrb[0].mxu0
      %v1670 = vadd.f32 %v1587, %v1669
      %v1671 = vpop.f32.mrb[0].mxu0
      %v1672 = vadd.f32 %v1589, %v1671
      %1673 = vmatprep.mubr.f32.mxu0 0.0
      %1674 = vmatmul.mubr.f32.gmra.mrb[0].mxu0 %v1516
      %v1675 = vpop.f32.mrb[0].mxu0
      %v1676 = vadd.f32 %v1593, %v1675
      %v1677 = vpop.f32.mrb[0].mxu0
      %v1678 = vadd.f32 %v1595, %v1677
      %1679 = vmatprep.mubr.f32.mxu0 0.0
      %1680 = vmatmul.mubr.f32.gmra.mrb[0].mxu0 %v1519
      %v1681 = vpop.f32.mrb[0].mxu0
      %v1682 = vadd.f32 %v1599, %v1681
      %v1683 = vpop.f32.mrb[0].mxu0
      %v1684 = vadd.f32 %v1601, %v1683
      %1685 = vdwg.mxu0
      %1686 = vrot.lane.b32.xlu0 %v1670, 15
      %v1687 = vpop.permute.xlu0 %1686
      %1688 = vrot.lane.b32.xlu0 %v1676, 15
      %v1689 = vpop.permute.xlu0 %1688
      %1690 = vrot.lane.b32.xlu0 %v1682, 15
      %v1691 = vpop.permute.xlu0 %1690
      %1692 = vrot.lane.b32.xlu0 %v1672, 15
      %v1693 = vpop.permute.xlu0 %1692
      %1694 = vrot.lane.b32.xlu0 %v1678, 15
      %v1695 = vpop.permute.xlu0 %1694
      %1696 = vrot.lane.b32.xlu0 %v1684, 15
      %v1697 = vpop.permute.xlu0 %1696
      %vm1698 = vcmp.lt.s32.totalorder %v1267, 15
      %v1699 = vsel %vm1698, %v1687, %v1693
      %v1700 = vsel %vm1698, %v1689, %v1695
      %v1701 = vsel %vm1698, %v1691, %v1697
      %v1702 = vsel %vm1698, %v1693, %v1687
      %v1703 = vsel %vm1698, %v1695, %v1689
      %v1704 = vsel %vm1698, %v1697, %v1691
      %v1706 = vlaneseq
      %v1707 = vshrl.u32 %v1706, 7
      %v1708 = vsub.s32 0, %v1707
      %v1709 = vrot.slane %v411, %v1708
      %v1710 = vlaneseq
      %v1711 = vshrl.u32 %v1710, 7
      %v1712 = vsub.s32 1, %v1711
      %v1713 = vrot.slane %v411, %v1712
      %v1716 = vmul.f32 %v1702, %v1709
      %v1717 = vmul.f32 %v1699, %v1713
      %v1718 = vmul.f32 %v1703, %v1709
      %v1719 = vmul.f32 %v1700, %v1713
      %v1720 = vmul.f32 %v1704, %v1709
      %v1721 = vmul.f32 %v1701, %v1713
      %v1722 = vadd.f32 %v1504, %v1716
      %v1723 = vadd.f32 %v1505, %v1717
      %v1724 = vadd.f32 %v1506, %v1718
      %v1725 = vadd.f32 %v1507, %v1719
      %v1726 = vadd.f32 %v1508, %v1720
      %v1727 = vadd.f32 %v1509, %v1721
      %s1728 = scalar_lea.vmem %s4, 216
      %v1729 = vld [vmem:[%s1728] sm:$0xff]
      %v1730 = vld [vmem:[%s1728 + $0x8] sm:$0xff]
      %v1731 = vld [vmem:[%s1728 + $0x10] sm:$0xff]
      %v1732 = vld [vmem:[%s1728 + $0x18] sm:$0xff]
      %v1733 = vld [vmem:[%s1728 + $0x20] sm:$0xff]
      %v1734 = vld [vmem:[%s1728 + $0x28] sm:$0xff]
      %v1735 = vld [vmem:[%s1728 + $0x30] sm:$0xff]
      %v1736 = vld [vmem:[%s1728 + $0x38] sm:$0xff]
      %v1737 = vld [vmem:[%s1728 + $0x40] sm:$0xff]
      %1738 = vmatprep.subr.mxu0 %v984
      %1739 = vmatpush1.msra.mxu0 %v983
      %1740 = vmatprep.subr.mxu0 %v986
      %1741 = vmatpush1.msra.mxu0 %v985
      %1742 = vmatprep.subr.mxu0 %v988
      %1743 = vmatpush1.msra.mxu0 %v987
      %1744 = vmatprep.subr.mxu0 %v990
      %1745 = vmatpush1.msra.mxu0 %v989
      %1746 = vmatprep.subr.mxu0 %v992
      %1747 = vmatpush1.msra.mxu0 %v991
      %1748 = vmatprep.subr.mxu0 %v994
      %1749 = vmatpush1.msra.mxu0 %v993
      %1750 = vmatprep.subr.mxu0 %v996
      %1751 = vmatpush1.msra.mxu0 %v995
      %1752 = vmatprep.subr.mxu0 %v998
      %1753 = vmatpush1.msra.mxu0 %v997
      %1754 = vmatprep.subr.mxu0 %v1000
      %1755 = vmatpush1.msra.mxu0 %v999
      %1756 = vmatprep.subr.mxu0 %v1002
      %1757 = vmatpush1.msra.mxu0 %v1001
      %1758 = vmatprep.subr.mxu0 %v1004
      %1759 = vmatpush1.msra.mxu0 %v1003
      %1760 = vmatprep.subr.mxu0 %v1006
      %1761 = vmatpush1.msra.mxu0 %v1005
      %1762 = vmatprep.subr.mxu0 %v1008
      %1763 = vmatpush1.msra.mxu0 %v1007
      %1764 = vmatprep.subr.mxu0 %v1010
      %1765 = vmatpush1.msra.mxu0 %v1009
      %1766 = vmatprep.subr.mxu0 %v1012
      %1767 = vmatpush1.msra.mxu0 %v1011
      %1768 = vmatprep.subr.mxu0 %v1014
      %1769 = vmatpush1.msra.mxu0 %v1013
      %1770 = vmatprep.subr.mxu0 %v1016
      %1771 = vmatpush1.msra.mxu0 %v1015
      %1772 = vmatprep.subr.mxu0 %v1018
      %1773 = vmatpush1.msra.mxu0 %v1017
      %1774 = vmatprep.subr.mxu0 %v1020
      %1775 = vmatpush1.msra.mxu0 %v1019
      %1776 = vmatprep.subr.mxu0 %v1022
      %1777 = vmatpush1.msra.mxu0 %v1021
      %1778 = vmatprep.subr.mxu0 %v1024
      %1779 = vmatpush1.msra.mxu0 %v1023
      %1780 = vmatprep.subr.mxu0 %v1026
      %1781 = vmatpush1.msra.mxu0 %v1025
      %1782 = vmatprep.subr.mxu0 %v1028
      %1783 = vmatpush1.msra.mxu0 %v1027
      %1784 = vmatprep.subr.mxu0 %v1030
      %1785 = vmatpush1.msra.mxu0 %v1029
      %1786 = vmatprep.subr.mxu0 %v1032
      %1787 = vmatpush1.msra.mxu0 %v1031
      %1788 = vmatprep.subr.mxu0 %v1034
      %1789 = vmatpush1.msra.mxu0 %v1033
      %1790 = vmatprep.subr.mxu0 %v1036
      %1791 = vmatpush1.msra.mxu0 %v1035
      %1792 = vmatprep.subr.mxu0 %v1038
      %1793 = vmatpush1.msra.mxu0 %v1037
      %1794 = vmatprep.subr.mxu0 %v1040
      %1795 = vmatpush1.msra.mxu0 %v1039
      %1796 = vmatprep.subr.mxu0 %v1042
      %1797 = vmatpush1.msra.mxu0 %v1041
      %1798 = vmatprep.subr.mxu0 %v1044
      %1799 = vmatpush1.msra.mxu0 %v1043
      %1800 = vmatprep.subr.mxu0 %v1046
      %1801 = vmatpush1.msra.mxu0 %v1045
      %1802 = vmatprep.mubr.f32.mxu0 %v1730
      %1803 = vmatmul.mubr.f32.gmra.mrb[0].mxu0 %v1729
      %v1804 = vpop.f32.mrb[0].mxu0
      %v1805 = vadd.f32 0.0, %v1804
      %v1806 = vpop.f32.mrb[0].mxu0
      %v1807 = vadd.f32 0.0, %v1806
      %1808 = vmatprep.mubr.f32.mxu0 %v1733
      %1809 = vmatmul.mubr.f32.gmra.mrb[0].mxu0 %v1732
      %v1810 = vpop.f32.mrb[0].mxu0
      %v1811 = vadd.f32 0.0, %v1810
      %v1812 = vpop.f32.mrb[0].mxu0
      %v1813 = vadd.f32 0.0, %v1812
      %1814 = vmatprep.mubr.f32.mxu0 %v1736
      %1815 = vmatmul.mubr.f32.gmra.mrb[0].mxu0 %v1735
      %v1816 = vpop.f32.mrb[0].mxu0
      %v1817 = vadd.f32 0.0, %v1816
      %v1818 = vpop.f32.mrb[0].mxu0
      %v1819 = vadd.f32 0.0, %v1818
      %1820 = vdwg.mxu0
      %1821 = vmatprep.subr.mxu0 %v1048
      %1822 = vmatpush1.msra.mxu0 %v1047
      %1823 = vmatprep.subr.mxu0 %v1050
      %1824 = vmatpush1.msra.mxu0 %v1049
      %1825 = vmatprep.subr.mxu0 %v1052
      %1826 = vmatpush1.msra.mxu0 %v1051
      %1827 = vmatprep.subr.mxu0 %v1054
      %1828 = vmatpush1.msra.mxu0 %v1053
      %1829 = vmatprep.subr.mxu0 %v1056
      %1830 = vmatpush1.msra.mxu0 %v1055
      %1831 = vmatprep.subr.mxu0 %v1058
      %1832 = vmatpush1.msra.mxu0 %v1057
      %1833 = vmatprep.subr.mxu0 %v1060
      %1834 = vmatpush1.msra.mxu0 %v1059
      %1835 = vmatprep.subr.mxu0 %v1062
      %1836 = vmatpush1.msra.mxu0 %v1061
      %1837 = vmatprep.subr.mxu0 %v1064
      %1838 = vmatpush1.msra.mxu0 %v1063
      %1839 = vmatprep.subr.mxu0 %v1066
      %1840 = vmatpush1.msra.mxu0 %v1065
      %1841 = vmatprep.subr.mxu0 %v1068
      %1842 = vmatpush1.msra.mxu0 %v1067
      %1843 = vmatprep.subr.mxu0 %v1070
      %1844 = vmatpush1.msra.mxu0 %v1069
      %1845 = vmatprep.subr.mxu0 %v1072
      %1846 = vmatpush1.msra.mxu0 %v1071
      %1847 = vmatprep.subr.mxu0 %v1074
      %1848 = vmatpush1.msra.mxu0 %v1073
      %1849 = vmatprep.subr.mxu0 %v1076
      %1850 = vmatpush1.msra.mxu0 %v1075
      %1851 = vmatprep.subr.mxu0 %v1078
      %1852 = vmatpush1.msra.mxu0 %v1077
      %1853 = vmatprep.subr.mxu0 0.0
      %1854 = vmatpush1.msra.mxu0 0.0
      %1855 = vmatprep.subr.mxu0 0.0
      %1856 = vmatpush1.msra.mxu0 0.0
      %1857 = vmatprep.subr.mxu0 0.0
      %1858 = vmatpush1.msra.mxu0 0.0
      %1859 = vmatprep.subr.mxu0 0.0
      %1860 = vmatpush1.msra.mxu0 0.0
      %1861 = vmatprep.subr.mxu0 0.0
      %1862 = vmatpush1.msra.mxu0 0.0
      %1863 = vmatprep.subr.mxu0 0.0
      %1864 = vmatpush1.msra.mxu0 0.0
      %1865 = vmatprep.subr.mxu0 0.0
      %1866 = vmatpush1.msra.mxu0 0.0
      %1867 = vmatprep.subr.mxu0 0.0
      %1868 = vmatpush1.msra.mxu0 0.0
      %1869 = vmatprep.subr.mxu0 0.0
      %1870 = vmatpush1.msra.mxu0 0.0
      %1871 = vmatprep.subr.mxu0 0.0
      %1872 = vmatpush1.msra.mxu0 0.0
      %1873 = vmatprep.subr.mxu0 0.0
      %1874 = vmatpush1.msra.mxu0 0.0
      %1875 = vmatprep.subr.mxu0 0.0
      %1876 = vmatpush1.msra.mxu0 0.0
      %1877 = vmatprep.subr.mxu0 0.0
      %1878 = vmatpush1.msra.mxu0 0.0
      %1879 = vmatprep.subr.mxu0 0.0
      %1880 = vmatpush1.msra.mxu0 0.0
      %1881 = vmatprep.subr.mxu0 0.0
      %1882 = vmatpush1.msra.mxu0 0.0
      %1883 = vmatprep.subr.mxu0 0.0
      %1884 = vmatpush1.msra.mxu0 0.0
      %1885 = vmatprep.mubr.f32.mxu0 0.0
      %1886 = vmatmul.mubr.f32.gmra.mrb[0].mxu0 %v1731
      %v1887 = vpop.f32.mrb[0].mxu0
      %v1888 = vadd.f32 %v1805, %v1887
      %v1889 = vpop.f32.mrb[0].mxu0
      %v1890 = vadd.f32 %v1807, %v1889
      %1891 = vmatprep.mubr.f32.mxu0 0.0
      %1892 = vmatmul.mubr.f32.gmra.mrb[0].mxu0 %v1734
      %v1893 = vpop.f32.mrb[0].mxu0
      %v1894 = vadd.f32 %v1811, %v1893
      %v1895 = vpop.f32.mrb[0].mxu0
      %v1896 = vadd.f32 %v1813, %v1895
      %1897 = vmatprep.mubr.f32.mxu0 0.0
      %1898 = vmatmul.mubr.f32.gmra.mrb[0].mxu0 %v1737
      %v1899 = vpop.f32.mrb[0].mxu0
      %v1900 = vadd.f32 %v1817, %v1899
      %v1901 = vpop.f32.mrb[0].mxu0
      %v1902 = vadd.f32 %v1819, %v1901
      %1903 = vdwg.mxu0
      %1904 = vrot.lane.b32.xlu0 %v1888, 1
      %v1905 = vpop.permute.xlu0 %1904
      %1906 = vrot.lane.b32.xlu0 %v1894, 1
      %v1907 = vpop.permute.xlu0 %1906
      %1908 = vrot.lane.b32.xlu0 %v1900, 1
      %v1909 = vpop.permute.xlu0 %1908
      %1910 = vrot.lane.b32.xlu0 %v1890, 1
      %v1911 = vpop.permute.xlu0 %1910
      %1912 = vrot.lane.b32.xlu0 %v1896, 1
      %v1913 = vpop.permute.xlu0 %1912
      %1914 = vrot.lane.b32.xlu0 %v1902, 1
      %v1915 = vpop.permute.xlu0 %1914
      %vm1916 = vcmp.lt.s32.totalorder %v1267, 1
      %v1917 = vsel %vm1916, %v1905, %v1911
      %v1918 = vsel %vm1916, %v1907, %v1913
      %v1919 = vsel %vm1916, %v1909, %v1915
      %v1920 = vsel %vm1916, %v1911, %v1905
      %v1921 = vsel %vm1916, %v1913, %v1907
      %v1922 = vsel %vm1916, %v1915, %v1909
      %v1924 = vlaneseq
      %v1925 = vshrl.u32 %v1924, 7
      %v1926 = vsub.s32 0, %v1925
      %v1927 = vrot.slane %v413, %v1926
      %v1928 = vlaneseq
      %v1929 = vshrl.u32 %v1928, 7
      %v1930 = vsub.s32 1, %v1929
      %v1931 = vrot.slane %v413, %v1930
      %v1934 = vmul.f32 %v1920, %v1927
      %v1935 = vmul.f32 %v1917, %v1931
      %v1936 = vmul.f32 %v1921, %v1927
      %v1937 = vmul.f32 %v1918, %v1931
      %v1938 = vmul.f32 %v1922, %v1927
      %v1939 = vmul.f32 %v1919, %v1931
      %v1940 = vadd.f32 %v1722, %v1934
      %v1941 = vadd.f32 %v1723, %v1935
      %v1942 = vadd.f32 %v1724, %v1936
      %v1943 = vadd.f32 %v1725, %v1937
      %v1944 = vadd.f32 %v1726, %v1938
      %v1945 = vadd.f32 %v1727, %v1939
      %s1946 = scalar_lea.vmem %s4, 288
      %v1947 = vld [vmem:[%s1946] sm:$0xff]
      %v1948 = vld [vmem:[%s1946 + $0x8] sm:$0xff]
      %v1949 = vld [vmem:[%s1946 + $0x10] sm:$0xff]
      %v1950 = vld [vmem:[%s1946 + $0x18] sm:$0xff]
      %v1951 = vld [vmem:[%s1946 + $0x20] sm:$0xff]
      %v1952 = vld [vmem:[%s1946 + $0x28] sm:$0xff]
      %v1953 = vld [vmem:[%s1946 + $0x30] sm:$0xff]
      %v1954 = vld [vmem:[%s1946 + $0x38] sm:$0xff]
      %v1955 = vld [vmem:[%s1946 + $0x40] sm:$0xff]
      %1956 = vmatprep.subr.mxu0 %v984
      %1957 = vmatpush1.msra.mxu0 %v983
      %1958 = vmatprep.subr.mxu0 %v986
      %1959 = vmatpush1.msra.mxu0 %v985
      %1960 = vmatprep.subr.mxu0 %v988
      %1961 = vmatpush1.msra.mxu0 %v987
      %1962 = vmatprep.subr.mxu0 %v990
      %1963 = vmatpush1.msra.mxu0 %v989
      %1964 = vmatprep.subr.mxu0 %v992
      %1965 = vmatpush1.msra.mxu0 %v991
      %1966 = vmatprep.subr.mxu0 %v994
      %1967 = vmatpush1.msra.mxu0 %v993
      %1968 = vmatprep.subr.mxu0 %v996
      %1969 = vmatpush1.msra.mxu0 %v995
      %1970 = vmatprep.subr.mxu0 %v998
      %1971 = vmatpush1.msra.mxu0 %v997
      %1972 = vmatprep.subr.mxu0 %v1000
      %1973 = vmatpush1.msra.mxu0 %v999
      %1974 = vmatprep.subr.mxu0 %v1002
      %1975 = vmatpush1.msra.mxu0 %v1001
      %1976 = vmatprep.subr.mxu0 %v1004
      %1977 = vmatpush1.msra.mxu0 %v1003
      %1978 = vmatprep.subr.mxu0 %v1006
      %1979 = vmatpush1.msra.mxu0 %v1005
      %1980 = vmatprep.subr.mxu0 %v1008
      %1981 = vmatpush1.msra.mxu0 %v1007
      %1982 = vmatprep.subr.mxu0 %v1010
      %1983 = vmatpush1.msra.mxu0 %v1009
      %1984 = vmatprep.subr.mxu0 %v1012
      %1985 = vmatpush1.msra.mxu0 %v1011
      %1986 = vmatprep.subr.mxu0 %v1014
      %1987 = vmatpush1.msra.mxu0 %v1013
      %1988 = vmatprep.subr.mxu0 %v1016
      %1989 = vmatpush1.msra.mxu0 %v1015
      %1990 = vmatprep.subr.mxu0 %v1018
      %1991 = vmatpush1.msra.mxu0 %v1017
      %1992 = vmatprep.subr.mxu0 %v1020
      %1993 = vmatpush1.msra.mxu0 %v1019
      %1994 = vmatprep.subr.mxu0 %v1022
      %1995 = vmatpush1.msra.mxu0 %v1021
      %1996 = vmatprep.subr.mxu0 %v1024
      %1997 = vmatpush1.msra.mxu0 %v1023
      %1998 = vmatprep.subr.mxu0 %v1026
      %1999 = vmatpush1.msra.mxu0 %v1025
      %2000 = vmatprep.subr.mxu0 %v1028
      %2001 = vmatpush1.msra.mxu0 %v1027
      %2002 = vmatprep.subr.mxu0 %v1030
      %2003 = vmatpush1.msra.mxu0 %v1029
      %2004 = vmatprep.subr.mxu0 %v1032
      %2005 = vmatpush1.msra.mxu0 %v1031
      %2006 = vmatprep.subr.mxu0 %v1034
      %2007 = vmatpush1.msra.mxu0 %v1033
      %2008 = vmatprep.subr.mxu0 %v1036
      %2009 = vmatpush1.msra.mxu0 %v1035
      %2010 = vmatprep.subr.mxu0 %v1038
      %2011 = vmatpush1.msra.mxu0 %v1037
      %2012 = vmatprep.subr.mxu0 %v1040
      %2013 = vmatpush1.msra.mxu0 %v1039
      %2014 = vmatprep.subr.mxu0 %v1042
      %2015 = vmatpush1.msra.mxu0 %v1041
      %2016 = vmatprep.subr.mxu0 %v1044
      %2017 = vmatpush1.msra.mxu0 %v1043
      %2018 = vmatprep.subr.mxu0 %v1046
      %2019 = vmatpush1.msra.mxu0 %v1045
      %2020 = vmatprep.mubr.f32.mxu0 %v1948
      %2021 = vmatmul.mubr.f32.gmra.mrb[0].mxu0 %v1947
      %v2022 = vpop.f32.mrb[0].mxu0
      %v2023 = vadd.f32 0.0, %v2022
      %v2024 = vpop.f32.mrb[0].mxu0
      %v2025 = vadd.f32 0.0, %v2024
      %2026 = vmatprep.mubr.f32.mxu0 %v1951
      %2027 = vmatmul.mubr.f32.gmra.mrb[0].mxu0 %v1950
      %v2028 = vpop.f32.mrb[0].mxu0
      %v2029 = vadd.f32 0.0, %v2028
      %v2030 = vpop.f32.mrb[0].mxu0
      %v2031 = vadd.f32 0.0, %v2030
      %2032 = vmatprep.mubr.f32.mxu0 %v1954
      %2033 = vmatmul.mubr.f32.gmra.mrb[0].mxu0 %v1953
      %v2034 = vpop.f32.mrb[0].mxu0
      %v2035 = vadd.f32 0.0, %v2034
      %v2036 = vpop.f32.mrb[0].mxu0
      %v2037 = vadd.f32 0.0, %v2036
      %2038 = vdwg.mxu0
      %2039 = vmatprep.subr.mxu0 %v1048
      %2040 = vmatpush1.msra.mxu0 %v1047
      %2041 = vmatprep.subr.mxu0 %v1050
      %2042 = vmatpush1.msra.mxu0 %v1049
      %2043 = vmatprep.subr.mxu0 %v1052
      %2044 = vmatpush1.msra.mxu0 %v1051
      %2045 = vmatprep.subr.mxu0 %v1054
      %2046 = vmatpush1.msra.mxu0 %v1053
      %2047 = vmatprep.subr.mxu0 %v1056
      %2048 = vmatpush1.msra.mxu0 %v1055
      %2049 = vmatprep.subr.mxu0 %v1058
      %2050 = vmatpush1.msra.mxu0 %v1057
      %2051 = vmatprep.subr.mxu0 %v1060
      %2052 = vmatpush1.msra.mxu0 %v1059
      %2053 = vmatprep.subr.mxu0 %v1062
      %2054 = vmatpush1.msra.mxu0 %v1061
      %2055 = vmatprep.subr.mxu0 %v1064
      %2056 = vmatpush1.msra.mxu0 %v1063
      %2057 = vmatprep.subr.mxu0 %v1066
      %2058 = vmatpush1.msra.mxu0 %v1065
      %2059 = vmatprep.subr.mxu0 %v1068
      %2060 = vmatpush1.msra.mxu0 %v1067
      %2061 = vmatprep.subr.mxu0 %v1070
      %2062 = vmatpush1.msra.mxu0 %v1069
      %2063 = vmatprep.subr.mxu0 %v1072
      %2064 = vmatpush1.msra.mxu0 %v1071
      %2065 = vmatprep.subr.mxu0 %v1074
      %2066 = vmatpush1.msra.mxu0 %v1073
      %2067 = vmatprep.subr.mxu0 %v1076
      %2068 = vmatpush1.msra.mxu0 %v1075
      %2069 = vmatprep.subr.mxu0 %v1078
      %2070 = vmatpush1.msra.mxu0 %v1077
      %2071 = vmatprep.subr.mxu0 0.0
      %2072 = vmatpush1.msra.mxu0 0.0
      %2073 = vmatprep.subr.mxu0 0.0
      %2074 = vmatpush1.msra.mxu0 0.0
      %2075 = vmatprep.subr.mxu0 0.0
      %2076 = vmatpush1.msra.mxu0 0.0
      %2077 = vmatprep.subr.mxu0 0.0
      %2078 = vmatpush1.msra.mxu0 0.0
      %2079 = vmatprep.subr.mxu0 0.0
      %2080 = vmatpush1.msra.mxu0 0.0
      %2081 = vmatprep.subr.mxu0 0.0
      %2082 = vmatpush1.msra.mxu0 0.0
      %2083 = vmatprep.subr.mxu0 0.0
      %2084 = vmatpush1.msra.mxu0 0.0
      %2085 = vmatprep.subr.mxu0 0.0
      %2086 = vmatpush1.msra.mxu0 0.0
      %2087 = vmatprep.subr.mxu0 0.0
      %2088 = vmatpush1.msra.mxu0 0.0
      %2089 = vmatprep.subr.mxu0 0.0
      %2090 = vmatpush1.msra.mxu0 0.0
      %2091 = vmatprep.subr.mxu0 0.0
      %2092 = vmatpush1.msra.mxu0 0.0
      %2093 = vmatprep.subr.mxu0 0.0
      %2094 = vmatpush1.msra.mxu0 0.0
      %2095 = vmatprep.subr.mxu0 0.0
      %2096 = vmatpush1.msra.mxu0 0.0
      %2097 = vmatprep.subr.mxu0 0.0
      %2098 = vmatpush1.msra.mxu0 0.0
      %2099 = vmatprep.subr.mxu0 0.0
      %2100 = vmatpush1.msra.mxu0 0.0
      %2101 = vmatprep.subr.mxu0 0.0
      %2102 = vmatpush1.msra.mxu0 0.0
      %2103 = vmatprep.mubr.f32.mxu0 0.0
      %2104 = vmatmul.mubr.f32.gmra.mrb[0].mxu0 %v1949
      %v2105 = vpop.f32.mrb[0].mxu0
      %v2106 = vadd.f32 %v2023, %v2105
      %v2107 = vpop.f32.mrb[0].mxu0
      %v2108 = vadd.f32 %v2025, %v2107
      %2109 = vmatprep.mubr.f32.mxu0 0.0
      %2110 = vmatmul.mubr.f32.gmra.mrb[0].mxu0 %v1952
      %v2111 = vpop.f32.mrb[0].mxu0
      %v2112 = vadd.f32 %v2029, %v2111
      %v2113 = vpop.f32.mrb[0].mxu0
      %v2114 = vadd.f32 %v2031, %v2113
      %2115 = vmatprep.mubr.f32.mxu0 0.0
      %2116 = vmatmul.mubr.f32.gmra.mrb[0].mxu0 %v1955
      %v2117 = vpop.f32.mrb[0].mxu0
      %v2118 = vadd.f32 %v2035, %v2117
      %v2119 = vpop.f32.mrb[0].mxu0
      %v2120 = vadd.f32 %v2037, %v2119
      %2121 = vdwg.mxu0
      %v2122 = vadd.f32 %v1940, %v2106
      %v2123 = vadd.f32 %v1941, %v2108
      %v2124 = vadd.f32 %v1942, %v2112
      %v2125 = vadd.f32 %v1943, %v2114
      %v2126 = vadd.f32 %v1944, %v2118
      %v2127 = vadd.f32 %v1945, %v2120
      %s2128 = scalar_lea.vmem %s4, 360
      %v2129 = vld [vmem:[%s2128] sm:$0xff]
      %v2130 = vld [vmem:[%s2128 + $0x8] sm:$0xff]
      %v2131 = vld [vmem:[%s2128 + $0x10] sm:$0xff]
      %v2132 = vld [vmem:[%s2128 + $0x18] sm:$0xff]
      %v2133 = vld [vmem:[%s2128 + $0x20] sm:$0xff]
      %v2134 = vld [vmem:[%s2128 + $0x28] sm:$0xff]
      %v2135 = vld [vmem:[%s2128 + $0x30] sm:$0xff]
      %v2136 = vld [vmem:[%s2128 + $0x38] sm:$0xff]
      %v2137 = vld [vmem:[%s2128 + $0x40] sm:$0xff]
      %2138 = vmatprep.subr.mxu0 %v984
      %2139 = vmatpush1.msra.mxu0 %v983
      %2140 = vmatprep.subr.mxu0 %v986
      %2141 = vmatpush1.msra.mxu0 %v985
      %2142 = vmatprep.subr.mxu0 %v988
      %2143 = vmatpush1.msra.mxu0 %v987
      %2144 = vmatprep.subr.mxu0 %v990
      %2145 = vmatpush1.msra.mxu0 %v989
      %2146 = vmatprep.subr.mxu0 %v992
      %2147 = vmatpush1.msra.mxu0 %v991
      %2148 = vmatprep.subr.mxu0 %v994
      %2149 = vmatpush1.msra.mxu0 %v993
      %2150 = vmatprep.subr.mxu0 %v996
      %2151 = vmatpush1.msra.mxu0 %v995
      %2152 = vmatprep.subr.mxu0 %v998
      %2153 = vmatpush1.msra.mxu0 %v997
      %2154 = vmatprep.subr.mxu0 %v1000
      %2155 = vmatpush1.msra.mxu0 %v999
      %2156 = vmatprep.subr.mxu0 %v1002
      %2157 = vmatpush1.msra.mxu0 %v1001
      %2158 = vmatprep.subr.mxu0 %v1004
      %2159 = vmatpush1.msra.mxu0 %v1003
      %2160 = vmatprep.subr.mxu0 %v1006
      %2161 = vmatpush1.msra.mxu0 %v1005
      %2162 = vmatprep.subr.mxu0 %v1008
      %2163 = vmatpush1.msra.mxu0 %v1007
      %2164 = vmatprep.subr.mxu0 %v1010
      %2165 = vmatpush1.msra.mxu0 %v1009
      %2166 = vmatprep.subr.mxu0 %v1012
      %2167 = vmatpush1.msra.mxu0 %v1011
      %2168 = vmatprep.subr.mxu0 %v1014
      %2169 = vmatpush1.msra.mxu0 %v1013
      %2170 = vmatprep.subr.mxu0 %v1016
      %2171 = vmatpush1.msra.mxu0 %v1015
      %2172 = vmatprep.subr.mxu0 %v1018
      %2173 = vmatpush1.msra.mxu0 %v1017
      %2174 = vmatprep.subr.mxu0 %v1020
      %2175 = vmatpush1.msra.mxu0 %v1019
      %2176 = vmatprep.subr.mxu0 %v1022
      %2177 = vmatpush1.msra.mxu0 %v1021
      %2178 = vmatprep.subr.mxu0 %v1024
      %2179 = vmatpush1.msra.mxu0 %v1023
      %2180 = vmatprep.subr.mxu0 %v1026
      %2181 = vmatpush1.msra.mxu0 %v1025
      %2182 = vmatprep.subr.mxu0 %v1028
      %2183 = vmatpush1.msra.mxu0 %v1027
      %2184 = vmatprep.subr.mxu0 %v1030
      %2185 = vmatpush1.msra.mxu0 %v1029
      %2186 = vmatprep.subr.mxu0 %v1032
      %2187 = vmatpush1.msra.mxu0 %v1031
      %2188 = vmatprep.subr.mxu0 %v1034
      %2189 = vmatpush1.msra.mxu0 %v1033
      %2190 = vmatprep.subr.mxu0 %v1036
      %2191 = vmatpush1.msra.mxu0 %v1035
      %2192 = vmatprep.subr.mxu0 %v1038
      %2193 = vmatpush1.msra.mxu0 %v1037
      %2194 = vmatprep.subr.mxu0 %v1040
      %2195 = vmatpush1.msra.mxu0 %v1039
      %2196 = vmatprep.subr.mxu0 %v1042
      %2197 = vmatpush1.msra.mxu0 %v1041
      %2198 = vmatprep.subr.mxu0 %v1044
      %2199 = vmatpush1.msra.mxu0 %v1043
      %2200 = vmatprep.subr.mxu0 %v1046
      %2201 = vmatpush1.msra.mxu0 %v1045
      %2202 = vmatprep.mubr.f32.mxu0 %v2130
      %2203 = vmatmul.mubr.f32.gmra.mrb[0].mxu0 %v2129
      %v2204 = vpop.f32.mrb[0].mxu0
      %v2205 = vadd.f32 0.0, %v2204
      %v2206 = vpop.f32.mrb[0].mxu0
      %v2207 = vadd.f32 0.0, %v2206
      %2208 = vmatprep.mubr.f32.mxu0 %v2133
      %2209 = vmatmul.mubr.f32.gmra.mrb[0].mxu0 %v2132
      %v2210 = vpop.f32.mrb[0].mxu0
      %v2211 = vadd.f32 0.0, %v2210
      %v2212 = vpop.f32.mrb[0].mxu0
      %v2213 = vadd.f32 0.0, %v2212
      %2214 = vmatprep.mubr.f32.mxu0 %v2136
      %2215 = vmatmul.mubr.f32.gmra.mrb[0].mxu0 %v2135
      %v2216 = vpop.f32.mrb[0].mxu0
      %v2217 = vadd.f32 0.0, %v2216
      %v2218 = vpop.f32.mrb[0].mxu0
      %v2219 = vadd.f32 0.0, %v2218
      %2220 = vdwg.mxu0
      %2221 = vmatprep.subr.mxu0 %v1048
      %2222 = vmatpush1.msra.mxu0 %v1047
      %2223 = vmatprep.subr.mxu0 %v1050
      %2224 = vmatpush1.msra.mxu0 %v1049
      %2225 = vmatprep.subr.mxu0 %v1052
      %2226 = vmatpush1.msra.mxu0 %v1051
      %2227 = vmatprep.subr.mxu0 %v1054
      %2228 = vmatpush1.msra.mxu0 %v1053
      %2229 = vmatprep.subr.mxu0 %v1056
      %2230 = vmatpush1.msra.mxu0 %v1055
      %2231 = vmatprep.subr.mxu0 %v1058
      %2232 = vmatpush1.msra.mxu0 %v1057
      %2233 = vmatprep.subr.mxu0 %v1060
      %2234 = vmatpush1.msra.mxu0 %v1059
      %2235 = vmatprep.subr.mxu0 %v1062
      %2236 = vmatpush1.msra.mxu0 %v1061
      %2237 = vmatprep.subr.mxu0 %v1064
      %2238 = vmatpush1.msra.mxu0 %v1063
      %2239 = vmatprep.subr.mxu0 %v1066
      %2240 = vmatpush1.msra.mxu0 %v1065
      %2241 = vmatprep.subr.mxu0 %v1068
      %2242 = vmatpush1.msra.mxu0 %v1067
      %2243 = vmatprep.subr.mxu0 %v1070
      %2244 = vmatpush1.msra.mxu0 %v1069
      %2245 = vmatprep.subr.mxu0 %v1072
      %2246 = vmatpush1.msra.mxu0 %v1071
      %2247 = vmatprep.subr.mxu0 %v1074
      %2248 = vmatpush1.msra.mxu0 %v1073
      %2249 = vmatprep.subr.mxu0 %v1076
      %2250 = vmatpush1.msra.mxu0 %v1075
      %2251 = vmatprep.subr.mxu0 %v1078
      %2252 = vmatpush1.msra.mxu0 %v1077
      %2253 = vmatprep.subr.mxu0 0.0
      %2254 = vmatpush1.msra.mxu0 0.0
      %2255 = vmatprep.subr.mxu0 0.0
      %2256 = vmatpush1.msra.mxu0 0.0
      %2257 = vmatprep.subr.mxu0 0.0
      %2258 = vmatpush1.msra.mxu0 0.0
      %2259 = vmatprep.subr.mxu0 0.0
      %2260 = vmatpush1.msra.mxu0 0.0
      %2261 = vmatprep.subr.mxu0 0.0
      %2262 = vmatpush1.msra.mxu0 0.0
      %2263 = vmatprep.subr.mxu0 0.0
      %2264 = vmatpush1.msra.mxu0 0.0
      %2265 = vmatprep.subr.mxu0 0.0
      %2266 = vmatpush1.msra.mxu0 0.0
      %2267 = vmatprep.subr.mxu0 0.0
      %2268 = vmatpush1.msra.mxu0 0.0
      %2269 = vmatprep.subr.mxu0 0.0
      %2270 = vmatpush1.msra.mxu0 0.0
      %2271 = vmatprep.subr.mxu0 0.0
      %2272 = vmatpush1.msra.mxu0 0.0
      %2273 = vmatprep.subr.mxu0 0.0
      %2274 = vmatpush1.msra.mxu0 0.0
      %2275 = vmatprep.subr.mxu0 0.0
      %2276 = vmatpush1.msra.mxu0 0.0
      %2277 = vmatprep.subr.mxu0 0.0
      %2278 = vmatpush1.msra.mxu0 0.0
      %2279 = vmatprep.subr.mxu0 0.0
      %2280 = vmatpush1.msra.mxu0 0.0
      %2281 = vmatprep.subr.mxu0 0.0
      %2282 = vmatpush1.msra.mxu0 0.0
      %2283 = vmatprep.subr.mxu0 0.0
      %2284 = vmatpush1.msra.mxu0 0.0
      %2285 = vmatprep.mubr.f32.mxu0 0.0
      %2286 = vmatmul.mubr.f32.gmra.mrb[0].mxu0 %v2131
      %v2287 = vpop.f32.mrb[0].mxu0
      %v2288 = vadd.f32 %v2205, %v2287
      %v2289 = vpop.f32.mrb[0].mxu0
      %v2290 = vadd.f32 %v2207, %v2289
      %2291 = vmatprep.mubr.f32.mxu0 0.0
      %2292 = vmatmul.mubr.f32.gmra.mrb[0].mxu0 %v2134
      %v2293 = vpop.f32.mrb[0].mxu0
      %v2294 = vadd.f32 %v2211, %v2293
      %v2295 = vpop.f32.mrb[0].mxu0
      %v2296 = vadd.f32 %v2213, %v2295
      %2297 = vmatprep.mubr.f32.mxu0 0.0
      %2298 = vmatmul.mubr.f32.gmra.mrb[0].mxu0 %v2137
      %v2299 = vpop.f32.mrb[0].mxu0
      %v2300 = vadd.f32 %v2217, %v2299
      %v2301 = vpop.f32.mrb[0].mxu0
      %v2302 = vadd.f32 %v2219, %v2301
      %2303 = vdwg.mxu0
      %2304 = vrot.lane.b32.xlu0 %v2288, 127
      %v2305 = vpop.permute.xlu0 %2304
      %2306 = vrot.lane.b32.xlu0 %v2294, 127
      %v2307 = vpop.permute.xlu0 %2306
      %2308 = vrot.lane.b32.xlu0 %v2300, 127
      %v2309 = vpop.permute.xlu0 %2308
      %2310 = vrot.lane.b32.xlu0 %v2290, 127
      %v2311 = vpop.permute.xlu0 %2310
      %2312 = vrot.lane.b32.xlu0 %v2296, 127
      %v2313 = vpop.permute.xlu0 %2312
      %2314 = vrot.lane.b32.xlu0 %v2302, 127
      %v2315 = vpop.permute.xlu0 %2314
      %vm2316 = vcmp.lt.s32.totalorder %v1267, 127
      %v2317 = vsel %vm2316, %v2305, %v2311
      %v2318 = vsel %vm2316, %v2307, %v2313
      %v2319 = vsel %vm2316, %v2309, %v2315
      %v2320 = vsel %vm2316, %v2311, %v2305
      %v2321 = vsel %vm2316, %v2313, %v2307
      %v2322 = vsel %vm2316, %v2315, %v2309
      %v2324 = vlaneseq
      %v2325 = vshrl.u32 %v2324, 7
      %v2326 = vsub.s32 0, %v2325
      %v2327 = vrot.slane %v415, %v2326
      %v2328 = vlaneseq
      %v2329 = vshrl.u32 %v2328, 7
      %v2330 = vsub.s32 1, %v2329
      %v2331 = vrot.slane %v415, %v2330
      %v2334 = vmul.f32 %v2317, %v2327
      %v2335 = vmul.f32 %v2320, %v2331
      %v2336 = vmul.f32 %v2318, %v2327
      %v2337 = vmul.f32 %v2321, %v2331
      %v2338 = vmul.f32 %v2319, %v2327
      %v2339 = vmul.f32 %v2322, %v2331
      %v2340 = vadd.f32 %v2122, %v2334
      %v2341 = vadd.f32 %v2123, %v2335
      %v2342 = vadd.f32 %v2124, %v2336
      %v2343 = vadd.f32 %v2125, %v2337
      %v2344 = vadd.f32 %v2126, %v2338
      %v2345 = vadd.f32 %v2127, %v2339
      %s2346 = scalar_lea.vmem %s4, 432
      %v2347 = vld [vmem:[%s2346] sm:$0xff]
      %v2348 = vld [vmem:[%s2346 + $0x8] sm:$0xff]
      %v2349 = vld [vmem:[%s2346 + $0x10] sm:$0xff]
      %v2350 = vld [vmem:[%s2346 + $0x18] sm:$0xff]
      %v2351 = vld [vmem:[%s2346 + $0x20] sm:$0xff]
      %v2352 = vld [vmem:[%s2346 + $0x28] sm:$0xff]
      %v2353 = vld [vmem:[%s2346 + $0x30] sm:$0xff]
      %v2354 = vld [vmem:[%s2346 + $0x38] sm:$0xff]
      %v2355 = vld [vmem:[%s2346 + $0x40] sm:$0xff]
      %2356 = vmatprep.subr.mxu0 %v984
      %2357 = vmatpush1.msra.mxu0 %v983
      %2358 = vmatprep.subr.mxu0 %v986
      %2359 = vmatpush1.msra.mxu0 %v985
      %2360 = vmatprep.subr.mxu0 %v988
      %2361 = vmatpush1.msra.mxu0 %v987
      %2362 = vmatprep.subr.mxu0 %v990
      %2363 = vmatpush1.msra.mxu0 %v989
      %2364 = vmatprep.subr.mxu0 %v992
      %2365 = vmatpush1.msra.mxu0 %v991
      %2366 = vmatprep.subr.mxu0 %v994
      %2367 = vmatpush1.msra.mxu0 %v993
      %2368 = vmatprep.subr.mxu0 %v996
      %2369 = vmatpush1.msra.mxu0 %v995
      %2370 = vmatprep.subr.mxu0 %v998
      %2371 = vmatpush1.msra.mxu0 %v997
      %2372 = vmatprep.subr.mxu0 %v1000
      %2373 = vmatpush1.msra.mxu0 %v999
      %2374 = vmatprep.subr.mxu0 %v1002
      %2375 = vmatpush1.msra.mxu0 %v1001
      %2376 = vmatprep.subr.mxu0 %v1004
      %2377 = vmatpush1.msra.mxu0 %v1003
      %2378 = vmatprep.subr.mxu0 %v1006
      %2379 = vmatpush1.msra.mxu0 %v1005
      %2380 = vmatprep.subr.mxu0 %v1008
      %2381 = vmatpush1.msra.mxu0 %v1007
      %2382 = vmatprep.subr.mxu0 %v1010
      %2383 = vmatpush1.msra.mxu0 %v1009
      %2384 = vmatprep.subr.mxu0 %v1012
      %2385 = vmatpush1.msra.mxu0 %v1011
      %2386 = vmatprep.subr.mxu0 %v1014
      %2387 = vmatpush1.msra.mxu0 %v1013
      %2388 = vmatprep.subr.mxu0 %v1016
      %2389 = vmatpush1.msra.mxu0 %v1015
      %2390 = vmatprep.subr.mxu0 %v1018
      %2391 = vmatpush1.msra.mxu0 %v1017
      %2392 = vmatprep.subr.mxu0 %v1020
      %2393 = vmatpush1.msra.mxu0 %v1019
      %2394 = vmatprep.subr.mxu0 %v1022
      %2395 = vmatpush1.msra.mxu0 %v1021
      %2396 = vmatprep.subr.mxu0 %v1024
      %2397 = vmatpush1.msra.mxu0 %v1023
      %2398 = vmatprep.subr.mxu0 %v1026
      %2399 = vmatpush1.msra.mxu0 %v1025
      %2400 = vmatprep.subr.mxu0 %v1028
      %2401 = vmatpush1.msra.mxu0 %v1027
      %2402 = vmatprep.subr.mxu0 %v1030
      %2403 = vmatpush1.msra.mxu0 %v1029
      %2404 = vmatprep.subr.mxu0 %v1032
      %2405 = vmatpush1.msra.mxu0 %v1031
      %2406 = vmatprep.subr.mxu0 %v1034
      %2407 = vmatpush1.msra.mxu0 %v1033
      %2408 = vmatprep.subr.mxu0 %v1036
      %2409 = vmatpush1.msra.mxu0 %v1035
      %2410 = vmatprep.subr.mxu0 %v1038
      %2411 = vmatpush1.msra.mxu0 %v1037
      %2412 = vmatprep.subr.mxu0 %v1040
      %2413 = vmatpush1.msra.mxu0 %v1039
      %2414 = vmatprep.subr.mxu0 %v1042
      %2415 = vmatpush1.msra.mxu0 %v1041
      %2416 = vmatprep.subr.mxu0 %v1044
      %2417 = vmatpush1.msra.mxu0 %v1043
      %2418 = vmatprep.subr.mxu0 %v1046
      %2419 = vmatpush1.msra.mxu0 %v1045
      %2420 = vmatprep.mubr.f32.mxu0 %v2348
      %2421 = vmatmul.mubr.f32.gmra.mrb[0].mxu0 %v2347
      %v2422 = vpop.f32.mrb[0].mxu0
      %v2423 = vadd.f32 0.0, %v2422
      %v2424 = vpop.f32.mrb[0].mxu0
      %v2425 = vadd.f32 0.0, %v2424
      %2426 = vmatprep.mubr.f32.mxu0 %v2351
      %2427 = vmatmul.mubr.f32.gmra.mrb[0].mxu0 %v2350
      %v2428 = vpop.f32.mrb[0].mxu0
      %v2429 = vadd.f32 0.0, %v2428
      %v2430 = vpop.f32.mrb[0].mxu0
      %v2431 = vadd.f32 0.0, %v2430
      %2432 = vmatprep.mubr.f32.mxu0 %v2354
      %2433 = vmatmul.mubr.f32.gmra.mrb[0].mxu0 %v2353
      %v2434 = vpop.f32.mrb[0].mxu0
      %v2435 = vadd.f32 0.0, %v2434
      %v2436 = vpop.f32.mrb[0].mxu0
      %v2437 = vadd.f32 0.0, %v2436
      %2438 = vdwg.mxu0
      %2439 = vmatprep.subr.mxu0 %v1048
      %2440 = vmatpush1.msra.mxu0 %v1047
      %2441 = vmatprep.subr.mxu0 %v1050
      %2442 = vmatpush1.msra.mxu0 %v1049
      %2443 = vmatprep.subr.mxu0 %v1052
      %2444 = vmatpush1.msra.mxu0 %v1051
      %2445 = vmatprep.subr.mxu0 %v1054
      %2446 = vmatpush1.msra.mxu0 %v1053
      %2447 = vmatprep.subr.mxu0 %v1056
      %2448 = vmatpush1.msra.mxu0 %v1055
      %2449 = vmatprep.subr.mxu0 %v1058
      %2450 = vmatpush1.msra.mxu0 %v1057
      %2451 = vmatprep.subr.mxu0 %v1060
      %2452 = vmatpush1.msra.mxu0 %v1059
      %2453 = vmatprep.subr.mxu0 %v1062
      %2454 = vmatpush1.msra.mxu0 %v1061
      %2455 = vmatprep.subr.mxu0 %v1064
      %2456 = vmatpush1.msra.mxu0 %v1063
      %2457 = vmatprep.subr.mxu0 %v1066
      %2458 = vmatpush1.msra.mxu0 %v1065
      %2459 = vmatprep.subr.mxu0 %v1068
      %2460 = vmatpush1.msra.mxu0 %v1067
      %2461 = vmatprep.subr.mxu0 %v1070
      %2462 = vmatpush1.msra.mxu0 %v1069
      %2463 = vmatprep.subr.mxu0 %v1072
      %2464 = vmatpush1.msra.mxu0 %v1071
      %2465 = vmatprep.subr.mxu0 %v1074
      %2466 = vmatpush1.msra.mxu0 %v1073
      %2467 = vmatprep.subr.mxu0 %v1076
      %2468 = vmatpush1.msra.mxu0 %v1075
      %2469 = vmatprep.subr.mxu0 %v1078
      %2470 = vmatpush1.msra.mxu0 %v1077
      %2471 = vmatprep.subr.mxu0 0.0
      %2472 = vmatpush1.msra.mxu0 0.0
      %2473 = vmatprep.subr.mxu0 0.0
      %2474 = vmatpush1.msra.mxu0 0.0
      %2475 = vmatprep.subr.mxu0 0.0
      %2476 = vmatpush1.msra.mxu0 0.0
      %2477 = vmatprep.subr.mxu0 0.0
      %2478 = vmatpush1.msra.mxu0 0.0
      %2479 = vmatprep.subr.mxu0 0.0
      %2480 = vmatpush1.msra.mxu0 0.0
      %2481 = vmatprep.subr.mxu0 0.0
      %2482 = vmatpush1.msra.mxu0 0.0
      %2483 = vmatprep.subr.mxu0 0.0
      %2484 = vmatpush1.msra.mxu0 0.0
      %2485 = vmatprep.subr.mxu0 0.0
      %2486 = vmatpush1.msra.mxu0 0.0
      %2487 = vmatprep.subr.mxu0 0.0
      %2488 = vmatpush1.msra.mxu0 0.0
      %2489 = vmatprep.subr.mxu0 0.0
      %2490 = vmatpush1.msra.mxu0 0.0
      %2491 = vmatprep.subr.mxu0 0.0
      %2492 = vmatpush1.msra.mxu0 0.0
      %2493 = vmatprep.subr.mxu0 0.0
      %2494 = vmatpush1.msra.mxu0 0.0
      %2495 = vmatprep.subr.mxu0 0.0
      %2496 = vmatpush1.msra.mxu0 0.0
      %2497 = vmatprep.subr.mxu0 0.0
      %2498 = vmatpush1.msra.mxu0 0.0
      %2499 = vmatprep.subr.mxu0 0.0
      %2500 = vmatpush1.msra.mxu0 0.0
      %2501 = vmatprep.subr.mxu0 0.0
      %2502 = vmatpush1.msra.mxu0 0.0
      %2503 = vmatprep.mubr.f32.mxu0 0.0
      %2504 = vmatmul.mubr.f32.gmra.mrb[0].mxu0 %v2349
      %v2505 = vpop.f32.mrb[0].mxu0
      %v2506 = vadd.f32 %v2423, %v2505
      %v2507 = vpop.f32.mrb[0].mxu0
      %v2508 = vadd.f32 %v2425, %v2507
      %2509 = vmatprep.mubr.f32.mxu0 0.0
      %2510 = vmatmul.mubr.f32.gmra.mrb[0].mxu0 %v2352
      %v2511 = vpop.f32.mrb[0].mxu0
      %v2512 = vadd.f32 %v2429, %v2511
      %v2513 = vpop.f32.mrb[0].mxu0
      %v2514 = vadd.f32 %v2431, %v2513
      %2515 = vmatprep.mubr.f32.mxu0 0.0
      %2516 = vmatmul.mubr.f32.gmra.mrb[0].mxu0 %v2355
      %v2517 = vpop.f32.mrb[0].mxu0
      %v2518 = vadd.f32 %v2435, %v2517
      %v2519 = vpop.f32.mrb[0].mxu0
      %v2520 = vadd.f32 %v2437, %v2519
      %2521 = vdwg.mxu0
      %2522 = vrot.lane.b32.xlu0 %v2506, 113
      %v2523 = vpop.permute.xlu0 %2522
      %2524 = vrot.lane.b32.xlu0 %v2512, 113
      %v2525 = vpop.permute.xlu0 %2524
      %2526 = vrot.lane.b32.xlu0 %v2518, 113
      %v2527 = vpop.permute.xlu0 %2526
      %2528 = vrot.lane.b32.xlu0 %v2508, 113
      %v2529 = vpop.permute.xlu0 %2528
      %2530 = vrot.lane.b32.xlu0 %v2514, 113
      %v2531 = vpop.permute.xlu0 %2530
      %2532 = vrot.lane.b32.xlu0 %v2520, 113
      %v2533 = vpop.permute.xlu0 %2532
      %vm2534 = vcmp.lt.s32.totalorder %v1267, 113
      %v2535 = vsel %vm2534, %v2523, %v2529
      %v2536 = vsel %vm2534, %v2525, %v2531
      %v2537 = vsel %vm2534, %v2527, %v2533
      %v2538 = vsel %vm2534, %v2529, %v2523
      %v2539 = vsel %vm2534, %v2531, %v2525
      %v2540 = vsel %vm2534, %v2533, %v2527
      %v2542 = vlaneseq
      %v2543 = vshrl.u32 %v2542, 7
      %v2544 = vsub.s32 0, %v2543
      %v2545 = vrot.slane %v417, %v2544
      %v2546 = vlaneseq
      %v2547 = vshrl.u32 %v2546, 7
      %v2548 = vsub.s32 1, %v2547
      %v2549 = vrot.slane %v417, %v2548
      %v2552 = vmul.f32 %v2535, %v2545
      %v2553 = vmul.f32 %v2538, %v2549
      %v2554 = vmul.f32 %v2536, %v2545
      %v2555 = vmul.f32 %v2539, %v2549
      %v2556 = vmul.f32 %v2537, %v2545
      %v2557 = vmul.f32 %v2540, %v2549
      %v2558 = vadd.f32 %v2340, %v2552
      %v2559 = vadd.f32 %v2341, %v2553
      %v2560 = vadd.f32 %v2342, %v2554
      %v2561 = vadd.f32 %v2343, %v2555
      %v2562 = vadd.f32 %v2344, %v2556
      %v2563 = vadd.f32 %v2345, %v2557
      %s2564 = scalar_lea.vmem %s4, 504
      %v2565 = vld [vmem:[%s2564] sm:$0xff]
      %v2566 = vld [vmem:[%s2564 + $0x8] sm:$0xff]
      %v2567 = vld [vmem:[%s2564 + $0x10] sm:$0xff]
      %v2568 = vld [vmem:[%s2564 + $0x18] sm:$0xff]
      %v2569 = vld [vmem:[%s2564 + $0x20] sm:$0xff]
      %v2570 = vld [vmem:[%s2564 + $0x28] sm:$0xff]
      %v2571 = vld [vmem:[%s2564 + $0x30] sm:$0xff]
      %v2572 = vld [vmem:[%s2564 + $0x38] sm:$0xff]
      %v2573 = vld [vmem:[%s2564 + $0x40] sm:$0xff]
      %2574 = vmatprep.subr.mxu0 %v984
      %2575 = vmatpush1.msra.mxu0 %v983
      %2576 = vmatprep.subr.mxu0 %v986
      %2577 = vmatpush1.msra.mxu0 %v985
      %2578 = vmatprep.subr.mxu0 %v988
      %2579 = vmatpush1.msra.mxu0 %v987
      %2580 = vmatprep.subr.mxu0 %v990
      %2581 = vmatpush1.msra.mxu0 %v989
      %2582 = vmatprep.subr.mxu0 %v992
      %2583 = vmatpush1.msra.mxu0 %v991
      %2584 = vmatprep.subr.mxu0 %v994
      %2585 = vmatpush1.msra.mxu0 %v993
      %2586 = vmatprep.subr.mxu0 %v996
      %2587 = vmatpush1.msra.mxu0 %v995
      %2588 = vmatprep.subr.mxu0 %v998
      %2589 = vmatpush1.msra.mxu0 %v997
      %2590 = vmatprep.subr.mxu0 %v1000
      %2591 = vmatpush1.msra.mxu0 %v999
      %2592 = vmatprep.subr.mxu0 %v1002
      %2593 = vmatpush1.msra.mxu0 %v1001
      %2594 = vmatprep.subr.mxu0 %v1004
      %2595 = vmatpush1.msra.mxu0 %v1003
      %2596 = vmatprep.subr.mxu0 %v1006
      %2597 = vmatpush1.msra.mxu0 %v1005
      %2598 = vmatprep.subr.mxu0 %v1008
      %2599 = vmatpush1.msra.mxu0 %v1007
      %2600 = vmatprep.subr.mxu0 %v1010
      %2601 = vmatpush1.msra.mxu0 %v1009
      %2602 = vmatprep.subr.mxu0 %v1012
      %2603 = vmatpush1.msra.mxu0 %v1011
      %2604 = vmatprep.subr.mxu0 %v1014
      %2605 = vmatpush1.msra.mxu0 %v1013
      %2606 = vmatprep.subr.mxu0 %v1016
      %2607 = vmatpush1.msra.mxu0 %v1015
      %2608 = vmatprep.subr.mxu0 %v1018
      %2609 = vmatpush1.msra.mxu0 %v1017
      %2610 = vmatprep.subr.mxu0 %v1020
      %2611 = vmatpush1.msra.mxu0 %v1019
      %2612 = vmatprep.subr.mxu0 %v1022
      %2613 = vmatpush1.msra.mxu0 %v1021
      %2614 = vmatprep.subr.mxu0 %v1024
      %2615 = vmatpush1.msra.mxu0 %v1023
      %2616 = vmatprep.subr.mxu0 %v1026
      %2617 = vmatpush1.msra.mxu0 %v1025
      %2618 = vmatprep.subr.mxu0 %v1028
      %2619 = vmatpush1.msra.mxu0 %v1027
      %2620 = vmatprep.subr.mxu0 %v1030
      %2621 = vmatpush1.msra.mxu0 %v1029
      %2622 = vmatprep.subr.mxu0 %v1032
      %2623 = vmatpush1.msra.mxu0 %v1031
      %2624 = vmatprep.subr.mxu0 %v1034
      %2625 = vmatpush1.msra.mxu0 %v1033
      %2626 = vmatprep.subr.mxu0 %v1036
      %2627 = vmatpush1.msra.mxu0 %v1035
      %2628 = vmatprep.subr.mxu0 %v1038
      %2629 = vmatpush1.msra.mxu0 %v1037
      %2630 = vmatprep.subr.mxu0 %v1040
      %2631 = vmatpush1.msra.mxu0 %v1039
      %2632 = vmatprep.subr.mxu0 %v1042
      %2633 = vmatpush1.msra.mxu0 %v1041
      %2634 = vmatprep.subr.mxu0 %v1044
      %2635 = vmatpush1.msra.mxu0 %v1043
      %2636 = vmatprep.subr.mxu0 %v1046
      %2637 = vmatpush1.msra.mxu0 %v1045
      %2638 = vmatprep.mubr.f32.mxu0 %v2566
      %2639 = vmatmul.mubr.f32.gmra.mrb[0].mxu0 %v2565
      %v2640 = vpop.f32.mrb[0].mxu0
      %v2641 = vadd.f32 0.0, %v2640
      %v2642 = vpop.f32.mrb[0].mxu0
      %v2643 = vadd.f32 0.0, %v2642
      %2644 = vmatprep.mubr.f32.mxu0 %v2569
      %2645 = vmatmul.mubr.f32.gmra.mrb[0].mxu0 %v2568
      %v2646 = vpop.f32.mrb[0].mxu0
      %v2647 = vadd.f32 0.0, %v2646
      %v2648 = vpop.f32.mrb[0].mxu0
      %v2649 = vadd.f32 0.0, %v2648
      %2650 = vmatprep.mubr.f32.mxu0 %v2572
      %2651 = vmatmul.mubr.f32.gmra.mrb[0].mxu0 %v2571
      %v2652 = vpop.f32.mrb[0].mxu0
      %v2653 = vadd.f32 0.0, %v2652
      %v2654 = vpop.f32.mrb[0].mxu0
      %v2655 = vadd.f32 0.0, %v2654
      %2656 = vdwg.mxu0
      %2657 = vmatprep.subr.mxu0 %v1048
      %2658 = vmatpush1.msra.mxu0 %v1047
      %2659 = vmatprep.subr.mxu0 %v1050
      %2660 = vmatpush1.msra.mxu0 %v1049
      %2661 = vmatprep.subr.mxu0 %v1052
      %2662 = vmatpush1.msra.mxu0 %v1051
      %2663 = vmatprep.subr.mxu0 %v1054
      %2664 = vmatpush1.msra.mxu0 %v1053
      %2665 = vmatprep.subr.mxu0 %v1056
      %2666 = vmatpush1.msra.mxu0 %v1055
      %2667 = vmatprep.subr.mxu0 %v1058
      %2668 = vmatpush1.msra.mxu0 %v1057
      %2669 = vmatprep.subr.mxu0 %v1060
      %2670 = vmatpush1.msra.mxu0 %v1059
      %2671 = vmatprep.subr.mxu0 %v1062
      %2672 = vmatpush1.msra.mxu0 %v1061
      %2673 = vmatprep.subr.mxu0 %v1064
      %2674 = vmatpush1.msra.mxu0 %v1063
      %2675 = vmatprep.subr.mxu0 %v1066
      %2676 = vmatpush1.msra.mxu0 %v1065
      %2677 = vmatprep.subr.mxu0 %v1068
      %2678 = vmatpush1.msra.mxu0 %v1067
      %2679 = vmatprep.subr.mxu0 %v1070
      %2680 = vmatpush1.msra.mxu0 %v1069
      %2681 = vmatprep.subr.mxu0 %v1072
      %2682 = vmatpush1.msra.mxu0 %v1071
      %2683 = vmatprep.subr.mxu0 %v1074
      %2684 = vmatpush1.msra.mxu0 %v1073
      %2685 = vmatprep.subr.mxu0 %v1076
      %2686 = vmatpush1.msra.mxu0 %v1075
      %2687 = vmatprep.subr.mxu0 %v1078
      %2688 = vmatpush1.msra.mxu0 %v1077
      %2689 = vmatprep.subr.mxu0 0.0
      %2690 = vmatpush1.msra.mxu0 0.0
      %2691 = vmatprep.subr.mxu0 0.0
      %2692 = vmatpush1.msra.mxu0 0.0
      %2693 = vmatprep.subr.mxu0 0.0
      %2694 = vmatpush1.msra.mxu0 0.0
      %2695 = vmatprep.subr.mxu0 0.0
      %2696 = vmatpush1.msra.mxu0 0.0
      %2697 = vmatprep.subr.mxu0 0.0
      %2698 = vmatpush1.msra.mxu0 0.0
      %2699 = vmatprep.subr.mxu0 0.0
      %2700 = vmatpush1.msra.mxu0 0.0
      %2701 = vmatprep.subr.mxu0 0.0
      %2702 = vmatpush1.msra.mxu0 0.0
      %2703 = vmatprep.subr.mxu0 0.0
      %2704 = vmatpush1.msra.mxu0 0.0
      %2705 = vmatprep.subr.mxu0 0.0
      %2706 = vmatpush1.msra.mxu0 0.0
      %2707 = vmatprep.subr.mxu0 0.0
      %2708 = vmatpush1.msra.mxu0 0.0
      %2709 = vmatprep.subr.mxu0 0.0
      %2710 = vmatpush1.msra.mxu0 0.0
      %2711 = vmatprep.subr.mxu0 0.0
      %2712 = vmatpush1.msra.mxu0 0.0
      %2713 = vmatprep.subr.mxu0 0.0
      %2714 = vmatpush1.msra.mxu0 0.0
      %2715 = vmatprep.subr.mxu0 0.0
      %2716 = vmatpush1.msra.mxu0 0.0
      %2717 = vmatprep.subr.mxu0 0.0
      %2718 = vmatpush1.msra.mxu0 0.0
      %2719 = vmatprep.subr.mxu0 0.0
      %2720 = vmatpush1.msra.mxu0 0.0
      %2721 = vmatprep.mubr.f32.mxu0 0.0
      %2722 = vmatmul.mubr.f32.gmra.mrb[0].mxu0 %v2567
      %v2723 = vpop.f32.mrb[0].mxu0
      %v2724 = vadd.f32 %v2641, %v2723
      %v2725 = vpop.f32.mrb[0].mxu0
      %v2726 = vadd.f32 %v2643, %v2725
      %2727 = vmatprep.mubr.f32.mxu0 0.0
      %2728 = vmatmul.mubr.f32.gmra.mrb[0].mxu0 %v2570
      %v2729 = vpop.f32.mrb[0].mxu0
      %v2730 = vadd.f32 %v2647, %v2729
      %v2731 = vpop.f32.mrb[0].mxu0
      %v2732 = vadd.f32 %v2649, %v2731
      %2733 = vmatprep.mubr.f32.mxu0 0.0
      %2734 = vmatmul.mubr.f32.gmra.mrb[0].mxu0 %v2573
      %v2735 = vpop.f32.mrb[0].mxu0
      %v2736 = vadd.f32 %v2653, %v2735
      %v2737 = vpop.f32.mrb[0].mxu0
      %v2738 = vadd.f32 %v2655, %v2737
      %2739 = vdwg.mxu0
      %2740 = vrot.lane.b32.xlu0 %v2724, 112
      %v2741 = vpop.permute.xlu0 %2740
      %2742 = vrot.lane.b32.xlu0 %v2730, 112
      %v2743 = vpop.permute.xlu0 %2742
      %2744 = vrot.lane.b32.xlu0 %v2736, 112
      %v2745 = vpop.permute.xlu0 %2744
      %2746 = vrot.lane.b32.xlu0 %v2726, 112
      %v2747 = vpop.permute.xlu0 %2746
      %2748 = vrot.lane.b32.xlu0 %v2732, 112
      %v2749 = vpop.permute.xlu0 %2748
      %2750 = vrot.lane.b32.xlu0 %v2738, 112
      %v2751 = vpop.permute.xlu0 %2750
      %vm2752 = vcmp.lt.s32.totalorder %v1267, 112
      %v2753 = vsel %vm2752, %v2741, %v2747
      %v2754 = vsel %vm2752, %v2743, %v2749
      %v2755 = vsel %vm2752, %v2745, %v2751
      %v2756 = vsel %vm2752, %v2747, %v2741
      %v2757 = vsel %vm2752, %v2749, %v2743
      %v2758 = vsel %vm2752, %v2751, %v2745
      %v2760 = vlaneseq
      %v2761 = vshrl.u32 %v2760, 7
      %v2762 = vsub.s32 0, %v2761
      %v2763 = vrot.slane %v419, %v2762
      %v2764 = vlaneseq
      %v2765 = vshrl.u32 %v2764, 7
      %v2766 = vsub.s32 1, %v2765
      %v2767 = vrot.slane %v419, %v2766
      %v2770 = vmul.f32 %v2753, %v2763
      %v2771 = vmul.f32 %v2756, %v2767
      %v2772 = vmul.f32 %v2754, %v2763
      %v2773 = vmul.f32 %v2757, %v2767
      %v2774 = vmul.f32 %v2755, %v2763
      %v2775 = vmul.f32 %v2758, %v2767
      %v2776 = vadd.f32 %v2558, %v2770
      %v2777 = vadd.f32 %v2559, %v2771
      %v2778 = vadd.f32 %v2560, %v2772
      %v2779 = vadd.f32 %v2561, %v2773
      %v2780 = vadd.f32 %v2562, %v2774
      %v2781 = vadd.f32 %v2563, %v2775
      %s2782 = scalar_lea.vmem %s4, 576
      %v2783 = vld [vmem:[%s2782] sm:$0xff]
      %v2784 = vld [vmem:[%s2782 + $0x8] sm:$0xff]
      %v2785 = vld [vmem:[%s2782 + $0x10] sm:$0xff]
      %v2786 = vld [vmem:[%s2782 + $0x18] sm:$0xff]
      %v2787 = vld [vmem:[%s2782 + $0x20] sm:$0xff]
      %v2788 = vld [vmem:[%s2782 + $0x28] sm:$0xff]
      %v2789 = vld [vmem:[%s2782 + $0x30] sm:$0xff]
      %v2790 = vld [vmem:[%s2782 + $0x38] sm:$0xff]
      %v2791 = vld [vmem:[%s2782 + $0x40] sm:$0xff]
      %2792 = vmatprep.subr.mxu0 %v984
      %2793 = vmatpush1.msra.mxu0 %v983
      %2794 = vmatprep.subr.mxu0 %v986
      %2795 = vmatpush1.msra.mxu0 %v985
      %2796 = vmatprep.subr.mxu0 %v988
      %2797 = vmatpush1.msra.mxu0 %v987
      %2798 = vmatprep.subr.mxu0 %v990
      %2799 = vmatpush1.msra.mxu0 %v989
      %2800 = vmatprep.subr.mxu0 %v992
      %2801 = vmatpush1.msra.mxu0 %v991
      %2802 = vmatprep.subr.mxu0 %v994
      %2803 = vmatpush1.msra.mxu0 %v993
      %2804 = vmatprep.subr.mxu0 %v996
      %2805 = vmatpush1.msra.mxu0 %v995
      %2806 = vmatprep.subr.mxu0 %v998
      %2807 = vmatpush1.msra.mxu0 %v997
      %2808 = vmatprep.subr.mxu0 %v1000
      %2809 = vmatpush1.msra.mxu0 %v999
      %2810 = vmatprep.subr.mxu0 %v1002
      %2811 = vmatpush1.msra.mxu0 %v1001
      %2812 = vmatprep.subr.mxu0 %v1004
      %2813 = vmatpush1.msra.mxu0 %v1003
      %2814 = vmatprep.subr.mxu0 %v1006
      %2815 = vmatpush1.msra.mxu0 %v1005
      %2816 = vmatprep.subr.mxu0 %v1008
      %2817 = vmatpush1.msra.mxu0 %v1007
      %2818 = vmatprep.subr.mxu0 %v1010
      %2819 = vmatpush1.msra.mxu0 %v1009
      %2820 = vmatprep.subr.mxu0 %v1012
      %2821 = vmatpush1.msra.mxu0 %v1011
      %2822 = vmatprep.subr.mxu0 %v1014
      %2823 = vmatpush1.msra.mxu0 %v1013
      %2824 = vmatprep.subr.mxu0 %v1016
      %2825 = vmatpush1.msra.mxu0 %v1015
      %2826 = vmatprep.subr.mxu0 %v1018
      %2827 = vmatpush1.msra.mxu0 %v1017
      %2828 = vmatprep.subr.mxu0 %v1020
      %2829 = vmatpush1.msra.mxu0 %v1019
      %2830 = vmatprep.subr.mxu0 %v1022
      %2831 = vmatpush1.msra.mxu0 %v1021
      %2832 = vmatprep.subr.mxu0 %v1024
      %2833 = vmatpush1.msra.mxu0 %v1023
      %2834 = vmatprep.subr.mxu0 %v1026
      %2835 = vmatpush1.msra.mxu0 %v1025
      %2836 = vmatprep.subr.mxu0 %v1028
      %2837 = vmatpush1.msra.mxu0 %v1027
      %2838 = vmatprep.subr.mxu0 %v1030
      %2839 = vmatpush1.msra.mxu0 %v1029
      %2840 = vmatprep.subr.mxu0 %v1032
      %2841 = vmatpush1.msra.mxu0 %v1031
      %2842 = vmatprep.subr.mxu0 %v1034
      %2843 = vmatpush1.msra.mxu0 %v1033
      %2844 = vmatprep.subr.mxu0 %v1036
      %2845 = vmatpush1.msra.mxu0 %v1035
      %2846 = vmatprep.subr.mxu0 %v1038
      %2847 = vmatpush1.msra.mxu0 %v1037
      %2848 = vmatprep.subr.mxu0 %v1040
      %2849 = vmatpush1.msra.mxu0 %v1039
      %2850 = vmatprep.subr.mxu0 %v1042
      %2851 = vmatpush1.msra.mxu0 %v1041
      %2852 = vmatprep.subr.mxu0 %v1044
      %2853 = vmatpush1.msra.mxu0 %v1043
      %2854 = vmatprep.subr.mxu0 %v1046
      %2855 = vmatpush1.msra.mxu0 %v1045
      %2856 = vmatprep.mubr.f32.mxu0 %v2784
      %2857 = vmatmul.mubr.f32.gmra.mrb[0].mxu0 %v2783
      %v2858 = vpop.f32.mrb[0].mxu0
      %v2859 = vadd.f32 0.0, %v2858
      %v2860 = vpop.f32.mrb[0].mxu0
      %v2861 = vadd.f32 0.0, %v2860
      %2862 = vmatprep.mubr.f32.mxu0 %v2787
      %2863 = vmatmul.mubr.f32.gmra.mrb[0].mxu0 %v2786
      %v2864 = vpop.f32.mrb[0].mxu0
      %v2865 = vadd.f32 0.0, %v2864
      %v2866 = vpop.f32.mrb[0].mxu0
      %v2867 = vadd.f32 0.0, %v2866
      %2868 = vmatprep.mubr.f32.mxu0 %v2790
      %2869 = vmatmul.mubr.f32.gmra.mrb[0].mxu0 %v2789
      %v2870 = vpop.f32.mrb[0].mxu0
      %v2871 = vadd.f32 0.0, %v2870
      %v2872 = vpop.f32.mrb[0].mxu0
      %v2873 = vadd.f32 0.0, %v2872
      %2874 = vdwg.mxu0
      %2875 = vmatprep.subr.mxu0 %v1048
      %2876 = vmatpush1.msra.mxu0 %v1047
      %2877 = vmatprep.subr.mxu0 %v1050
      %2878 = vmatpush1.msra.mxu0 %v1049
      %2879 = vmatprep.subr.mxu0 %v1052
      %2880 = vmatpush1.msra.mxu0 %v1051
      %2881 = vmatprep.subr.mxu0 %v1054
      %2882 = vmatpush1.msra.mxu0 %v1053
      %2883 = vmatprep.subr.mxu0 %v1056
      %2884 = vmatpush1.msra.mxu0 %v1055
      %2885 = vmatprep.subr.mxu0 %v1058
      %2886 = vmatpush1.msra.mxu0 %v1057
      %2887 = vmatprep.subr.mxu0 %v1060
      %2888 = vmatpush1.msra.mxu0 %v1059
      %2889 = vmatprep.subr.mxu0 %v1062
      %2890 = vmatpush1.msra.mxu0 %v1061
      %2891 = vmatprep.subr.mxu0 %v1064
      %2892 = vmatpush1.msra.mxu0 %v1063
      %2893 = vmatprep.subr.mxu0 %v1066
      %2894 = vmatpush1.msra.mxu0 %v1065
      %2895 = vmatprep.subr.mxu0 %v1068
      %2896 = vmatpush1.msra.mxu0 %v1067
      %2897 = vmatprep.subr.mxu0 %v1070
      %2898 = vmatpush1.msra.mxu0 %v1069
      %2899 = vmatprep.subr.mxu0 %v1072
      %2900 = vmatpush1.msra.mxu0 %v1071
      %2901 = vmatprep.subr.mxu0 %v1074
      %2902 = vmatpush1.msra.mxu0 %v1073
      %2903 = vmatprep.subr.mxu0 %v1076
      %2904 = vmatpush1.msra.mxu0 %v1075
      %2905 = vmatprep.subr.mxu0 %v1078
      %2906 = vmatpush1.msra.mxu0 %v1077
      %2907 = vmatprep.subr.mxu0 0.0
      %2908 = vmatpush1.msra.mxu0 0.0
      %2909 = vmatprep.subr.mxu0 0.0
      %2910 = vmatpush1.msra.mxu0 0.0
      %2911 = vmatprep.subr.mxu0 0.0
      %2912 = vmatpush1.msra.mxu0 0.0
      %2913 = vmatprep.subr.mxu0 0.0
      %2914 = vmatpush1.msra.mxu0 0.0
      %2915 = vmatprep.subr.mxu0 0.0
      %2916 = vmatpush1.msra.mxu0 0.0
      %2917 = vmatprep.subr.mxu0 0.0
      %2918 = vmatpush1.msra.mxu0 0.0
      %2919 = vmatprep.subr.mxu0 0.0
      %2920 = vmatpush1.msra.mxu0 0.0
      %2921 = vmatprep.subr.mxu0 0.0
      %2922 = vmatpush1.msra.mxu0 0.0
      %2923 = vmatprep.subr.mxu0 0.0
      %2924 = vmatpush1.msra.mxu0 0.0
      %2925 = vmatprep.subr.mxu0 0.0
      %2926 = vmatpush1.msra.mxu0 0.0
      %2927 = vmatprep.subr.mxu0 0.0
      %2928 = vmatpush1.msra.mxu0 0.0
      %2929 = vmatprep.subr.mxu0 0.0
      %2930 = vmatpush1.msra.mxu0 0.0
      %2931 = vmatprep.subr.mxu0 0.0
      %2932 = vmatpush1.msra.mxu0 0.0
      %2933 = vmatprep.subr.mxu0 0.0
      %2934 = vmatpush1.msra.mxu0 0.0
      %2935 = vmatprep.subr.mxu0 0.0
      %2936 = vmatpush1.msra.mxu0 0.0
      %2937 = vmatprep.subr.mxu0 0.0
      %2938 = vmatpush1.msra.mxu0 0.0
      %2939 = vmatprep.mubr.f32.mxu0 0.0
      %2940 = vmatmul.mubr.f32.gmra.mrb[0].mxu0 %v2785
      %v2941 = vpop.f32.mrb[0].mxu0
      %v2942 = vadd.f32 %v2859, %v2941
      %v2943 = vpop.f32.mrb[0].mxu0
      %v2944 = vadd.f32 %v2861, %v2943
      %2945 = vmatprep.mubr.f32.mxu0 0.0
      %2946 = vmatmul.mubr.f32.gmra.mrb[0].mxu0 %v2788
      %v2947 = vpop.f32.mrb[0].mxu0
      %v2948 = vadd.f32 %v2865, %v2947
      %v2949 = vpop.f32.mrb[0].mxu0
      %v2950 = vadd.f32 %v2867, %v2949
      %2951 = vmatprep.mubr.f32.mxu0 0.0
      %2952 = vmatmul.mubr.f32.gmra.mrb[0].mxu0 %v2791
      %v2953 = vpop.f32.mrb[0].mxu0
      %v2954 = vadd.f32 %v2871, %v2953
      %v2955 = vpop.f32.mrb[0].mxu0
      %v2956 = vadd.f32 %v2873, %v2955
      %2957 = vdwg.mxu0
      %2958 = vrot.lane.b32.xlu0 %v2942, 111
      %v2959 = vpop.permute.xlu0 %2958
      %2960 = vrot.lane.b32.xlu0 %v2948, 111
      %v2961 = vpop.permute.xlu0 %2960
      %2962 = vrot.lane.b32.xlu0 %v2954, 111
      %v2963 = vpop.permute.xlu0 %2962
      %2964 = vrot.lane.b32.xlu0 %v2944, 111
      %v2965 = vpop.permute.xlu0 %2964
      %2966 = vrot.lane.b32.xlu0 %v2950, 111
      %v2967 = vpop.permute.xlu0 %2966
      %2968 = vrot.lane.b32.xlu0 %v2956, 111
      %v2969 = vpop.permute.xlu0 %2968
      %vm2970 = vcmp.lt.s32.totalorder %v1267, 111
      %v2971 = vsel %vm2970, %v2959, %v2965
      %v2972 = vsel %vm2970, %v2961, %v2967
      %v2973 = vsel %vm2970, %v2963, %v2969
      %v2974 = vsel %vm2970, %v2965, %v2959
      %v2975 = vsel %vm2970, %v2967, %v2961
      %v2976 = vsel %vm2970, %v2969, %v2963
      %v2978 = vlaneseq
      %v2979 = vshrl.u32 %v2978, 7
      %v2980 = vsub.s32 0, %v2979
      %v2981 = vrot.slane %v421, %v2980
      %v2982 = vlaneseq
      %v2983 = vshrl.u32 %v2982, 7
      %v2984 = vsub.s32 1, %v2983
      %v2985 = vrot.slane %v421, %v2984
      %v2988 = vmul.f32 %v2971, %v2981
      %v2989 = vmul.f32 %v2974, %v2985
      %v2990 = vmul.f32 %v2972, %v2981
      %v2991 = vmul.f32 %v2975, %v2985
      %v2992 = vmul.f32 %v2973, %v2981
      %v2993 = vmul.f32 %v2976, %v2985
      %v2994 = vadd.f32 %v2776, %v2988
      %v2995 = vadd.f32 %v2777, %v2989
      %v2996 = vadd.f32 %v2778, %v2990
      %v2997 = vadd.f32 %v2779, %v2991
      %v2998 = vadd.f32 %v2780, %v2992
      %v2999 = vadd.f32 %v2781, %v2993
      %v3000 = vld [vmem:[%s5] sm:$0xff]
      %v3001 = vld [vmem:[%s5 + $0x8] sm:$0xff]
      %v3002 = vld [vmem:[%s5 + $0x10] sm:$0xff]
      %3004 = vset.pattern.permute.xlu0 0
      %3005 = vperm.xlu0 %3004, %v3000
      %v3006 = vpop.permute.xlu0 %3005
      %3009 = vset.pattern.permute.xlu0 0
      %3010 = vperm.xlu0 %3009, %v3001
      %v3011 = vpop.permute.xlu0 %3010
      %3014 = vset.pattern.permute.xlu0 0
      %3015 = vperm.xlu0 %3014, %v3002
      %v3016 = vpop.permute.xlu0 %3015
      %v3018 = vadd.f32 %v2994, %v3006
      %v3019 = vadd.f32 %v2995, %v3006
      %v3020 = vadd.f32 %v2996, %v3011
      %v3021 = vadd.f32 %v2997, %v3011
      %v3022 = vadd.f32 %v2998, %v3016
      %v3023 = vadd.f32 %v2999, %v3016
      %v3024 = vld [vmem:[%s401] sm:$0xff]
      %v3026 = vcombine.high %v3024, %v3024
      %v3028 = vsel %vm623, %v3024, 0.0
      %v3029 = vsel %vm623, %v3026, 0.0
      %v3030 = vadd.f32 %v3028, %v3029
      %3031 = vadd.xlane.f32.xlu0 %v3030
      %v3032 = vpop.xlane.xlu0 %3031
      %v3033 = vmul.f32 %v3032, 0.00390625
      %v3036 = vunpack.c.l.s4 839922192
      %v3037 = vunpack.c.0.s8 %v3036
      %v3038 = vlaneseq
      %v3039 = vshrl.u32 %v3038, 7
      %v3040 = vsub.s32 %v3037, %v3039
      %v3041 = vrot.slane %v3033, %v3040
      %v3043 = vsub.f32 %v3024, %v3041
      %v3044 = vmul.f32 %v3043, %v3043
      %v3046 = vcombine.high %v3044, %v3044
      %v3048 = vsel %vm623, %v3044, 0.0
      %v3049 = vsel %vm623, %v3046, 0.0
      %v3050 = vadd.f32 %v3048, %v3049
      %3051 = vadd.xlane.f32.xlu0 %v3050
      %v3052 = vpop.xlane.xlu0 %3051
      %v3053 = vmul.f32 %v3052, 0.00390625
      %v3054 = vadd.f32 %v3053, 1e-05
      %v3055 = vrsqrt.pop %v3054
      %v3058 = vunpack.c.l.s4 839922192
      %v3059 = vunpack.c.0.s8 %v3058
      %v3060 = vlaneseq
      %v3061 = vshrl.u32 %v3060, 7
      %v3062 = vsub.s32 %v3059, %v3061
      %v3063 = vrot.slane %v3055, %v3062
      %v3065 = vmul.f32 %v3043, %v3063
      %v3066 = vld [vmem:[%s10] sm:$0xff]
      %v3067 = vadd.f32 %v3022, 1.0
      %v3068 = vadd.f32 %v3023, 1.0
      %v3071 = vcombine.low %v3067, %v3068
      %v3073 = vmul.f32 %v3065, %v3071
      %v3076 = vcombine.high %v3022, %v3023
      %v3078 = vadd.f32 %v3073, %v3076
      %v3079 = vadd.f32 %v3018, 1.0
      %v3080 = vadd.f32 %v3019, 1.0
      %v3083 = vcombine.low %v3079, %v3080
      %v3085 = vmul.f32 %v3065, %v3083
      %v3088 = vcombine.high %v3018, %v3019
      %v3090 = vadd.f32 %v3085, %v3088
      %v3091 = vmul.f32 %v3090, 0.2
      %v3092 = vmax.f32 %v3090, %v3091
      %v3093 = vld [vmem:[%s6] sm:$0xf]
      %v3095 = vcombine.high %v3092, %v3092
      %vm3096 = vcmask 31744
      %v3098 = vsel %vm3096, %v3093, 0
      %v3100 = vsel %vm623, %v3092, 0
      %v3102 = vsel %vm623, %v3095, 0
      %3104 = vmatprep.subr.mxu0 %v3102
      %3105 = vmatpush1.msra.mxu0 %v3100
      %3106 = vmatprep.subr.mxu0 0.0
      %3107 = vmatpush1.msra.mxu0 0.0
      %3108 = vmatprep.subr.mxu0 0.0
      %3109 = vmatpush1.msra.mxu0 0.0
      %3110 = vmatprep.subr.mxu0 0.0
      %3111 = vmatpush1.msra.mxu0 0.0
      %3112 = vmatprep.subr.mxu0 0.0
      %3113 = vmatpush1.msra.mxu0 0.0
      %3114 = vmatprep.subr.mxu0 0.0
      %3115 = vmatpush1.msra.mxu0 0.0
      %3116 = vmatprep.subr.mxu0 0.0
      %3117 = vmatpush1.msra.mxu0 0.0
      %3118 = vmatprep.subr.mxu0 0.0
      %3119 = vmatpush1.msra.mxu0 0.0
      %3120 = vmatprep.subr.mxu0 0.0
      %3121 = vmatpush1.msra.mxu0 0.0
      %3122 = vmatprep.subr.mxu0 0.0
      %3123 = vmatpush1.msra.mxu0 0.0
      %3124 = vmatprep.subr.mxu0 0.0
      %3125 = vmatpush1.msra.mxu0 0.0
      %3126 = vmatprep.subr.mxu0 0.0
      %3127 = vmatpush1.msra.mxu0 0.0
      %3128 = vmatprep.subr.mxu0 0.0
      %3129 = vmatpush1.msra.mxu0 0.0
      %3130 = vmatprep.subr.mxu0 0.0
      %3131 = vmatpush1.msra.mxu0 0.0
      %3132 = vmatprep.subr.mxu0 0.0
      %3133 = vmatpush1.msra.mxu0 0.0
      %3134 = vmatprep.subr.mxu0 0.0
      %3135 = vmatpush1.msra.mxu0 0.0
      %3136 = vmatprep.subr.mxu0 0.0
      %3137 = vmatpush1.msra.mxu0 0.0
      %3138 = vmatprep.subr.mxu0 0.0
      %3139 = vmatpush1.msra.mxu0 0.0
      %3140 = vmatprep.subr.mxu0 0.0
      %3141 = vmatpush1.msra.mxu0 0.0
      %3142 = vmatprep.subr.mxu0 0.0
      %3143 = vmatpush1.msra.mxu0 0.0
      %3144 = vmatprep.subr.mxu0 0.0
      %3145 = vmatpush1.msra.mxu0 0.0
      %3146 = vmatprep.subr.mxu0 0.0
      %3147 = vmatpush1.msra.mxu0 0.0
      %3148 = vmatprep.subr.mxu0 0.0
      %3149 = vmatpush1.msra.mxu0 0.0
      %3150 = vmatprep.subr.mxu0 0.0
      %3151 = vmatpush1.msra.mxu0 0.0
      %3152 = vmatprep.subr.mxu0 0.0
      %3153 = vmatpush1.msra.mxu0 0.0
      %3154 = vmatprep.subr.mxu0 0.0
      %3155 = vmatpush1.msra.mxu0 0.0
      %3156 = vmatprep.subr.mxu0 0.0
      %3157 = vmatpush1.msra.mxu0 0.0
      %3158 = vmatprep.subr.mxu0 0.0
      %3159 = vmatpush1.msra.mxu0 0.0
      %3160 = vmatprep.subr.mxu0 0.0
      %3161 = vmatpush1.msra.mxu0 0.0
      %3162 = vmatprep.subr.mxu0 0.0
      %3163 = vmatpush1.msra.mxu0 0.0
      %3164 = vmatprep.subr.mxu0 0.0
      %3165 = vmatpush1.msra.mxu0 0.0
      %3166 = vmatprep.subr.mxu0 0.0
      %3167 = vmatpush1.msra.mxu0 0.0
      %3168 = vmatprep.mubr.f32.mxu0 0.0
      %3169 = vmatmul.mubr.f32.gmra.mrb[0].mxu0 %v3098
      %v3170 = vpop.f32.mrb[0].mxu0
      %v3171 = vadd.f32 0.0, %v3170
      %v3172 = vpop.f32.mrb[0].mxu0
      %v3173 = vadd.f32 0.0, %v3172
      %3174 = vdwg.mxu0
      %3175 = vrot.lane.b32.xlu0 %v3171, 17
      %v3176 = vpop.permute.xlu0 %3175
      %3177 = vrot.lane.b32.xlu0 %v3173, 17
      %v3178 = vpop.permute.xlu0 %3177
      %v3179 = vsel %vm1268, %v3176, %v3178
      %v3180 = vsel %vm1268, %v3178, %v3176
      %v3181 = vmul.f32 %v3180, %v1279
      %v3182 = vmul.f32 %v3179, %v1283
      %s3183 = scalar_lea.vmem %s6, 4
      %v3184 = vld [vmem:[%s3183] sm:$0xf]
      %v3186 = vsel %vm3096, %v3184, 0
      %3188 = vmatprep.subr.mxu0 %v3102
      %3189 = vmatpush1.msra.mxu0 %v3100
      %3190 = vmatprep.subr.mxu0 0.0
      %3191 = vmatpush1.msra.mxu0 0.0
      %3192 = vmatprep.subr.mxu0 0.0
      %3193 = vmatpush1.msra.mxu0 0.0
      %3194 = vmatprep.subr.mxu0 0.0
      %3195 = vmatpush1.msra.mxu0 0.0
      %3196 = vmatprep.subr.mxu0 0.0
      %3197 = vmatpush1.msra.mxu0 0.0
      %3198 = vmatprep.subr.mxu0 0.0
      %3199 = vmatpush1.msra.mxu0 0.0
      %3200 = vmatprep.subr.mxu0 0.0
      %3201 = vmatpush1.msra.mxu0 0.0
      %3202 = vmatprep.subr.mxu0 0.0
      %3203 = vmatpush1.msra.mxu0 0.0
      %3204 = vmatprep.subr.mxu0 0.0
      %3205 = vmatpush1.msra.mxu0 0.0
      %3206 = vmatprep.subr.mxu0 0.0
      %3207 = vmatpush1.msra.mxu0 0.0
      %3208 = vmatprep.subr.mxu0 0.0
      %3209 = vmatpush1.msra.mxu0 0.0
      %3210 = vmatprep.subr.mxu0 0.0
      %3211 = vmatpush1.msra.mxu0 0.0
      %3212 = vmatprep.subr.mxu0 0.0
      %3213 = vmatpush1.msra.mxu0 0.0
      %3214 = vmatprep.subr.mxu0 0.0
      %3215 = vmatpush1.msra.mxu0 0.0
      %3216 = vmatprep.subr.mxu0 0.0
      %3217 = vmatpush1.msra.mxu0 0.0
      %3218 = vmatprep.subr.mxu0 0.0
      %3219 = vmatpush1.msra.mxu0 0.0
      %3220 = vmatprep.subr.mxu0 0.0
      %3221 = vmatpush1.msra.mxu0 0.0
      %3222 = vmatprep.subr.mxu0 0.0
      %3223 = vmatpush1.msra.mxu0 0.0
      %3224 = vmatprep.subr.mxu0 0.0
      %3225 = vmatpush1.msra.mxu0 0.0
      %3226 = vmatprep.subr.mxu0 0.0
      %3227 = vmatpush1.msra.mxu0 0.0
      %3228 = vmatprep.subr.mxu0 0.0
      %3229 = vmatpush1.msra.mxu0 0.0
      %3230 = vmatprep.subr.mxu0 0.0
      %3231 = vmatpush1.msra.mxu0 0.0
      %3232 = vmatprep.subr.mxu0 0.0
      %3233 = vmatpush1.msra.mxu0 0.0
      %3234 = vmatprep.subr.mxu0 0.0
      %3235 = vmatpush1.msra.mxu0 0.0
      %3236 = vmatprep.subr.mxu0 0.0
      %3237 = vmatpush1.msra.mxu0 0.0
      %3238 = vmatprep.subr.mxu0 0.0
      %3239 = vmatpush1.msra.mxu0 0.0
      %3240 = vmatprep.subr.mxu0 0.0
      %3241 = vmatpush1.msra.mxu0 0.0
      %3242 = vmatprep.subr.mxu0 0.0
      %3243 = vmatpush1.msra.mxu0 0.0
      %3244 = vmatprep.subr.mxu0 0.0
      %3245 = vmatpush1.msra.mxu0 0.0
      %3246 = vmatprep.subr.mxu0 0.0
      %3247 = vmatpush1.msra.mxu0 0.0
      %3248 = vmatprep.subr.mxu0 0.0
      %3249 = vmatpush1.msra.mxu0 0.0
      %3250 = vmatprep.subr.mxu0 0.0
      %3251 = vmatpush1.msra.mxu0 0.0
      %3252 = vmatprep.mubr.f32.mxu0 0.0
      %3253 = vmatmul.mubr.f32.gmra.mrb[0].mxu0 %v3186
      %v3254 = vpop.f32.mrb[0].mxu0
      %v3255 = vadd.f32 0.0, %v3254
      %v3256 = vpop.f32.mrb[0].mxu0
      %v3257 = vadd.f32 0.0, %v3256
      %3258 = vdwg.mxu0
      %3259 = vrot.lane.b32.xlu0 %v3255, 16
      %v3260 = vpop.permute.xlu0 %3259
      %3261 = vrot.lane.b32.xlu0 %v3257, 16
      %v3262 = vpop.permute.xlu0 %3261
      %v3263 = vsel %vm1480, %v3260, %v3262
      %v3264 = vsel %vm1480, %v3262, %v3260
      %v3265 = vmul.f32 %v3264, %v1491
      %v3266 = vmul.f32 %v3263, %v1495
      %v3267 = vadd.f32 %v3181, %v3265
      %v3268 = vadd.f32 %v3182, %v3266
      %s3269 = scalar_lea.vmem %s6, 8
      %v3270 = vld [vmem:[%s3269] sm:$0xf]
      %v3272 = vsel %vm3096, %v3270, 0
      %3274 = vmatprep.subr.mxu0 %v3102
      %3275 = vmatpush1.msra.mxu0 %v3100
      %3276 = vmatprep.subr.mxu0 0.0
      %3277 = vmatpush1.msra.mxu0 0.0
      %3278 = vmatprep.subr.mxu0 0.0
      %3279 = vmatpush1.msra.mxu0 0.0
      %3280 = vmatprep.subr.mxu0 0.0
      %3281 = vmatpush1.msra.mxu0 0.0
      %3282 = vmatprep.subr.mxu0 0.0
      %3283 = vmatpush1.msra.mxu0 0.0
      %3284 = vmatprep.subr.mxu0 0.0
      %3285 = vmatpush1.msra.mxu0 0.0
      %3286 = vmatprep.subr.mxu0 0.0
      %3287 = vmatpush1.msra.mxu0 0.0
      %3288 = vmatprep.subr.mxu0 0.0
      %3289 = vmatpush1.msra.mxu0 0.0
      %3290 = vmatprep.subr.mxu0 0.0
      %3291 = vmatpush1.msra.mxu0 0.0
      %3292 = vmatprep.subr.mxu0 0.0
      %3293 = vmatpush1.msra.mxu0 0.0
      %3294 = vmatprep.subr.mxu0 0.0
      %3295 = vmatpush1.msra.mxu0 0.0
      %3296 = vmatprep.subr.mxu0 0.0
      %3297 = vmatpush1.msra.mxu0 0.0
      %3298 = vmatprep.subr.mxu0 0.0
      %3299 = vmatpush1.msra.mxu0 0.0
      %3300 = vmatprep.subr.mxu0 0.0
      %3301 = vmatpush1.msra.mxu0 0.0
      %3302 = vmatprep.subr.mxu0 0.0
      %3303 = vmatpush1.msra.mxu0 0.0
      %3304 = vmatprep.subr.mxu0 0.0
      %3305 = vmatpush1.msra.mxu0 0.0
      %3306 = vmatprep.subr.mxu0 0.0
      %3307 = vmatpush1.msra.mxu0 0.0
      %3308 = vmatprep.subr.mxu0 0.0
      %3309 = vmatpush1.msra.mxu0 0.0
      %3310 = vmatprep.subr.mxu0 0.0
      %3311 = vmatpush1.msra.mxu0 0.0
      %3312 = vmatprep.subr.mxu0 0.0
      %3313 = vmatpush1.msra.mxu0 0.0
      %3314 = vmatprep.subr.mxu0 0.0
      %3315 = vmatpush1.msra.mxu0 0.0
      %3316 = vmatprep.subr.mxu0 0.0
      %3317 = vmatpush1.msra.mxu0 0.0
      %3318 = vmatprep.subr.mxu0 0.0
      %3319 = vmatpush1.msra.mxu0 0.0
      %3320 = vmatprep.subr.mxu0 0.0
      %3321 = vmatpush1.msra.mxu0 0.0
      %3322 = vmatprep.subr.mxu0 0.0
      %3323 = vmatpush1.msra.mxu0 0.0
      %3324 = vmatprep.subr.mxu0 0.0
      %3325 = vmatpush1.msra.mxu0 0.0
      %3326 = vmatprep.subr.mxu0 0.0
      %3327 = vmatpush1.msra.mxu0 0.0
      %3328 = vmatprep.subr.mxu0 0.0
      %3329 = vmatpush1.msra.mxu0 0.0
      %3330 = vmatprep.subr.mxu0 0.0
      %3331 = vmatpush1.msra.mxu0 0.0
      %3332 = vmatprep.subr.mxu0 0.0
      %3333 = vmatpush1.msra.mxu0 0.0
      %3334 = vmatprep.subr.mxu0 0.0
      %3335 = vmatpush1.msra.mxu0 0.0
      %3336 = vmatprep.subr.mxu0 0.0
      %3337 = vmatpush1.msra.mxu0 0.0
      %3338 = vmatprep.mubr.f32.mxu0 0.0
      %3339 = vmatmul.mubr.f32.gmra.mrb[0].mxu0 %v3272
      %v3340 = vpop.f32.mrb[0].mxu0
      %v3341 = vadd.f32 0.0, %v3340
      %v3342 = vpop.f32.mrb[0].mxu0
      %v3343 = vadd.f32 0.0, %v3342
      %3344 = vdwg.mxu0
      %3345 = vrot.lane.b32.xlu0 %v3341, 15
      %v3346 = vpop.permute.xlu0 %3345
      %3347 = vrot.lane.b32.xlu0 %v3343, 15
      %v3348 = vpop.permute.xlu0 %3347
      %v3349 = vsel %vm1698, %v3346, %v3348
      %v3350 = vsel %vm1698, %v3348, %v3346
      %v3351 = vmul.f32 %v3350, %v1709
      %v3352 = vmul.f32 %v3349, %v1713
      %v3353 = vadd.f32 %v3267, %v3351
      %v3354 = vadd.f32 %v3268, %v3352
      %s3355 = scalar_lea.vmem %s6, 12
      %v3356 = vld [vmem:[%s3355] sm:$0xf]
      %v3358 = vsel %vm3096, %v3356, 0
      %3360 = vmatprep.subr.mxu0 %v3102
      %3361 = vmatpush1.msra.mxu0 %v3100
      %3362 = vmatprep.subr.mxu0 0.0
      %3363 = vmatpush1.msra.mxu0 0.0
      %3364 = vmatprep.subr.mxu0 0.0
      %3365 = vmatpush1.msra.mxu0 0.0
      %3366 = vmatprep.subr.mxu0 0.0
      %3367 = vmatpush1.msra.mxu0 0.0
      %3368 = vmatprep.subr.mxu0 0.0
      %3369 = vmatpush1.msra.mxu0 0.0
      %3370 = vmatprep.subr.mxu0 0.0
      %3371 = vmatpush1.msra.mxu0 0.0
      %3372 = vmatprep.subr.mxu0 0.0
      %3373 = vmatpush1.msra.mxu0 0.0
      %3374 = vmatprep.subr.mxu0 0.0
      %3375 = vmatpush1.msra.mxu0 0.0
      %3376 = vmatprep.subr.mxu0 0.0
      %3377 = vmatpush1.msra.mxu0 0.0
      %3378 = vmatprep.subr.mxu0 0.0
      %3379 = vmatpush1.msra.mxu0 0.0
      %3380 = vmatprep.subr.mxu0 0.0
      %3381 = vmatpush1.msra.mxu0 0.0
      %3382 = vmatprep.subr.mxu0 0.0
      %3383 = vmatpush1.msra.mxu0 0.0
      %3384 = vmatprep.subr.mxu0 0.0
      %3385 = vmatpush1.msra.mxu0 0.0
      %3386 = vmatprep.subr.mxu0 0.0
      %3387 = vmatpush1.msra.mxu0 0.0
      %3388 = vmatprep.subr.mxu0 0.0
      %3389 = vmatpush1.msra.mxu0 0.0
      %3390 = vmatprep.subr.mxu0 0.0
      %3391 = vmatpush1.msra.mxu0 0.0
      %3392 = vmatprep.subr.mxu0 0.0
      %3393 = vmatpush1.msra.mxu0 0.0
      %3394 = vmatprep.subr.mxu0 0.0
      %3395 = vmatpush1.msra.mxu0 0.0
      %3396 = vmatprep.subr.mxu0 0.0
      %3397 = vmatpush1.msra.mxu0 0.0
      %3398 = vmatprep.subr.mxu0 0.0
      %3399 = vmatpush1.msra.mxu0 0.0
      %3400 = vmatprep.subr.mxu0 0.0
      %3401 = vmatpush1.msra.mxu0 0.0
      %3402 = vmatprep.subr.mxu0 0.0
      %3403 = vmatpush1.msra.mxu0 0.0
      %3404 = vmatprep.subr.mxu0 0.0
      %3405 = vmatpush1.msra.mxu0 0.0
      %3406 = vmatprep.subr.mxu0 0.0
      %3407 = vmatpush1.msra.mxu0 0.0
      %3408 = vmatprep.subr.mxu0 0.0
      %3409 = vmatpush1.msra.mxu0 0.0
      %3410 = vmatprep.subr.mxu0 0.0
      %3411 = vmatpush1.msra.mxu0 0.0
      %3412 = vmatprep.subr.mxu0 0.0
      %3413 = vmatpush1.msra.mxu0 0.0
      %3414 = vmatprep.subr.mxu0 0.0
      %3415 = vmatpush1.msra.mxu0 0.0
      %3416 = vmatprep.subr.mxu0 0.0
      %3417 = vmatpush1.msra.mxu0 0.0
      %3418 = vmatprep.subr.mxu0 0.0
      %3419 = vmatpush1.msra.mxu0 0.0
      %3420 = vmatprep.subr.mxu0 0.0
      %3421 = vmatpush1.msra.mxu0 0.0
      %3422 = vmatprep.subr.mxu0 0.0
      %3423 = vmatpush1.msra.mxu0 0.0
      %3424 = vmatprep.mubr.f32.mxu0 0.0
      %3425 = vmatmul.mubr.f32.gmra.mrb[0].mxu0 %v3358
      %v3426 = vpop.f32.mrb[0].mxu0
      %v3427 = vadd.f32 0.0, %v3426
      %v3428 = vpop.f32.mrb[0].mxu0
      %v3429 = vadd.f32 0.0, %v3428
      %3430 = vdwg.mxu0
      %3431 = vrot.lane.b32.xlu0 %v3427, 1
      %v3432 = vpop.permute.xlu0 %3431
      %3433 = vrot.lane.b32.xlu0 %v3429, 1
      %v3434 = vpop.permute.xlu0 %3433
      %v3435 = vsel %vm1916, %v3432, %v3434
      %v3436 = vsel %vm1916, %v3434, %v3432
      %v3437 = vmul.f32 %v3436, %v1927
      %v3438 = vmul.f32 %v3435, %v1931
      %v3439 = vadd.f32 %v3353, %v3437
      %v3440 = vadd.f32 %v3354, %v3438
      %s3441 = scalar_lea.vmem %s6, 16
      %v3442 = vld [vmem:[%s3441] sm:$0xf]
      %v3444 = vsel %vm3096, %v3442, 0
      %3446 = vmatprep.subr.mxu0 %v3102
      %3447 = vmatpush1.msra.mxu0 %v3100
      %3448 = vmatprep.subr.mxu0 0.0
      %3449 = vmatpush1.msra.mxu0 0.0
      %3450 = vmatprep.subr.mxu0 0.0
      %3451 = vmatpush1.msra.mxu0 0.0
      %3452 = vmatprep.subr.mxu0 0.0
      %3453 = vmatpush1.msra.mxu0 0.0
      %3454 = vmatprep.subr.mxu0 0.0
      %3455 = vmatpush1.msra.mxu0 0.0
      %3456 = vmatprep.subr.mxu0 0.0
      %3457 = vmatpush1.msra.mxu0 0.0
      %3458 = vmatprep.subr.mxu0 0.0
      %3459 = vmatpush1.msra.mxu0 0.0
      %3460 = vmatprep.subr.mxu0 0.0
      %3461 = vmatpush1.msra.mxu0 0.0
      %3462 = vmatprep.subr.mxu0 0.0
      %3463 = vmatpush1.msra.mxu0 0.0
      %3464 = vmatprep.subr.mxu0 0.0
      %3465 = vmatpush1.msra.mxu0 0.0
      %3466 = vmatprep.subr.mxu0 0.0
      %3467 = vmatpush1.msra.mxu0 0.0
      %3468 = vmatprep.subr.mxu0 0.0
      %3469 = vmatpush1.msra.mxu0 0.0
      %3470 = vmatprep.subr.mxu0 0.0
      %3471 = vmatpush1.msra.mxu0 0.0
      %3472 = vmatprep.subr.mxu0 0.0
      %3473 = vmatpush1.msra.mxu0 0.0
      %3474 = vmatprep.subr.mxu0 0.0
      %3475 = vmatpush1.msra.mxu0 0.0
      %3476 = vmatprep.subr.mxu0 0.0
      %3477 = vmatpush1.msra.mxu0 0.0
      %3478 = vmatprep.subr.mxu0 0.0
      %3479 = vmatpush1.msra.mxu0 0.0
      %3480 = vmatprep.subr.mxu0 0.0
      %3481 = vmatpush1.msra.mxu0 0.0
      %3482 = vmatprep.subr.mxu0 0.0
      %3483 = vmatpush1.msra.mxu0 0.0
      %3484 = vmatprep.subr.mxu0 0.0
      %3485 = vmatpush1.msra.mxu0 0.0
      %3486 = vmatprep.subr.mxu0 0.0
      %3487 = vmatpush1.msra.mxu0 0.0
      %3488 = vmatprep.subr.mxu0 0.0
      %3489 = vmatpush1.msra.mxu0 0.0
      %3490 = vmatprep.subr.mxu0 0.0
      %3491 = vmatpush1.msra.mxu0 0.0
      %3492 = vmatprep.subr.mxu0 0.0
      %3493 = vmatpush1.msra.mxu0 0.0
      %3494 = vmatprep.subr.mxu0 0.0
      %3495 = vmatpush1.msra.mxu0 0.0
      %3496 = vmatprep.subr.mxu0 0.0
      %3497 = vmatpush1.msra.mxu0 0.0
      %3498 = vmatprep.subr.mxu0 0.0
      %3499 = vmatpush1.msra.mxu0 0.0
      %3500 = vmatprep.subr.mxu0 0.0
      %3501 = vmatpush1.msra.mxu0 0.0
      %3502 = vmatprep.subr.mxu0 0.0
      %3503 = vmatpush1.msra.mxu0 0.0
      %3504 = vmatprep.subr.mxu0 0.0
      %3505 = vmatpush1.msra.mxu0 0.0
      %3506 = vmatprep.subr.mxu0 0.0
      %3507 = vmatpush1.msra.mxu0 0.0
      %3508 = vmatprep.subr.mxu0 0.0
      %3509 = vmatpush1.msra.mxu0 0.0
      %3510 = vmatprep.mubr.f32.mxu0 0.0
      %3511 = vmatmul.mubr.f32.gmra.mrb[0].mxu0 %v3444
      %v3512 = vpop.f32.mrb[0].mxu0
      %v3513 = vadd.f32 0.0, %v3512
      %v3514 = vpop.f32.mrb[0].mxu0
      %v3515 = vadd.f32 0.0, %v3514
      %3516 = vdwg.mxu0
      %v3517 = vadd.f32 %v3439, %v3513
      %v3518 = vadd.f32 %v3440, %v3515
      %s3519 = scalar_lea.vmem %s6, 20
      %v3520 = vld [vmem:[%s3519] sm:$0xf]
      %v3522 = vsel %vm3096, %v3520, 0
      %3524 = vmatprep.subr.mxu0 %v3102
      %3525 = vmatpush1.msra.mxu0 %v3100
      %3526 = vmatprep.subr.mxu0 0.0
      %3527 = vmatpush1.msra.mxu0 0.0
      %3528 = vmatprep.subr.mxu0 0.0
      %3529 = vmatpush1.msra.mxu0 0.0
      %3530 = vmatprep.subr.mxu0 0.0
      %3531 = vmatpush1.msra.mxu0 0.0
      %3532 = vmatprep.subr.mxu0 0.0
      %3533 = vmatpush1.msra.mxu0 0.0
      %3534 = vmatprep.subr.mxu0 0.0
      %3535 = vmatpush1.msra.mxu0 0.0
      %3536 = vmatprep.subr.mxu0 0.0
      %3537 = vmatpush1.msra.mxu0 0.0
      %3538 = vmatprep.subr.mxu0 0.0
      %3539 = vmatpush1.msra.mxu0 0.0
      %3540 = vmatprep.subr.mxu0 0.0
      %3541 = vmatpush1.msra.mxu0 0.0
      %3542 = vmatprep.subr.mxu0 0.0
      %3543 = vmatpush1.msra.mxu0 0.0
      %3544 = vmatprep.subr.mxu0 0.0
      %3545 = vmatpush1.msra.mxu0 0.0
      %3546 = vmatprep.subr.mxu0 0.0
      %3547 = vmatpush1.msra.mxu0 0.0
      %3548 = vmatprep.subr.mxu0 0.0
      %3549 = vmatpush1.msra.mxu0 0.0
      %3550 = vmatprep.subr.mxu0 0.0
      %3551 = vmatpush1.msra.mxu0 0.0
      %3552 = vmatprep.subr.mxu0 0.0
      %3553 = vmatpush1.msra.mxu0 0.0
      %3554 = vmatprep.subr.mxu0 0.0
      %3555 = vmatpush1.msra.mxu0 0.0
      %3556 = vmatprep.subr.mxu0 0.0
      %3557 = vmatpush1.msra.mxu0 0.0
      %3558 = vmatprep.subr.mxu0 0.0
      %3559 = vmatpush1.msra.mxu0 0.0
      %3560 = vmatprep.subr.mxu0 0.0
      %3561 = vmatpush1.msra.mxu0 0.0
      %3562 = vmatprep.subr.mxu0 0.0
      %3563 = vmatpush1.msra.mxu0 0.0
      %3564 = vmatprep.subr.mxu0 0.0
      %3565 = vmatpush1.msra.mxu0 0.0
      %3566 = vmatprep.subr.mxu0 0.0
      %3567 = vmatpush1.msra.mxu0 0.0
      %3568 = vmatprep.subr.mxu0 0.0
      %3569 = vmatpush1.msra.mxu0 0.0
      %3570 = vmatprep.subr.mxu0 0.0
      %3571 = vmatpush1.msra.mxu0 0.0
      %3572 = vmatprep.subr.mxu0 0.0
      %3573 = vmatpush1.msra.mxu0 0.0
      %3574 = vmatprep.subr.mxu0 0.0
      %3575 = vmatpush1.msra.mxu0 0.0
      %3576 = vmatprep.subr.mxu0 0.0
      %3577 = vmatpush1.msra.mxu0 0.0
      %3578 = vmatprep.subr.mxu0 0.0
      %3579 = vmatpush1.msra.mxu0 0.0
      %3580 = vmatprep.subr.mxu0 0.0
      %3581 = vmatpush1.msra.mxu0 0.0
      %3582 = vmatprep.subr.mxu0 0.0
      %3583 = vmatpush1.msra.mxu0 0.0
      %3584 = vmatprep.subr.mxu0 0.0
      %3585 = vmatpush1.msra.mxu0 0.0
      %3586 = vmatprep.subr.mxu0 0.0
      %3587 = vmatpush1.msra.mxu0 0.0
      %3588 = vmatprep.mubr.f32.mxu0 0.0
      %3589 = vmatmul.mubr.f32.gmra.mrb[0].mxu0 %v3522
      %v3590 = vpop.f32.mrb[0].mxu0
      %v3591 = vadd.f32 0.0, %v3590
      %v3592 = vpop.f32.mrb[0].mxu0
      %v3593 = vadd.f32 0.0, %v3592
      %3594 = vdwg.mxu0
      %3595 = vrot.lane.b32.xlu0 %v3591, 127
      %v3596 = vpop.permute.xlu0 %3595
      %3597 = vrot.lane.b32.xlu0 %v3593, 127
      %v3598 = vpop.permute.xlu0 %3597
      %v3599 = vsel %vm2316, %v3596, %v3598
      %v3600 = vsel %vm2316, %v3598, %v3596
      %v3601 = vmul.f32 %v3599, %v2327
      %v3602 = vmul.f32 %v3600, %v2331
      %v3603 = vadd.f32 %v3517, %v3601
      %v3604 = vadd.f32 %v3518, %v3602
      %s3605 = scalar_lea.vmem %s6, 24
      %v3606 = vld [vmem:[%s3605] sm:$0xf]
      %v3608 = vsel %vm3096, %v3606, 0
      %3610 = vmatprep.subr.mxu0 %v3102
      %3611 = vmatpush1.msra.mxu0 %v3100
      %3612 = vmatprep.subr.mxu0 0.0
      %3613 = vmatpush1.msra.mxu0 0.0
      %3614 = vmatprep.subr.mxu0 0.0
      %3615 = vmatpush1.msra.mxu0 0.0
      %3616 = vmatprep.subr.mxu0 0.0
      %3617 = vmatpush1.msra.mxu0 0.0
      %3618 = vmatprep.subr.mxu0 0.0
      %3619 = vmatpush1.msra.mxu0 0.0
      %3620 = vmatprep.subr.mxu0 0.0
      %3621 = vmatpush1.msra.mxu0 0.0
      %3622 = vmatprep.subr.mxu0 0.0
      %3623 = vmatpush1.msra.mxu0 0.0
      %3624 = vmatprep.subr.mxu0 0.0
      %3625 = vmatpush1.msra.mxu0 0.0
      %3626 = vmatprep.subr.mxu0 0.0
      %3627 = vmatpush1.msra.mxu0 0.0
      %3628 = vmatprep.subr.mxu0 0.0
      %3629 = vmatpush1.msra.mxu0 0.0
      %3630 = vmatprep.subr.mxu0 0.0
      %3631 = vmatpush1.msra.mxu0 0.0
      %3632 = vmatprep.subr.mxu0 0.0
      %3633 = vmatpush1.msra.mxu0 0.0
      %3634 = vmatprep.subr.mxu0 0.0
      %3635 = vmatpush1.msra.mxu0 0.0
      %3636 = vmatprep.subr.mxu0 0.0
      %3637 = vmatpush1.msra.mxu0 0.0
      %3638 = vmatprep.subr.mxu0 0.0
      %3639 = vmatpush1.msra.mxu0 0.0
      %3640 = vmatprep.subr.mxu0 0.0
      %3641 = vmatpush1.msra.mxu0 0.0
      %3642 = vmatprep.subr.mxu0 0.0
      %3643 = vmatpush1.msra.mxu0 0.0
      %3644 = vmatprep.subr.mxu0 0.0
      %3645 = vmatpush1.msra.mxu0 0.0
      %3646 = vmatprep.subr.mxu0 0.0
      %3647 = vmatpush1.msra.mxu0 0.0
      %3648 = vmatprep.subr.mxu0 0.0
      %3649 = vmatpush1.msra.mxu0 0.0
      %3650 = vmatprep.subr.mxu0 0.0
      %3651 = vmatpush1.msra.mxu0 0.0
      %3652 = vmatprep.subr.mxu0 0.0
      %3653 = vmatpush1.msra.mxu0 0.0
      %3654 = vmatprep.subr.mxu0 0.0
      %3655 = vmatpush1.msra.mxu0 0.0
      %3656 = vmatprep.subr.mxu0 0.0
      %3657 = vmatpush1.msra.mxu0 0.0
      %3658 = vmatprep.subr.mxu0 0.0
      %3659 = vmatpush1.msra.mxu0 0.0
      %3660 = vmatprep.subr.mxu0 0.0
      %3661 = vmatpush1.msra.mxu0 0.0
      %3662 = vmatprep.subr.mxu0 0.0
      %3663 = vmatpush1.msra.mxu0 0.0
      %3664 = vmatprep.subr.mxu0 0.0
      %3665 = vmatpush1.msra.mxu0 0.0
      %3666 = vmatprep.subr.mxu0 0.0
      %3667 = vmatpush1.msra.mxu0 0.0
      %3668 = vmatprep.subr.mxu0 0.0
      %3669 = vmatpush1.msra.mxu0 0.0
      %3670 = vmatprep.subr.mxu0 0.0
      %3671 = vmatpush1.msra.mxu0 0.0
      %3672 = vmatprep.subr.mxu0 0.0
      %3673 = vmatpush1.msra.mxu0 0.0
      %3674 = vmatprep.mubr.f32.mxu0 0.0
      %3675 = vmatmul.mubr.f32.gmra.mrb[0].mxu0 %v3608
      %v3676 = vpop.f32.mrb[0].mxu0
      %v3677 = vadd.f32 0.0, %v3676
      %v3678 = vpop.f32.mrb[0].mxu0
      %v3679 = vadd.f32 0.0, %v3678
      %3680 = vdwg.mxu0
      %3681 = vrot.lane.b32.xlu0 %v3677, 113
      %v3682 = vpop.permute.xlu0 %3681
      %3683 = vrot.lane.b32.xlu0 %v3679, 113
      %v3684 = vpop.permute.xlu0 %3683
      %v3685 = vsel %vm2534, %v3682, %v3684
      %v3686 = vsel %vm2534, %v3684, %v3682
      %v3687 = vmul.f32 %v3685, %v2545
      %v3688 = vmul.f32 %v3686, %v2549
      %v3689 = vadd.f32 %v3603, %v3687
      %v3690 = vadd.f32 %v3604, %v3688
      %s3691 = scalar_lea.vmem %s6, 28
      %v3692 = vld [vmem:[%s3691] sm:$0xf]
      %v3694 = vsel %vm3096, %v3692, 0
      %3696 = vmatprep.subr.mxu0 %v3102
      %3697 = vmatpush1.msra.mxu0 %v3100
      %3698 = vmatprep.subr.mxu0 0.0
      %3699 = vmatpush1.msra.mxu0 0.0
      %3700 = vmatprep.subr.mxu0 0.0
      %3701 = vmatpush1.msra.mxu0 0.0
      %3702 = vmatprep.subr.mxu0 0.0
      %3703 = vmatpush1.msra.mxu0 0.0
      %3704 = vmatprep.subr.mxu0 0.0
      %3705 = vmatpush1.msra.mxu0 0.0
      %3706 = vmatprep.subr.mxu0 0.0
      %3707 = vmatpush1.msra.mxu0 0.0
      %3708 = vmatprep.subr.mxu0 0.0
      %3709 = vmatpush1.msra.mxu0 0.0
      %3710 = vmatprep.subr.mxu0 0.0
      %3711 = vmatpush1.msra.mxu0 0.0
      %3712 = vmatprep.subr.mxu0 0.0
      %3713 = vmatpush1.msra.mxu0 0.0
      %3714 = vmatprep.subr.mxu0 0.0
      %3715 = vmatpush1.msra.mxu0 0.0
      %3716 = vmatprep.subr.mxu0 0.0
      %3717 = vmatpush1.msra.mxu0 0.0
      %3718 = vmatprep.subr.mxu0 0.0
      %3719 = vmatpush1.msra.mxu0 0.0
      %3720 = vmatprep.subr.mxu0 0.0
      %3721 = vmatpush1.msra.mxu0 0.0
      %3722 = vmatprep.subr.mxu0 0.0
      %3723 = vmatpush1.msra.mxu0 0.0
      %3724 = vmatprep.subr.mxu0 0.0
      %3725 = vmatpush1.msra.mxu0 0.0
      %3726 = vmatprep.subr.mxu0 0.0
      %3727 = vmatpush1.msra.mxu0 0.0
      %3728 = vmatprep.subr.mxu0 0.0
      %3729 = vmatpush1.msra.mxu0 0.0
      %3730 = vmatprep.subr.mxu0 0.0
      %3731 = vmatpush1.msra.mxu0 0.0
      %3732 = vmatprep.subr.mxu0 0.0
      %3733 = vmatpush1.msra.mxu0 0.0
      %3734 = vmatprep.subr.mxu0 0.0
      %3735 = vmatpush1.msra.mxu0 0.0
      %3736 = vmatprep.subr.mxu0 0.0
      %3737 = vmatpush1.msra.mxu0 0.0
      %3738 = vmatprep.subr.mxu0 0.0
      %3739 = vmatpush1.msra.mxu0 0.0
      %3740 = vmatprep.subr.mxu0 0.0
      %3741 = vmatpush1.msra.mxu0 0.0
      %3742 = vmatprep.subr.mxu0 0.0
      %3743 = vmatpush1.msra.mxu0 0.0
      %3744 = vmatprep.subr.mxu0 0.0
      %3745 = vmatpush1.msra.mxu0 0.0
      %3746 = vmatprep.subr.mxu0 0.0
      %3747 = vmatpush1.msra.mxu0 0.0
      %3748 = vmatprep.subr.mxu0 0.0
      %3749 = vmatpush1.msra.mxu0 0.0
      %3750 = vmatprep.subr.mxu0 0.0
      %3751 = vmatpush1.msra.mxu0 0.0
      %3752 = vmatprep.subr.mxu0 0.0
      %3753 = vmatpush1.msra.mxu0 0.0
      %3754 = vmatprep.subr.mxu0 0.0
      %3755 = vmatpush1.msra.mxu0 0.0
      %3756 = vmatprep.subr.mxu0 0.0
      %3757 = vmatpush1.msra.mxu0 0.0
      %3758 = vmatprep.subr.mxu0 0.0
      %3759 = vmatpush1.msra.mxu0 0.0
      %3760 = vmatprep.mubr.f32.mxu0 0.0
      %3761 = vmatmul.mubr.f32.gmra.mrb[0].mxu0 %v3694
      %v3762 = vpop.f32.mrb[0].mxu0
      %v3763 = vadd.f32 0.0, %v3762
      %v3764 = vpop.f32.mrb[0].mxu0
      %v3765 = vadd.f32 0.0, %v3764
      %3766 = vdwg.mxu0
      %3767 = vrot.lane.b32.xlu0 %v3763, 112
      %v3768 = vpop.permute.xlu0 %3767
      %3769 = vrot.lane.b32.xlu0 %v3765, 112
      %v3770 = vpop.permute.xlu0 %3769
      %v3771 = vsel %vm2752, %v3768, %v3770
      %v3772 = vsel %vm2752, %v3770, %v3768
      %v3773 = vmul.f32 %v3771, %v2763
      %v3774 = vmul.f32 %v3772, %v2767
      %v3775 = vadd.f32 %v3689, %v3773
      %v3776 = vadd.f32 %v3690, %v3774
      %s3777 = scalar_lea.vmem %s6, 32
      %v3778 = vld [vmem:[%s3777] sm:$0xf]
      %v3780 = vsel %vm3096, %v3778, 0
      %3782 = vmatprep.subr.mxu0 %v3102
      %3783 = vmatpush1.msra.mxu0 %v3100
      %3784 = vmatprep.subr.mxu0 0.0
      %3785 = vmatpush1.msra.mxu0 0.0
      %3786 = vmatprep.subr.mxu0 0.0
      %3787 = vmatpush1.msra.mxu0 0.0
      %3788 = vmatprep.subr.mxu0 0.0
      %3789 = vmatpush1.msra.mxu0 0.0
      %3790 = vmatprep.subr.mxu0 0.0
      %3791 = vmatpush1.msra.mxu0 0.0
      %3792 = vmatprep.subr.mxu0 0.0
      %3793 = vmatpush1.msra.mxu0 0.0
      %3794 = vmatprep.subr.mxu0 0.0
      %3795 = vmatpush1.msra.mxu0 0.0
      %3796 = vmatprep.subr.mxu0 0.0
      %3797 = vmatpush1.msra.mxu0 0.0
      %3798 = vmatprep.subr.mxu0 0.0
      %3799 = vmatpush1.msra.mxu0 0.0
      %3800 = vmatprep.subr.mxu0 0.0
      %3801 = vmatpush1.msra.mxu0 0.0
      %3802 = vmatprep.subr.mxu0 0.0
      %3803 = vmatpush1.msra.mxu0 0.0
      %3804 = vmatprep.subr.mxu0 0.0
      %3805 = vmatpush1.msra.mxu0 0.0
      %3806 = vmatprep.subr.mxu0 0.0
      %3807 = vmatpush1.msra.mxu0 0.0
      %3808 = vmatprep.subr.mxu0 0.0
      %3809 = vmatpush1.msra.mxu0 0.0
      %3810 = vmatprep.subr.mxu0 0.0
      %3811 = vmatpush1.msra.mxu0 0.0
      %3812 = vmatprep.subr.mxu0 0.0
      %3813 = vmatpush1.msra.mxu0 0.0
      %3814 = vmatprep.subr.mxu0 0.0
      %3815 = vmatpush1.msra.mxu0 0.0
      %3816 = vmatprep.subr.mxu0 0.0
      %3817 = vmatpush1.msra.mxu0 0.0
      %3818 = vmatprep.subr.mxu0 0.0
      %3819 = vmatpush1.msra.mxu0 0.0
      %3820 = vmatprep.subr.mxu0 0.0
      %3821 = vmatpush1.msra.mxu0 0.0
      %3822 = vmatprep.subr.mxu0 0.0
      %3823 = vmatpush1.msra.mxu0 0.0
      %3824 = vmatprep.subr.mxu0 0.0
      %3825 = vmatpush1.msra.mxu0 0.0
      %3826 = vmatprep.subr.mxu0 0.0
      %3827 = vmatpush1.msra.mxu0 0.0
      %3828 = vmatprep.subr.mxu0 0.0
      %3829 = vmatpush1.msra.mxu0 0.0
      %3830 = vmatprep.subr.mxu0 0.0
      %3831 = vmatpush1.msra.mxu0 0.0
      %3832 = vmatprep.subr.mxu0 0.0
      %3833 = vmatpush1.msra.mxu0 0.0
      %3834 = vmatprep.subr.mxu0 0.0
      %3835 = vmatpush1.msra.mxu0 0.0
      %3836 = vmatprep.subr.mxu0 0.0
      %3837 = vmatpush1.msra.mxu0 0.0
      %3838 = vmatprep.subr.mxu0 0.0
      %3839 = vmatpush1.msra.mxu0 0.0
      %3840 = vmatprep.subr.mxu0 0.0
      %3841 = vmatpush1.msra.mxu0 0.0
      %3842 = vmatprep.subr.mxu0 0.0
      %3843 = vmatpush1.msra.mxu0 0.0
      %3844 = vmatprep.subr.mxu0 0.0
      %3845 = vmatpush1.msra.mxu0 0.0
      %3846 = vmatprep.mubr.f32.mxu0 0.0
      %3847 = vmatmul.mubr.f32.gmra.mrb[0].mxu0 %v3780
      %v3848 = vpop.f32.mrb[0].mxu0
      %v3849 = vadd.f32 0.0, %v3848
      %v3850 = vpop.f32.mrb[0].mxu0
      %v3851 = vadd.f32 0.0, %v3850
      %3852 = vdwg.mxu0
      %3853 = vrot.lane.b32.xlu0 %v3849, 111
      %v3854 = vpop.permute.xlu0 %3853
      %3855 = vrot.lane.b32.xlu0 %v3851, 111
      %v3856 = vpop.permute.xlu0 %3855
      %v3857 = vsel %vm2970, %v3854, %v3856
      %v3858 = vsel %vm2970, %v3856, %v3854
      %v3859 = vmul.f32 %v3857, %v2981
      %v3860 = vmul.f32 %v3858, %v2985
      %v3861 = vadd.f32 %v3775, %v3859
      %v3862 = vadd.f32 %v3776, %v3860
      %v3863 = vld [vmem:[%s7] sm:$0xf]
      %3865 = vset.pattern.permute.xlu0 0
      %3866 = vperm.xlu0 %3865, %v3863
      %v3867 = vpop.permute.xlu0 %3866
      %v3869 = vadd.f32 %v3861, %v3867
      %v3870 = vadd.f32 %v3862, %v3867
      %v3871 = vsel %vm623, %v3869, 0.0
      %v3872 = vsel %vm623, %v3870, 0.0
      %v3873 = vadd.f32 %v3871, %v3872
      %3874 = vadd.xlane.f32.xlu0 %v3873
      %v3875 = vpop.xlane.xlu0 %3874
      %v3876 = vmul.f32 %v3875, 0.00390625
      %v3877 = vsub.f32 %v3869, %v3876
      %v3878 = vsub.f32 %v3870, %v3876
      %v3879 = vmul.f32 %v3877, %v3877
      %v3880 = vmul.f32 %v3878, %v3878
      %v3881 = vsel %vm623, %v3879, 0.0
      %v3882 = vsel %vm623, %v3880, 0.0
      %v3883 = vadd.f32 %v3881, %v3882
      %3884 = vadd.xlane.f32.xlu0 %v3883
      %v3885 = vpop.xlane.xlu0 %3884
      %v3886 = vmul.f32 %v3885, 0.00390625
      %v3887 = vadd.f32 %v3886, 1e-05
      %v3888 = vrsqrt.pop %v3887
      %v3889 = vmul.f32 %v3877, %v3888
      %v3890 = vmul.f32 %v3878, %v3888
      %v3891 = vadd.f32 %v3020, 1.0
      %v3892 = vadd.f32 %v3021, 1.0
      %v3893 = vmul.f32 %v3889, %v3891
      %v3894 = vmul.f32 %v3890, %v3892
      %v3897 = vrot.slane %v3020, 4
      %v3898 = vrot.slane %v3021, 4
      %v3901 = vadd.f32 %v3893, %v3897
      %v3902 = vadd.f32 %v3894, %v3898
      %v3903 = vmul.f32 %v3901, 0.2
      %v3904 = vmul.f32 %v3902, 0.2
      %v3905 = vmax.f32 %v3901, %v3903
      %v3906 = vmax.f32 %v3902, %v3904
      %v3907 = vld [vmem:[%s8] sm:$0xff]
      %v3909 = vsel %vm3096, %v3907, 0
      %v3912 = vsel %vm623, %v3905, 0
      %v3915 = vsel %vm623, %v3906, 0
      %3917 = vmatprep.subr.mxu0 %v3915
      %3918 = vmatpush1.msra.mxu0 %v3912
      %3919 = vmatprep.subr.mxu0 0.0
      %3920 = vmatpush1.msra.mxu0 0.0
      %3921 = vmatprep.subr.mxu0 0.0
      %3922 = vmatpush1.msra.mxu0 0.0
      %3923 = vmatprep.subr.mxu0 0.0
      %3924 = vmatpush1.msra.mxu0 0.0
      %3925 = vmatprep.subr.mxu0 0.0
      %3926 = vmatpush1.msra.mxu0 0.0
      %3927 = vmatprep.subr.mxu0 0.0
      %3928 = vmatpush1.msra.mxu0 0.0
      %3929 = vmatprep.subr.mxu0 0.0
      %3930 = vmatpush1.msra.mxu0 0.0
      %3931 = vmatprep.subr.mxu0 0.0
      %3932 = vmatpush1.msra.mxu0 0.0
      %3933 = vmatprep.subr.mxu0 0.0
      %3934 = vmatpush1.msra.mxu0 0.0
      %3935 = vmatprep.subr.mxu0 0.0
      %3936 = vmatpush1.msra.mxu0 0.0
      %3937 = vmatprep.subr.mxu0 0.0
      %3938 = vmatpush1.msra.mxu0 0.0
      %3939 = vmatprep.subr.mxu0 0.0
      %3940 = vmatpush1.msra.mxu0 0.0
      %3941 = vmatprep.subr.mxu0 0.0
      %3942 = vmatpush1.msra.mxu0 0.0
      %3943 = vmatprep.subr.mxu0 0.0
      %3944 = vmatpush1.msra.mxu0 0.0
      %3945 = vmatprep.subr.mxu0 0.0
      %3946 = vmatpush1.msra.mxu0 0.0
      %3947 = vmatprep.subr.mxu0 0.0
      %3948 = vmatpush1.msra.mxu0 0.0
      %3949 = vmatprep.subr.mxu0 0.0
      %3950 = vmatpush1.msra.mxu0 0.0
      %3951 = vmatprep.subr.mxu0 0.0
      %3952 = vmatpush1.msra.mxu0 0.0
      %3953 = vmatprep.subr.mxu0 0.0
      %3954 = vmatpush1.msra.mxu0 0.0
      %3955 = vmatprep.subr.mxu0 0.0
      %3956 = vmatpush1.msra.mxu0 0.0
      %3957 = vmatprep.subr.mxu0 0.0
      %3958 = vmatpush1.msra.mxu0 0.0
      %3959 = vmatprep.subr.mxu0 0.0
      %3960 = vmatpush1.msra.mxu0 0.0
      %3961 = vmatprep.subr.mxu0 0.0
      %3962 = vmatpush1.msra.mxu0 0.0
      %3963 = vmatprep.subr.mxu0 0.0
      %3964 = vmatpush1.msra.mxu0 0.0
      %3965 = vmatprep.subr.mxu0 0.0
      %3966 = vmatpush1.msra.mxu0 0.0
      %3967 = vmatprep.subr.mxu0 0.0
      %3968 = vmatpush1.msra.mxu0 0.0
      %3969 = vmatprep.subr.mxu0 0.0
      %3970 = vmatpush1.msra.mxu0 0.0
      %3971 = vmatprep.subr.mxu0 0.0
      %3972 = vmatpush1.msra.mxu0 0.0
      %3973 = vmatprep.subr.mxu0 0.0
      %3974 = vmatpush1.msra.mxu0 0.0
      %3975 = vmatprep.subr.mxu0 0.0
      %3976 = vmatpush1.msra.mxu0 0.0
      %3977 = vmatprep.subr.mxu0 0.0
      %3978 = vmatpush1.msra.mxu0 0.0
      %3979 = vmatprep.subr.mxu0 0.0
      %3980 = vmatpush1.msra.mxu0 0.0
      %3981 = vmatprep.mubr.f32.mxu0 0.0
      %3982 = vmatmul.mubr.f32.gmra.mrb[0].mxu0 %v3909
      %v3983 = vpop.f32.mrb[0].mxu0
      %v3984 = vadd.f32 0.0, %v3983
      %v3985 = vpop.f32.mrb[0].mxu0
      %v3986 = vadd.f32 0.0, %v3985
      %3987 = vdwg.mxu0
      %3988 = vrot.lane.b32.xlu0 %v3984, 17
      %v3989 = vpop.permute.xlu0 %3988
      %3990 = vrot.lane.b32.xlu0 %v3986, 17
      %v3991 = vpop.permute.xlu0 %3990
      %v3992 = vsel %vm1268, %v3989, %v3991
      %v3993 = vsel %vm1268, %v3991, %v3989
      %v3994 = vmul.f32 %v3993, %v1279
      %v3995 = vmul.f32 %v3992, %v1283
      %s3996 = scalar_lea.vmem %s8, 8
      %v3997 = vld [vmem:[%s3996] sm:$0xff]
      %v3999 = vsel %vm3096, %v3997, 0
      %4001 = vmatprep.subr.mxu0 %v3915
      %4002 = vmatpush1.msra.mxu0 %v3912
      %4003 = vmatprep.subr.mxu0 0.0
      %4004 = vmatpush1.msra.mxu0 0.0
      %4005 = vmatprep.subr.mxu0 0.0
      %4006 = vmatpush1.msra.mxu0 0.0
      %4007 = vmatprep.subr.mxu0 0.0
      %4008 = vmatpush1.msra.mxu0 0.0
      %4009 = vmatprep.subr.mxu0 0.0
      %4010 = vmatpush1.msra.mxu0 0.0
      %4011 = vmatprep.subr.mxu0 0.0
      %4012 = vmatpush1.msra.mxu0 0.0
      %4013 = vmatprep.subr.mxu0 0.0
      %4014 = vmatpush1.msra.mxu0 0.0
      %4015 = vmatprep.subr.mxu0 0.0
      %4016 = vmatpush1.msra.mxu0 0.0
      %4017 = vmatprep.subr.mxu0 0.0
      %4018 = vmatpush1.msra.mxu0 0.0
      %4019 = vmatprep.subr.mxu0 0.0
      %4020 = vmatpush1.msra.mxu0 0.0
      %4021 = vmatprep.subr.mxu0 0.0
      %4022 = vmatpush1.msra.mxu0 0.0
      %4023 = vmatprep.subr.mxu0 0.0
      %4024 = vmatpush1.msra.mxu0 0.0
      %4025 = vmatprep.subr.mxu0 0.0
      %4026 = vmatpush1.msra.mxu0 0.0
      %4027 = vmatprep.subr.mxu0 0.0
      %4028 = vmatpush1.msra.mxu0 0.0
      %4029 = vmatprep.subr.mxu0 0.0
      %4030 = vmatpush1.msra.mxu0 0.0
      %4031 = vmatprep.subr.mxu0 0.0
      %4032 = vmatpush1.msra.mxu0 0.0
      %4033 = vmatprep.subr.mxu0 0.0
      %4034 = vmatpush1.msra.mxu0 0.0
      %4035 = vmatprep.subr.mxu0 0.0
      %4036 = vmatpush1.msra.mxu0 0.0
      %4037 = vmatprep.subr.mxu0 0.0
      %4038 = vmatpush1.msra.mxu0 0.0
      %4039 = vmatprep.subr.mxu0 0.0
      %4040 = vmatpush1.msra.mxu0 0.0
      %4041 = vmatprep.subr.mxu0 0.0
      %4042 = vmatpush1.msra.mxu0 0.0
      %4043 = vmatprep.subr.mxu0 0.0
      %4044 = vmatpush1.msra.mxu0 0.0
      %4045 = vmatprep.subr.mxu0 0.0
      %4046 = vmatpush1.msra.mxu0 0.0
      %4047 = vmatprep.subr.mxu0 0.0
      %4048 = vmatpush1.msra.mxu0 0.0
      %4049 = vmatprep.subr.mxu0 0.0
      %4050 = vmatpush1.msra.mxu0 0.0
      %4051 = vmatprep.subr.mxu0 0.0
      %4052 = vmatpush1.msra.mxu0 0.0
      %4053 = vmatprep.subr.mxu0 0.0
      %4054 = vmatpush1.msra.mxu0 0.0
      %4055 = vmatprep.subr.mxu0 0.0
      %4056 = vmatpush1.msra.mxu0 0.0
      %4057 = vmatprep.subr.mxu0 0.0
      %4058 = vmatpush1.msra.mxu0 0.0
      %4059 = vmatprep.subr.mxu0 0.0
      %4060 = vmatpush1.msra.mxu0 0.0
      %4061 = vmatprep.subr.mxu0 0.0
      %4062 = vmatpush1.msra.mxu0 0.0
      %4063 = vmatprep.subr.mxu0 0.0
      %4064 = vmatpush1.msra.mxu0 0.0
      %4065 = vmatprep.mubr.f32.mxu0 0.0
      %4066 = vmatmul.mubr.f32.gmra.mrb[0].mxu0 %v3999
      %v4067 = vpop.f32.mrb[0].mxu0
      %v4068 = vadd.f32 0.0, %v4067
      %v4069 = vpop.f32.mrb[0].mxu0
      %v4070 = vadd.f32 0.0, %v4069
      %4071 = vdwg.mxu0
      %4072 = vrot.lane.b32.xlu0 %v4068, 16
      %v4073 = vpop.permute.xlu0 %4072
      %4074 = vrot.lane.b32.xlu0 %v4070, 16
      %v4075 = vpop.permute.xlu0 %4074
      %v4076 = vsel %vm1480, %v4073, %v4075
      %v4077 = vsel %vm1480, %v4075, %v4073
      %v4078 = vmul.f32 %v4077, %v1491
      %v4079 = vmul.f32 %v4076, %v1495
      %v4080 = vadd.f32 %v3994, %v4078
      %v4081 = vadd.f32 %v3995, %v4079
      %s4082 = scalar_lea.vmem %s8, 16
      %v4083 = vld [vmem:[%s4082] sm:$0xff]
      %v4085 = vsel %vm3096, %v4083, 0
      %4087 = vmatprep.subr.mxu0 %v3915
      %4088 = vmatpush1.msra.mxu0 %v3912
      %4089 = vmatprep.subr.mxu0 0.0
      %4090 = vmatpush1.msra.mxu0 0.0
      %4091 = vmatprep.subr.mxu0 0.0
      %4092 = vmatpush1.msra.mxu0 0.0
      %4093 = vmatprep.subr.mxu0 0.0
      %4094 = vmatpush1.msra.mxu0 0.0
      %4095 = vmatprep.subr.mxu0 0.0
      %4096 = vmatpush1.msra.mxu0 0.0
      %4097 = vmatprep.subr.mxu0 0.0
      %4098 = vmatpush1.msra.mxu0 0.0
      %4099 = vmatprep.subr.mxu0 0.0
      %4100 = vmatpush1.msra.mxu0 0.0
      %4101 = vmatprep.subr.mxu0 0.0
      %4102 = vmatpush1.msra.mxu0 0.0
      %4103 = vmatprep.subr.mxu0 0.0
      %4104 = vmatpush1.msra.mxu0 0.0
      %4105 = vmatprep.subr.mxu0 0.0
      %4106 = vmatpush1.msra.mxu0 0.0
      %4107 = vmatprep.subr.mxu0 0.0
      %4108 = vmatpush1.msra.mxu0 0.0
      %4109 = vmatprep.subr.mxu0 0.0
      %4110 = vmatpush1.msra.mxu0 0.0
      %4111 = vmatprep.subr.mxu0 0.0
      %4112 = vmatpush1.msra.mxu0 0.0
      %4113 = vmatprep.subr.mxu0 0.0
      %4114 = vmatpush1.msra.mxu0 0.0
      %4115 = vmatprep.subr.mxu0 0.0
      %4116 = vmatpush1.msra.mxu0 0.0
      %4117 = vmatprep.subr.mxu0 0.0
      %4118 = vmatpush1.msra.mxu0 0.0
      %4119 = vmatprep.subr.mxu0 0.0
      %4120 = vmatpush1.msra.mxu0 0.0
      %4121 = vmatprep.subr.mxu0 0.0
      %4122 = vmatpush1.msra.mxu0 0.0
      %4123 = vmatprep.subr.mxu0 0.0
      %4124 = vmatpush1.msra.mxu0 0.0
      %4125 = vmatprep.subr.mxu0 0.0
      %4126 = vmatpush1.msra.mxu0 0.0
      %4127 = vmatprep.subr.mxu0 0.0
      %4128 = vmatpush1.msra.mxu0 0.0
      %4129 = vmatprep.subr.mxu0 0.0
      %4130 = vmatpush1.msra.mxu0 0.0
      %4131 = vmatprep.subr.mxu0 0.0
      %4132 = vmatpush1.msra.mxu0 0.0
      %4133 = vmatprep.subr.mxu0 0.0
      %4134 = vmatpush1.msra.mxu0 0.0
      %4135 = vmatprep.subr.mxu0 0.0
      %4136 = vmatpush1.msra.mxu0 0.0
      %4137 = vmatprep.subr.mxu0 0.0
      %4138 = vmatpush1.msra.mxu0 0.0
      %4139 = vmatprep.subr.mxu0 0.0
      %4140 = vmatpush1.msra.mxu0 0.0
      %4141 = vmatprep.subr.mxu0 0.0
      %4142 = vmatpush1.msra.mxu0 0.0
      %4143 = vmatprep.subr.mxu0 0.0
      %4144 = vmatpush1.msra.mxu0 0.0
      %4145 = vmatprep.subr.mxu0 0.0
      %4146 = vmatpush1.msra.mxu0 0.0
      %4147 = vmatprep.subr.mxu0 0.0
      %4148 = vmatpush1.msra.mxu0 0.0
      %4149 = vmatprep.subr.mxu0 0.0
      %4150 = vmatpush1.msra.mxu0 0.0
      %4151 = vmatprep.mubr.f32.mxu0 0.0
      %4152 = vmatmul.mubr.f32.gmra.mrb[0].mxu0 %v4085
      %v4153 = vpop.f32.mrb[0].mxu0
      %v4154 = vadd.f32 0.0, %v4153
      %v4155 = vpop.f32.mrb[0].mxu0
      %v4156 = vadd.f32 0.0, %v4155
      %4157 = vdwg.mxu0
      %4158 = vrot.lane.b32.xlu0 %v4154, 15
      %v4159 = vpop.permute.xlu0 %4158
      %4160 = vrot.lane.b32.xlu0 %v4156, 15
      %v4161 = vpop.permute.xlu0 %4160
      %v4162 = vsel %vm1698, %v4159, %v4161
      %v4163 = vsel %vm1698, %v4161, %v4159
      %v4164 = vmul.f32 %v4163, %v1709
      %v4165 = vmul.f32 %v4162, %v1713
      %v4166 = vadd.f32 %v4080, %v4164
      %v4167 = vadd.f32 %v4081, %v4165
      %s4168 = scalar_lea.vmem %s8, 24
      %v4169 = vld [vmem:[%s4168] sm:$0xff]
      %v4171 = vsel %vm3096, %v4169, 0
      %4173 = vmatprep.subr.mxu0 %v3915
      %4174 = vmatpush1.msra.mxu0 %v3912
      %4175 = vmatprep.subr.mxu0 0.0
      %4176 = vmatpush1.msra.mxu0 0.0
      %4177 = vmatprep.subr.mxu0 0.0
      %4178 = vmatpush1.msra.mxu0 0.0
      %4179 = vmatprep.subr.mxu0 0.0
      %4180 = vmatpush1.msra.mxu0 0.0
      %4181 = vmatprep.subr.mxu0 0.0
      %4182 = vmatpush1.msra.mxu0 0.0
      %4183 = vmatprep.subr.mxu0 0.0
      %4184 = vmatpush1.msra.mxu0 0.0
      %4185 = vmatprep.subr.mxu0 0.0
      %4186 = vmatpush1.msra.mxu0 0.0
      %4187 = vmatprep.subr.mxu0 0.0
      %4188 = vmatpush1.msra.mxu0 0.0
      %4189 = vmatprep.subr.mxu0 0.0
      %4190 = vmatpush1.msra.mxu0 0.0
      %4191 = vmatprep.subr.mxu0 0.0
      %4192 = vmatpush1.msra.mxu0 0.0
      %4193 = vmatprep.subr.mxu0 0.0
      %4194 = vmatpush1.msra.mxu0 0.0
      %4195 = vmatprep.subr.mxu0 0.0
      %4196 = vmatpush1.msra.mxu0 0.0
      %4197 = vmatprep.subr.mxu0 0.0
      %4198 = vmatpush1.msra.mxu0 0.0
      %4199 = vmatprep.subr.mxu0 0.0
      %4200 = vmatpush1.msra.mxu0 0.0
      %4201 = vmatprep.subr.mxu0 0.0
      %4202 = vmatpush1.msra.mxu0 0.0
      %4203 = vmatprep.subr.mxu0 0.0
      %4204 = vmatpush1.msra.mxu0 0.0
      %4205 = vmatprep.subr.mxu0 0.0
      %4206 = vmatpush1.msra.mxu0 0.0
      %4207 = vmatprep.subr.mxu0 0.0
      %4208 = vmatpush1.msra.mxu0 0.0
      %4209 = vmatprep.subr.mxu0 0.0
      %4210 = vmatpush1.msra.mxu0 0.0
      %4211 = vmatprep.subr.mxu0 0.0
      %4212 = vmatpush1.msra.mxu0 0.0
      %4213 = vmatprep.subr.mxu0 0.0
      %4214 = vmatpush1.msra.mxu0 0.0
      %4215 = vmatprep.subr.mxu0 0.0
      %4216 = vmatpush1.msra.mxu0 0.0
      %4217 = vmatprep.subr.mxu0 0.0
      %4218 = vmatpush1.msra.mxu0 0.0
      %4219 = vmatprep.subr.mxu0 0.0
      %4220 = vmatpush1.msra.mxu0 0.0
      %4221 = vmatprep.subr.mxu0 0.0
      %4222 = vmatpush1.msra.mxu0 0.0
      %4223 = vmatprep.subr.mxu0 0.0
      %4224 = vmatpush1.msra.mxu0 0.0
      %4225 = vmatprep.subr.mxu0 0.0
      %4226 = vmatpush1.msra.mxu0 0.0
      %4227 = vmatprep.subr.mxu0 0.0
      %4228 = vmatpush1.msra.mxu0 0.0
      %4229 = vmatprep.subr.mxu0 0.0
      %4230 = vmatpush1.msra.mxu0 0.0
      %4231 = vmatprep.subr.mxu0 0.0
      %4232 = vmatpush1.msra.mxu0 0.0
      %4233 = vmatprep.subr.mxu0 0.0
      %4234 = vmatpush1.msra.mxu0 0.0
      %4235 = vmatprep.subr.mxu0 0.0
      %4236 = vmatpush1.msra.mxu0 0.0
      %4237 = vmatprep.mubr.f32.mxu0 0.0
      %4238 = vmatmul.mubr.f32.gmra.mrb[0].mxu0 %v4171
      %v4239 = vpop.f32.mrb[0].mxu0
      %v4240 = vadd.f32 0.0, %v4239
      %v4241 = vpop.f32.mrb[0].mxu0
      %v4242 = vadd.f32 0.0, %v4241
      %4243 = vdwg.mxu0
      %4244 = vrot.lane.b32.xlu0 %v4240, 1
      %v4245 = vpop.permute.xlu0 %4244
      %4246 = vrot.lane.b32.xlu0 %v4242, 1
      %v4247 = vpop.permute.xlu0 %4246
      %v4248 = vsel %vm1916, %v4245, %v4247
      %v4249 = vsel %vm1916, %v4247, %v4245
      %v4250 = vmul.f32 %v4249, %v1927
      %v4251 = vmul.f32 %v4248, %v1931
      %v4252 = vadd.f32 %v4166, %v4250
      %v4253 = vadd.f32 %v4167, %v4251
      %s4254 = scalar_lea.vmem %s8, 32
      %v4255 = vld [vmem:[%s4254] sm:$0xff]
      %v4257 = vsel %vm3096, %v4255, 0
      %4259 = vmatprep.subr.mxu0 %v3915
      %4260 = vmatpush1.msra.mxu0 %v3912
      %4261 = vmatprep.subr.mxu0 0.0
      %4262 = vmatpush1.msra.mxu0 0.0
      %4263 = vmatprep.subr.mxu0 0.0
      %4264 = vmatpush1.msra.mxu0 0.0
      %4265 = vmatprep.subr.mxu0 0.0
      %4266 = vmatpush1.msra.mxu0 0.0
      %4267 = vmatprep.subr.mxu0 0.0
      %4268 = vmatpush1.msra.mxu0 0.0
      %4269 = vmatprep.subr.mxu0 0.0
      %4270 = vmatpush1.msra.mxu0 0.0
      %4271 = vmatprep.subr.mxu0 0.0
      %4272 = vmatpush1.msra.mxu0 0.0
      %4273 = vmatprep.subr.mxu0 0.0
      %4274 = vmatpush1.msra.mxu0 0.0
      %4275 = vmatprep.subr.mxu0 0.0
      %4276 = vmatpush1.msra.mxu0 0.0
      %4277 = vmatprep.subr.mxu0 0.0
      %4278 = vmatpush1.msra.mxu0 0.0
      %4279 = vmatprep.subr.mxu0 0.0
      %4280 = vmatpush1.msra.mxu0 0.0
      %4281 = vmatprep.subr.mxu0 0.0
      %4282 = vmatpush1.msra.mxu0 0.0
      %4283 = vmatprep.subr.mxu0 0.0
      %4284 = vmatpush1.msra.mxu0 0.0
      %4285 = vmatprep.subr.mxu0 0.0
      %4286 = vmatpush1.msra.mxu0 0.0
      %4287 = vmatprep.subr.mxu0 0.0
      %4288 = vmatpush1.msra.mxu0 0.0
      %4289 = vmatprep.subr.mxu0 0.0
      %4290 = vmatpush1.msra.mxu0 0.0
      %4291 = vmatprep.subr.mxu0 0.0
      %4292 = vmatpush1.msra.mxu0 0.0
      %4293 = vmatprep.subr.mxu0 0.0
      %4294 = vmatpush1.msra.mxu0 0.0
      %4295 = vmatprep.subr.mxu0 0.0
      %4296 = vmatpush1.msra.mxu0 0.0
      %4297 = vmatprep.subr.mxu0 0.0
      %4298 = vmatpush1.msra.mxu0 0.0
      %4299 = vmatprep.subr.mxu0 0.0
      %4300 = vmatpush1.msra.mxu0 0.0
      %4301 = vmatprep.subr.mxu0 0.0
      %4302 = vmatpush1.msra.mxu0 0.0
      %4303 = vmatprep.subr.mxu0 0.0
      %4304 = vmatpush1.msra.mxu0 0.0
      %4305 = vmatprep.subr.mxu0 0.0
      %4306 = vmatpush1.msra.mxu0 0.0
      %4307 = vmatprep.subr.mxu0 0.0
      %4308 = vmatpush1.msra.mxu0 0.0
      %4309 = vmatprep.subr.mxu0 0.0
      %4310 = vmatpush1.msra.mxu0 0.0
      %4311 = vmatprep.subr.mxu0 0.0
      %4312 = vmatpush1.msra.mxu0 0.0
      %4313 = vmatprep.subr.mxu0 0.0
      %4314 = vmatpush1.msra.mxu0 0.0
      %4315 = vmatprep.subr.mxu0 0.0
      %4316 = vmatpush1.msra.mxu0 0.0
      %4317 = vmatprep.subr.mxu0 0.0
      %4318 = vmatpush1.msra.mxu0 0.0
      %4319 = vmatprep.subr.mxu0 0.0
      %4320 = vmatpush1.msra.mxu0 0.0
      %4321 = vmatprep.subr.mxu0 0.0
      %4322 = vmatpush1.msra.mxu0 0.0
      %4323 = vmatprep.mubr.f32.mxu0 0.0
      %4324 = vmatmul.mubr.f32.gmra.mrb[0].mxu0 %v4257
      %v4325 = vpop.f32.mrb[0].mxu0
      %v4326 = vadd.f32 0.0, %v4325
      %v4327 = vpop.f32.mrb[0].mxu0
      %v4328 = vadd.f32 0.0, %v4327
      %4329 = vdwg.mxu0
      %v4330 = vadd.f32 %v4252, %v4326
      %v4331 = vadd.f32 %v4253, %v4328
      %s4332 = scalar_lea.vmem %s8, 40
      %v4333 = vld [vmem:[%s4332] sm:$0xff]
      %v4335 = vsel %vm3096, %v4333, 0
      %4337 = vmatprep.subr.mxu0 %v3915
      %4338 = vmatpush1.msra.mxu0 %v3912
      %4339 = vmatprep.subr.mxu0 0.0
      %4340 = vmatpush1.msra.mxu0 0.0
      %4341 = vmatprep.subr.mxu0 0.0
      %4342 = vmatpush1.msra.mxu0 0.0
      %4343 = vmatprep.subr.mxu0 0.0
      %4344 = vmatpush1.msra.mxu0 0.0
      %4345 = vmatprep.subr.mxu0 0.0
      %4346 = vmatpush1.msra.mxu0 0.0
      %4347 = vmatprep.subr.mxu0 0.0
      %4348 = vmatpush1.msra.mxu0 0.0
      %4349 = vmatprep.subr.mxu0 0.0
      %4350 = vmatpush1.msra.mxu0 0.0
      %4351 = vmatprep.subr.mxu0 0.0
      %4352 = vmatpush1.msra.mxu0 0.0
      %4353 = vmatprep.subr.mxu0 0.0
      %4354 = vmatpush1.msra.mxu0 0.0
      %4355 = vmatprep.subr.mxu0 0.0
      %4356 = vmatpush1.msra.mxu0 0.0
      %4357 = vmatprep.subr.mxu0 0.0
      %4358 = vmatpush1.msra.mxu0 0.0
      %4359 = vmatprep.subr.mxu0 0.0
      %4360 = vmatpush1.msra.mxu0 0.0
      %4361 = vmatprep.subr.mxu0 0.0
      %4362 = vmatpush1.msra.mxu0 0.0
      %4363 = vmatprep.subr.mxu0 0.0
      %4364 = vmatpush1.msra.mxu0 0.0
      %4365 = vmatprep.subr.mxu0 0.0
      %4366 = vmatpush1.msra.mxu0 0.0
      %4367 = vmatprep.subr.mxu0 0.0
      %4368 = vmatpush1.msra.mxu0 0.0
      %4369 = vmatprep.subr.mxu0 0.0
      %4370 = vmatpush1.msra.mxu0 0.0
      %4371 = vmatprep.subr.mxu0 0.0
      %4372 = vmatpush1.msra.mxu0 0.0
      %4373 = vmatprep.subr.mxu0 0.0
      %4374 = vmatpush1.msra.mxu0 0.0
      %4375 = vmatprep.subr.mxu0 0.0
      %4376 = vmatpush1.msra.mxu0 0.0
      %4377 = vmatprep.subr.mxu0 0.0
      %4378 = vmatpush1.msra.mxu0 0.0
      %4379 = vmatprep.subr.mxu0 0.0
      %4380 = vmatpush1.msra.mxu0 0.0
      %4381 = vmatprep.subr.mxu0 0.0
      %4382 = vmatpush1.msra.mxu0 0.0
      %4383 = vmatprep.subr.mxu0 0.0
      %4384 = vmatpush1.msra.mxu0 0.0
      %4385 = vmatprep.subr.mxu0 0.0
      %4386 = vmatpush1.msra.mxu0 0.0
      %4387 = vmatprep.subr.mxu0 0.0
      %4388 = vmatpush1.msra.mxu0 0.0
      %4389 = vmatprep.subr.mxu0 0.0
      %4390 = vmatpush1.msra.mxu0 0.0
      %4391 = vmatprep.subr.mxu0 0.0
      %4392 = vmatpush1.msra.mxu0 0.0
      %4393 = vmatprep.subr.mxu0 0.0
      %4394 = vmatpush1.msra.mxu0 0.0
      %4395 = vmatprep.subr.mxu0 0.0
      %4396 = vmatpush1.msra.mxu0 0.0
      %4397 = vmatprep.subr.mxu0 0.0
      %4398 = vmatpush1.msra.mxu0 0.0
      %4399 = vmatprep.subr.mxu0 0.0
      %4400 = vmatpush1.msra.mxu0 0.0
      %4401 = vmatprep.mubr.f32.mxu0 0.0
      %4402 = vmatmul.mubr.f32.gmra.mrb[0].mxu0 %v4335
      %v4403 = vpop.f32.mrb[0].mxu0
      %v4404 = vadd.f32 0.0, %v4403
      %v4405 = vpop.f32.mrb[0].mxu0
      %v4406 = vadd.f32 0.0, %v4405
      %4407 = vdwg.mxu0
      %4408 = vrot.lane.b32.xlu0 %v4404, 127
      %v4409 = vpop.permute.xlu0 %4408
      %4410 = vrot.lane.b32.xlu0 %v4406, 127
      %v4411 = vpop.permute.xlu0 %4410
      %v4412 = vsel %vm2316, %v4409, %v4411
      %v4413 = vsel %vm2316, %v4411, %v4409
      %v4414 = vmul.f32 %v4412, %v2327
      %v4415 = vmul.f32 %v4413, %v2331
      %v4416 = vadd.f32 %v4330, %v4414
      %v4417 = vadd.f32 %v4331, %v4415
      %s4418 = scalar_lea.vmem %s8, 48
      %v4419 = vld [vmem:[%s4418] sm:$0xff]
      %v4421 = vsel %vm3096, %v4419, 0
      %4423 = vmatprep.subr.mxu0 %v3915
      %4424 = vmatpush1.msra.mxu0 %v3912
      %4425 = vmatprep.subr.mxu0 0.0
      %4426 = vmatpush1.msra.mxu0 0.0
      %4427 = vmatprep.subr.mxu0 0.0
      %4428 = vmatpush1.msra.mxu0 0.0
      %4429 = vmatprep.subr.mxu0 0.0
      %4430 = vmatpush1.msra.mxu0 0.0
      %4431 = vmatprep.subr.mxu0 0.0
      %4432 = vmatpush1.msra.mxu0 0.0
      %4433 = vmatprep.subr.mxu0 0.0
      %4434 = vmatpush1.msra.mxu0 0.0
      %4435 = vmatprep.subr.mxu0 0.0
      %4436 = vmatpush1.msra.mxu0 0.0
      %4437 = vmatprep.subr.mxu0 0.0
      %4438 = vmatpush1.msra.mxu0 0.0
      %4439 = vmatprep.subr.mxu0 0.0
      %4440 = vmatpush1.msra.mxu0 0.0
      %4441 = vmatprep.subr.mxu0 0.0
      %4442 = vmatpush1.msra.mxu0 0.0
      %4443 = vmatprep.subr.mxu0 0.0
      %4444 = vmatpush1.msra.mxu0 0.0
      %4445 = vmatprep.subr.mxu0 0.0
      %4446 = vmatpush1.msra.mxu0 0.0
      %4447 = vmatprep.subr.mxu0 0.0
      %4448 = vmatpush1.msra.mxu0 0.0
      %4449 = vmatprep.subr.mxu0 0.0
      %4450 = vmatpush1.msra.mxu0 0.0
      %4451 = vmatprep.subr.mxu0 0.0
      %4452 = vmatpush1.msra.mxu0 0.0
      %4453 = vmatprep.subr.mxu0 0.0
      %4454 = vmatpush1.msra.mxu0 0.0
      %4455 = vmatprep.subr.mxu0 0.0
      %4456 = vmatpush1.msra.mxu0 0.0
      %4457 = vmatprep.subr.mxu0 0.0
      %4458 = vmatpush1.msra.mxu0 0.0
      %4459 = vmatprep.subr.mxu0 0.0
      %4460 = vmatpush1.msra.mxu0 0.0
      %4461 = vmatprep.subr.mxu0 0.0
      %4462 = vmatpush1.msra.mxu0 0.0
      %4463 = vmatprep.subr.mxu0 0.0
      %4464 = vmatpush1.msra.mxu0 0.0
      %4465 = vmatprep.subr.mxu0 0.0
      %4466 = vmatpush1.msra.mxu0 0.0
      %4467 = vmatprep.subr.mxu0 0.0
      %4468 = vmatpush1.msra.mxu0 0.0
      %4469 = vmatprep.subr.mxu0 0.0
      %4470 = vmatpush1.msra.mxu0 0.0
      %4471 = vmatprep.subr.mxu0 0.0
      %4472 = vmatpush1.msra.mxu0 0.0
      %4473 = vmatprep.subr.mxu0 0.0
      %4474 = vmatpush1.msra.mxu0 0.0
      %4475 = vmatprep.subr.mxu0 0.0
      %4476 = vmatpush1.msra.mxu0 0.0
      %4477 = vmatprep.subr.mxu0 0.0
      %4478 = vmatpush1.msra.mxu0 0.0
      %4479 = vmatprep.subr.mxu0 0.0
      %4480 = vmatpush1.msra.mxu0 0.0
      %4481 = vmatprep.subr.mxu0 0.0
      %4482 = vmatpush1.msra.mxu0 0.0
      %4483 = vmatprep.subr.mxu0 0.0
      %4484 = vmatpush1.msra.mxu0 0.0
      %4485 = vmatprep.subr.mxu0 0.0
      %4486 = vmatpush1.msra.mxu0 0.0
      %4487 = vmatprep.mubr.f32.mxu0 0.0
      %4488 = vmatmul.mubr.f32.gmra.mrb[0].mxu0 %v4421
      %v4489 = vpop.f32.mrb[0].mxu0
      %v4490 = vadd.f32 0.0, %v4489
      %v4491 = vpop.f32.mrb[0].mxu0
      %v4492 = vadd.f32 0.0, %v4491
      %4493 = vdwg.mxu0
      %4494 = vrot.lane.b32.xlu0 %v4490, 113
      %v4495 = vpop.permute.xlu0 %4494
      %4496 = vrot.lane.b32.xlu0 %v4492, 113
      %v4497 = vpop.permute.xlu0 %4496
      %v4498 = vsel %vm2534, %v4495, %v4497
      %v4499 = vsel %vm2534, %v4497, %v4495
      %v4500 = vmul.f32 %v4498, %v2545
      %v4501 = vmul.f32 %v4499, %v2549
      %v4502 = vadd.f32 %v4416, %v4500
      %v4503 = vadd.f32 %v4417, %v4501
      %s4504 = scalar_lea.vmem %s8, 56
      %v4505 = vld [vmem:[%s4504] sm:$0xff]
      %v4507 = vsel %vm3096, %v4505, 0
      %4509 = vmatprep.subr.mxu0 %v3915
      %4510 = vmatpush1.msra.mxu0 %v3912
      %4511 = vmatprep.subr.mxu0 0.0
      %4512 = vmatpush1.msra.mxu0 0.0
      %4513 = vmatprep.subr.mxu0 0.0
      %4514 = vmatpush1.msra.mxu0 0.0
      %4515 = vmatprep.subr.mxu0 0.0
      %4516 = vmatpush1.msra.mxu0 0.0
      %4517 = vmatprep.subr.mxu0 0.0
      %4518 = vmatpush1.msra.mxu0 0.0
      %4519 = vmatprep.subr.mxu0 0.0
      %4520 = vmatpush1.msra.mxu0 0.0
      %4521 = vmatprep.subr.mxu0 0.0
      %4522 = vmatpush1.msra.mxu0 0.0
      %4523 = vmatprep.subr.mxu0 0.0
      %4524 = vmatpush1.msra.mxu0 0.0
      %4525 = vmatprep.subr.mxu0 0.0
      %4526 = vmatpush1.msra.mxu0 0.0
      %4527 = vmatprep.subr.mxu0 0.0
      %4528 = vmatpush1.msra.mxu0 0.0
      %4529 = vmatprep.subr.mxu0 0.0
      %4530 = vmatpush1.msra.mxu0 0.0
      %4531 = vmatprep.subr.mxu0 0.0
      %4532 = vmatpush1.msra.mxu0 0.0
      %4533 = vmatprep.subr.mxu0 0.0
      %4534 = vmatpush1.msra.mxu0 0.0
      %4535 = vmatprep.subr.mxu0 0.0
      %4536 = vmatpush1.msra.mxu0 0.0
      %4537 = vmatprep.subr.mxu0 0.0
      %4538 = vmatpush1.msra.mxu0 0.0
      %4539 = vmatprep.subr.mxu0 0.0
      %4540 = vmatpush1.msra.mxu0 0.0
      %4541 = vmatprep.subr.mxu0 0.0
      %4542 = vmatpush1.msra.mxu0 0.0
      %4543 = vmatprep.subr.mxu0 0.0
      %4544 = vmatpush1.msra.mxu0 0.0
      %4545 = vmatprep.subr.mxu0 0.0
      %4546 = vmatpush1.msra.mxu0 0.0
      %4547 = vmatprep.subr.mxu0 0.0
      %4548 = vmatpush1.msra.mxu0 0.0
      %4549 = vmatprep.subr.mxu0 0.0
      %4550 = vmatpush1.msra.mxu0 0.0
      %4551 = vmatprep.subr.mxu0 0.0
      %4552 = vmatpush1.msra.mxu0 0.0
      %4553 = vmatprep.subr.mxu0 0.0
      %4554 = vmatpush1.msra.mxu0 0.0
      %4555 = vmatprep.subr.mxu0 0.0
      %4556 = vmatpush1.msra.mxu0 0.0
      %4557 = vmatprep.subr.mxu0 0.0
      %4558 = vmatpush1.msra.mxu0 0.0
      %4559 = vmatprep.subr.mxu0 0.0
      %4560 = vmatpush1.msra.mxu0 0.0
      %4561 = vmatprep.subr.mxu0 0.0
      %4562 = vmatpush1.msra.mxu0 0.0
      %4563 = vmatprep.subr.mxu0 0.0
      %4564 = vmatpush1.msra.mxu0 0.0
      %4565 = vmatprep.subr.mxu0 0.0
      %4566 = vmatpush1.msra.mxu0 0.0
      %4567 = vmatprep.subr.mxu0 0.0
      %4568 = vmatpush1.msra.mxu0 0.0
      %4569 = vmatprep.subr.mxu0 0.0
      %4570 = vmatpush1.msra.mxu0 0.0
      %4571 = vmatprep.subr.mxu0 0.0
      %4572 = vmatpush1.msra.mxu0 0.0
      %4573 = vmatprep.mubr.f32.mxu0 0.0
      %4574 = vmatmul.mubr.f32.gmra.mrb[0].mxu0 %v4507
      %v4575 = vpop.f32.mrb[0].mxu0
      %v4576 = vadd.f32 0.0, %v4575
      %v4577 = vpop.f32.mrb[0].mxu0
      %v4578 = vadd.f32 0.0, %v4577
      %4579 = vdwg.mxu0
      %4580 = vrot.lane.b32.xlu0 %v4576, 112
      %v4581 = vpop.permute.xlu0 %4580
      %4582 = vrot.lane.b32.xlu0 %v4578, 112
      %v4583 = vpop.permute.xlu0 %4582
      %v4584 = vsel %vm2752, %v4581, %v4583
      %v4585 = vsel %vm2752, %v4583, %v4581
      %v4586 = vmul.f32 %v4584, %v2763
      %v4587 = vmul.f32 %v4585, %v2767
      %v4588 = vadd.f32 %v4502, %v4586
      %v4589 = vadd.f32 %v4503, %v4587
      %s4590 = scalar_lea.vmem %s8, 64
      %v4591 = vld [vmem:[%s4590] sm:$0xff]
      %v4593 = vsel %vm3096, %v4591, 0
      %4595 = vmatprep.subr.mxu0 %v3915
      %4596 = vmatpush1.msra.mxu0 %v3912
      %4597 = vmatprep.subr.mxu0 0.0
      %4598 = vmatpush1.msra.mxu0 0.0
      %4599 = vmatprep.subr.mxu0 0.0
      %4600 = vmatpush1.msra.mxu0 0.0
      %4601 = vmatprep.subr.mxu0 0.0
      %4602 = vmatpush1.msra.mxu0 0.0
      %4603 = vmatprep.subr.mxu0 0.0
      %4604 = vmatpush1.msra.mxu0 0.0
      %4605 = vmatprep.subr.mxu0 0.0
      %4606 = vmatpush1.msra.mxu0 0.0
      %4607 = vmatprep.subr.mxu0 0.0
      %4608 = vmatpush1.msra.mxu0 0.0
      %4609 = vmatprep.subr.mxu0 0.0
      %4610 = vmatpush1.msra.mxu0 0.0
      %4611 = vmatprep.subr.mxu0 0.0
      %4612 = vmatpush1.msra.mxu0 0.0
      %4613 = vmatprep.subr.mxu0 0.0
      %4614 = vmatpush1.msra.mxu0 0.0
      %4615 = vmatprep.subr.mxu0 0.0
      %4616 = vmatpush1.msra.mxu0 0.0
      %4617 = vmatprep.subr.mxu0 0.0
      %4618 = vmatpush1.msra.mxu0 0.0
      %4619 = vmatprep.subr.mxu0 0.0
      %4620 = vmatpush1.msra.mxu0 0.0
      %4621 = vmatprep.subr.mxu0 0.0
      %4622 = vmatpush1.msra.mxu0 0.0
      %4623 = vmatprep.subr.mxu0 0.0
      %4624 = vmatpush1.msra.mxu0 0.0
      %4625 = vmatprep.subr.mxu0 0.0
      %4626 = vmatpush1.msra.mxu0 0.0
      %4627 = vmatprep.subr.mxu0 0.0
      %4628 = vmatpush1.msra.mxu0 0.0
      %4629 = vmatprep.subr.mxu0 0.0
      %4630 = vmatpush1.msra.mxu0 0.0
      %4631 = vmatprep.subr.mxu0 0.0
      %4632 = vmatpush1.msra.mxu0 0.0
      %4633 = vmatprep.subr.mxu0 0.0
      %4634 = vmatpush1.msra.mxu0 0.0
      %4635 = vmatprep.subr.mxu0 0.0
      %4636 = vmatpush1.msra.mxu0 0.0
      %4637 = vmatprep.subr.mxu0 0.0
      %4638 = vmatpush1.msra.mxu0 0.0
      %4639 = vmatprep.subr.mxu0 0.0
      %4640 = vmatpush1.msra.mxu0 0.0
      %4641 = vmatprep.subr.mxu0 0.0
      %4642 = vmatpush1.msra.mxu0 0.0
      %4643 = vmatprep.subr.mxu0 0.0
      %4644 = vmatpush1.msra.mxu0 0.0
      %4645 = vmatprep.subr.mxu0 0.0
      %4646 = vmatpush1.msra.mxu0 0.0
      %4647 = vmatprep.subr.mxu0 0.0
      %4648 = vmatpush1.msra.mxu0 0.0
      %4649 = vmatprep.subr.mxu0 0.0
      %4650 = vmatpush1.msra.mxu0 0.0
      %4651 = vmatprep.subr.mxu0 0.0
      %4652 = vmatpush1.msra.mxu0 0.0
      %4653 = vmatprep.subr.mxu0 0.0
      %4654 = vmatpush1.msra.mxu0 0.0
      %4655 = vmatprep.subr.mxu0 0.0
      %4656 = vmatpush1.msra.mxu0 0.0
      %4657 = vmatprep.subr.mxu0 0.0
      %4658 = vmatpush1.msra.mxu0 0.0
      %4659 = vmatprep.mubr.f32.mxu0 0.0
      %4660 = vmatmul.mubr.f32.gmra.mrb[0].mxu0 %v4593
      %v4661 = vpop.f32.mrb[0].mxu0
      %v4662 = vadd.f32 0.0, %v4661
      %v4663 = vpop.f32.mrb[0].mxu0
      %v4664 = vadd.f32 0.0, %v4663
      %4665 = vdwg.mxu0
      %4666 = vrot.lane.b32.xlu0 %v4662, 111
      %v4667 = vpop.permute.xlu0 %4666
      %4668 = vrot.lane.b32.xlu0 %v4664, 111
      %v4669 = vpop.permute.xlu0 %4668
      %v4670 = vsel %vm2970, %v4667, %v4669
      %v4671 = vsel %vm2970, %v4669, %v4667
      %v4672 = vmul.f32 %v4670, %v2981
      %v4673 = vmul.f32 %v4671, %v2985
      %v4674 = vadd.f32 %v4588, %v4672
      %v4675 = vadd.f32 %v4589, %v4673
      %v4676 = vld [vmem:[%s9] sm:$0xff]
      %4678 = vset.pattern.permute.xlu0 0
      %4679 = vperm.xlu0 %4678, %v4676
      %v4680 = vpop.permute.xlu0 %4679
      %v4682 = vadd.f32 %v4674, %v4680
      %v4683 = vadd.f32 %v4675, %v4680
      %v4685 = vcombine.high %v3078, %v3078
      %v4687 = vsel %vm3096, %v3066, 0
      %v4689 = vsel %vm623, %v3078, 0
      %v4691 = vsel %vm623, %v4685, 0
      %4693 = vmatprep.subr.mxu0 %v4691
      %4694 = vmatpush1.msra.mxu0 %v4689
      %4695 = vmatprep.subr.mxu0 0.0
      %4696 = vmatpush1.msra.mxu0 0.0
      %4697 = vmatprep.subr.mxu0 0.0
      %4698 = vmatpush1.msra.mxu0 0.0
      %4699 = vmatprep.subr.mxu0 0.0
      %4700 = vmatpush1.msra.mxu0 0.0
      %4701 = vmatprep.subr.mxu0 0.0
      %4702 = vmatpush1.msra.mxu0 0.0
      %4703 = vmatprep.subr.mxu0 0.0
      %4704 = vmatpush1.msra.mxu0 0.0
      %4705 = vmatprep.subr.mxu0 0.0
      %4706 = vmatpush1.msra.mxu0 0.0
      %4707 = vmatprep.subr.mxu0 0.0
      %4708 = vmatpush1.msra.mxu0 0.0
      %4709 = vmatprep.subr.mxu0 0.0
      %4710 = vmatpush1.msra.mxu0 0.0
      %4711 = vmatprep.subr.mxu0 0.0
      %4712 = vmatpush1.msra.mxu0 0.0
      %4713 = vmatprep.subr.mxu0 0.0
      %4714 = vmatpush1.msra.mxu0 0.0
      %4715 = vmatprep.subr.mxu0 0.0
      %4716 = vmatpush1.msra.mxu0 0.0
      %4717 = vmatprep.subr.mxu0 0.0
      %4718 = vmatpush1.msra.mxu0 0.0
      %4719 = vmatprep.subr.mxu0 0.0
      %4720 = vmatpush1.msra.mxu0 0.0
      %4721 = vmatprep.subr.mxu0 0.0
      %4722 = vmatpush1.msra.mxu0 0.0
      %4723 = vmatprep.subr.mxu0 0.0
      %4724 = vmatpush1.msra.mxu0 0.0
      %4725 = vmatprep.subr.mxu0 0.0
      %4726 = vmatpush1.msra.mxu0 0.0
      %4727 = vmatprep.subr.mxu0 0.0
      %4728 = vmatpush1.msra.mxu0 0.0
      %4729 = vmatprep.subr.mxu0 0.0
      %4730 = vmatpush1.msra.mxu0 0.0
      %4731 = vmatprep.subr.mxu0 0.0
      %4732 = vmatpush1.msra.mxu0 0.0
      %4733 = vmatprep.subr.mxu0 0.0
      %4734 = vmatpush1.msra.mxu0 0.0
      %4735 = vmatprep.subr.mxu0 0.0
      %4736 = vmatpush1.msra.mxu0 0.0
      %4737 = vmatprep.subr.mxu0 0.0
      %4738 = vmatpush1.msra.mxu0 0.0
      %4739 = vmatprep.subr.mxu0 0.0
      %4740 = vmatpush1.msra.mxu0 0.0
      %4741 = vmatprep.subr.mxu0 0.0
      %4742 = vmatpush1.msra.mxu0 0.0
      %4743 = vmatprep.subr.mxu0 0.0
      %4744 = vmatpush1.msra.mxu0 0.0
      %4745 = vmatprep.subr.mxu0 0.0
      %4746 = vmatpush1.msra.mxu0 0.0
      %4747 = vmatprep.subr.mxu0 0.0
      %4748 = vmatpush1.msra.mxu0 0.0
      %4749 = vmatprep.subr.mxu0 0.0
      %4750 = vmatpush1.msra.mxu0 0.0
      %4751 = vmatprep.subr.mxu0 0.0
      %4752 = vmatpush1.msra.mxu0 0.0
      %4753 = vmatprep.subr.mxu0 0.0
      %4754 = vmatpush1.msra.mxu0 0.0
      %4755 = vmatprep.subr.mxu0 0.0
      %4756 = vmatpush1.msra.mxu0 0.0
      %4757 = vmatprep.mubr.f32.mxu0 0.0
      %4758 = vmatmul.mubr.f32.gmra.mrb[0].mxu0 %v4687
      %v4759 = vpop.f32.mrb[0].mxu0
      %v4760 = vadd.f32 %v4682, %v4759
      %v4761 = vpop.f32.mrb[0].mxu0
      %v4762 = vadd.f32 %v4683, %v4761
      %4763 = vdwg.mxu0
      %4764 = vst [vmem:[%s406] sm:$0xff] %v4760
      %4765 = vst [vmem:[%s406 + $0x8] sm:$0xff] %v4762
      %p4766 = scmp.lt.s32.totalorder %s22, 1
      %s4767 = scalar_select %p4766, %s22, 1
      %s4768 = smul.addr %s4767, 2
      %s4769 = smul.addr %s4768, 8
      %s4770 = scalar_lea.vmem %s11, %s4769
      // Predicated region
      $region65: #{spade_resblock_forward.1} parent=63 // pred_check
        %p4771 = pneg %p281
      $region66: #{spade_resblock_forward.1} parent=63 // pred_check_branch
        %4773 = sbr.rel (%p4771) target = $region68
      $region67: #{spade_resblock_forward.1} parent=63 // pred_region
        _
      $region68: #{spade_resblock_forward.1} parent=63 // pred_fallthru
        _
    $region64: #{spade_resblock_forward.1} parent=5 // pred_fallthru
      _
    %p4774 = scmp.le.s32.totalorder 2, %s17
    // Predicated region
    $region69: #{spade_resblock_forward.1} parent=5 // pred_check
      %p4775 = pneg %p4774
    $region70: #{spade_resblock_forward.1} parent=5 // pred_check_branch
      %4777 = sbr.rel (%p4775) target = $region72
    $region71: #{spade_resblock_forward.1} parent=5 // pred_region
      %s4778 = ssub.s32 %s17, 2
      // Predicated region
      $region73: #{spade_resblock_forward.1} parent=71 // pred_check
        %p4779 = pneg %p287
      $region74: #{spade_resblock_forward.1} parent=71 // pred_check_branch
        %4781 = sbr.rel (%p4779) target = $region76
      $region75: #{spade_resblock_forward.1} parent=71 // pred_region
        %p4782 = scmp.lt.s32.totalorder %s23, 1
        %s4783 = scalar_select %p4782, %s23, 1
        %s4784 = smul.addr %s4783, 2
        %s4785 = smul.addr %s4784, 8
        %s4786 = scalar_lea.vmem %s11, %s4785
      $region76: #{spade_resblock_forward.1} parent=71 // pred_fallthru
        _
    $region72: #{spade_resblock_forward.1} parent=5 // pred_fallthru
      _
  $region6: #{spade_resblock_forward.1} parent=0 // loop_footer
    %s21 = sadd.s32 1, %s17
  $region7: #{spade_resblock_forward.1} parent=0 // loop_footer_branch
    %16 = sbr.rel target = $region3
  $region8: #{spade_resblock_forward.1} parent=0 // loop_exit
    _

</llo_original>
